<compile_context>
chip_gen: v6e
topology: v6e:2x2x1
jax: 0.10.0
libtpu: 0.0.40
codegen_flags: <defaults>
</compile_context>

<pallas_src>
import functools

import jax
import jax.numpy as jnp
from jax.experimental import pallas as pl
from jax.experimental.pallas import tpu as pltpu

EPS = 1e-5
LANE = 128


# --------------------------------------------------------------------------- #
# helpers
# --------------------------------------------------------------------------- #
def _round_up(x, m):
    return (x + m - 1) // m * m


def _row_tile(m, row_bytes):
    """Largest row-tile (multiple of 8, divides m) whose tile fits a VMEM budget."""
    budget = 6 * 1024 * 1024  # per-tile budget; double-buffering handled by Pallas
    for t in (1024, 512, 256, 128, 64, 32, 16, 8):
        if m % t == 0 and t * row_bytes <= budget:
            return t
    return m


def _pad_last(a, target):
    c = a.shape[-1]
    if c == target:
        return a
    pad = [(0, 0)] * (a.ndim - 1) + [(0, target - c)]
    return jnp.pad(a, pad)


def _pad2(a, rows, cols):
    return jnp.pad(a, ((0, rows - a.shape[0]), (0, cols - a.shape[1])))


def _cparams():
    return pltpu.CompilerParams(
        dimension_semantics=("parallel",),
        vmem_limit_bytes=32 * 1024 * 1024)


def _bn_scale_bias(pstats, count, gamma, beta):
    """Fold batch-norm (batch stats, biased var, eps) into a per-channel affine."""
    tot = jnp.sum(pstats, axis=0)                       # (2, C) f32
    mean = tot[0] / count
    # single-pass var = E[x^2] - mean^2 (f32 accumulation; clamp for safety)
    var = jnp.maximum(tot[1] / count - mean * mean, 0.0)
    scale = gamma[0] * jax.lax.rsqrt(var + EPS)
    bias = beta[0] - mean * scale
    return scale[None, :], bias[None, :]                # (1, C), (1, C)


# --------------------------------------------------------------------------- #
# kernels
# --------------------------------------------------------------------------- #
def _conv1x1_stats_kernel(x_ref, w_ref, y_ref, st_ref, *, cdtype):
    # 1x1 conv as a row-tiled matmul (bf16 operands, f32 accumulate) + partials.
    y = jnp.dot(x_ref[...].astype(cdtype), w_ref[...],
                preferred_element_type=jnp.float32)           # (TM, Cout) f32
    y_ref[...] = y
    s = jnp.sum(y, axis=0, keepdims=True)
    ss = jnp.sum(y * y, axis=0, keepdims=True)
    st_ref[...] = jnp.concatenate([s, ss], axis=0)[None]      # (1, 2, Cout)


def _affine_conv1x1_stats_kernel(t_ref, a_ref, b_ref, w_ref, y_ref, st_ref,
                                 *, cdtype):
    # bn(prev) folded to affine + relu (f32), then 1x1 conv + partial stats.
    act = jnp.maximum(t_ref[...] * a_ref[...] + b_ref[...], 0.0)
    y = jnp.dot(act.astype(cdtype), w_ref[...],
                preferred_element_type=jnp.float32)
    y_ref[...] = y
    s = jnp.sum(y, axis=0, keepdims=True)
    ss = jnp.sum(y * y, axis=0, keepdims=True)
    st_ref[...] = jnp.concatenate([s, ss], axis=0)[None]


def _conv3x3_stats_kernel(t_ref, a_ref, b_ref, w_ref, y_ref, st_ref, pad_ref,
                          *, stride, cdtype):
    _, H, W, C = t_ref.shape
    _, Ho, Wo, _ = y_ref.shape
    # bn1 affine + relu on this image (f32 element-wise math).
    act = jnp.maximum(t_ref[0] * a_ref[...].reshape(1, 1, C)
                      + b_ref[...].reshape(1, 1, C), 0.0)     # (H, W, C)
    # Zero only the 1-wide halo and write the interior (no full-buffer zero fill
    # / full-buffer round trip through the scratch).  The halo is re-zeroed each
    # grid step so the kernel stays correct under megacore grid splitting.
    zrow = jnp.zeros((1, W + 2, C), jnp.float32)
    zcol = jnp.zeros((H, 1, C), jnp.float32)
    pad_ref[0:1, :, :] = zrow
    pad_ref[H + 1:H + 2, :, :] = zrow
    pad_ref[1:H + 1, 0:1, :] = zcol
    pad_ref[1:H + 1, W + 1:W + 2, :] = zcol
    pad_ref[1:H + 1, 1:W + 1, :] = act
    # im2col: 9 shifted windows read straight from the padded ref, concatenated
    # along the channel (lane) axis -> one big-K MXU matmul.
    hspan = (Ho - 1) * stride + 1
    wspan = (Wo - 1) * stride + 1
    cols = []
    for di in range(3):
        for dj in range(3):
            win = pad_ref[pl.ds(di, hspan), pl.ds(dj, wspan), :]
            if stride != 1:
                win = jax.lax.slice(win, (0, 0, 0), (hspan, wspan, C),
                                    (stride, stride, 1))
            cols.append(win.reshape(Ho * Wo, C).astype(cdtype))
    patch = jnp.concatenate(cols, axis=-1)                    # (Ho*Wo, 9*C)
    y = jnp.dot(patch, w_ref[...], preferred_element_type=jnp.float32)
    y_ref[...] = y.reshape(1, Ho, Wo, C)
    s = jnp.sum(y, axis=0, keepdims=True)
    ss = jnp.sum(y * y, axis=0, keepdims=True)
    st_ref[...] = jnp.concatenate([s, ss], axis=0)[None]


def _output_kernel_conv(t_ref, a_ref, b_ref, x_ref, w_ref, o_ref, *, cdtype):
    # bn3 affine + projection shortcut (1x1 conv) + add + relu.
    sc = jnp.dot(x_ref[...].astype(cdtype), w_ref[...],
                 preferred_element_type=jnp.float32)
    o_ref[...] = jnp.maximum(t_ref[...] * a_ref[...] + b_ref[...] + sc, 0.0)


def _output_kernel_identity(t_ref, a_ref, b_ref, x_ref, o_ref):
    # bn3 affine + identity shortcut + relu (no ws DMA on this path).
    o_ref[...] = jnp.maximum(t_ref[...] * a_ref[...] + b_ref[...] + x_ref[...],
                             0.0)


# --------------------------------------------------------------------------- #
# pallas_call wrappers (tiled grids, auto-pipelined BlockSpecs)
# --------------------------------------------------------------------------- #
def _conv1x1_stats(x_flat, w, cdtype):
    M, Cin = x_flat.shape
    Cout = w.shape[1]
    TM = _row_tile(M, 4 * (Cin + Cout))
    G = M // TM
    return pl.pallas_call(
        functools.partial(_conv1x1_stats_kernel, cdtype=cdtype),
        out_shape=(jax.ShapeDtypeStruct((M, Cout), jnp.float32),
                   jax.ShapeDtypeStruct((G, 2, Cout), jnp.float32)),
        grid=(G,),
        in_specs=[pl.BlockSpec((TM, Cin), lambda i: (i, 0)),
                  pl.BlockSpec((Cin, Cout), lambda i: (0, 0))],
        out_specs=(pl.BlockSpec((TM, Cout), lambda i: (i, 0)),
                   pl.BlockSpec((1, 2, Cout), lambda i: (i, 0, 0))),
        compiler_params=_cparams(),
    )(x_flat, w)


def _affine_conv1x1_stats(t_flat, scale, bias, w, cdtype):
    M, Cin = t_flat.shape
    Cout = w.shape[1]
    TM = _row_tile(M, 4 * (Cin + Cout))
    G = M // TM
    return pl.pallas_call(
        functools.partial(_affine_conv1x1_stats_kernel, cdtype=cdtype),
        out_shape=(jax.ShapeDtypeStruct((M, Cout), jnp.float32),
                   jax.ShapeDtypeStruct((G, 2, Cout), jnp.float32)),
        grid=(G,),
        in_specs=[pl.BlockSpec((TM, Cin), lambda i: (i, 0)),
                  pl.BlockSpec((1, Cin), lambda i: (0, 0)),
                  pl.BlockSpec((1, Cin), lambda i: (0, 0)),
                  pl.BlockSpec((Cin, Cout), lambda i: (0, 0))],
        out_specs=(pl.BlockSpec((TM, Cout), lambda i: (i, 0)),
                   pl.BlockSpec((1, 2, Cout), lambda i: (i, 0, 0))),
        compiler_params=_cparams(),
    )(t_flat, scale, bias, w)


def _conv3x3_stats(t1_img, scale, bias, w2_flat, stride, cdtype):
    N, H, W, C = t1_img.shape
    Ho = (H - 1) // stride + 1
    Wo = (W - 1) // stride + 1
    return pl.pallas_call(
        functools.partial(_conv3x3_stats_kernel, stride=stride, cdtype=cdtype),
        out_shape=(jax.ShapeDtypeStruct((N, Ho, Wo, C), jnp.float32),
                   jax.ShapeDtypeStruct((N, 2, C), jnp.float32)),
        grid=(N,),
        in_specs=[pl.BlockSpec((1, H, W, C), lambda n: (n, 0, 0, 0)),
                  pl.BlockSpec((1, C), lambda n: (0, 0)),
                  pl.BlockSpec((1, C), lambda n: (0, 0)),
                  pl.BlockSpec((9 * C, C), lambda n: (0, 0))],
        out_specs=(pl.BlockSpec((1, Ho, Wo, C), lambda n: (n, 0, 0, 0)),
                   pl.BlockSpec((1, 2, C), lambda n: (n, 0, 0))),
        scratch_shapes=[pltpu.VMEM((H + 2, W + 2, C), jnp.float32)],
        compiler_params=_cparams(),
    )(t1_img, scale, bias, w2_flat)


def _output_fuse(t3_flat, scale, bias, x_flat, ws, cdtype):
    M, E = t3_flat.shape
    Cin = x_flat.shape[1]
    TM = _row_tile(M, 4 * (E + E + Cin))
    G = M // TM
    if ws is None:
        kern = _output_kernel_identity
        in_specs = [pl.BlockSpec((TM, E), lambda i: (i, 0)),
                    pl.BlockSpec((1, E), lambda i: (0, 0)),
                    pl.BlockSpec((1, E), lambda i: (0, 0)),
                    pl.BlockSpec((TM, E), lambda i: (i, 0))]
        args = (t3_flat, scale, bias, x_flat)
    else:
        kern = functools.partial(_output_kernel_conv, cdtype=cdtype)
        in_specs = [pl.BlockSpec((TM, E), lambda i: (i, 0)),
                    pl.BlockSpec((1, E), lambda i: (0, 0)),
                    pl.BlockSpec((1, E), lambda i: (0, 0)),
                    pl.BlockSpec((TM, Cin), lambda i: (i, 0)),
                    pl.BlockSpec((Cin, E), lambda i: (0, 0))]
        args = (t3_flat, scale, bias, x_flat, ws)
    return pl.pallas_call(
        kern,
        out_shape=jax.ShapeDtypeStruct((M, E), jnp.float32),
        grid=(G,),
        in_specs=in_specs,
        out_specs=pl.BlockSpec((TM, E), lambda i: (i, 0)),
        compiler_params=_cparams(),
    )(*args)


# --------------------------------------------------------------------------- #
# full Bottleneck forward
# --------------------------------------------------------------------------- #
@functools.partial(jax.jit, static_argnames=("stride", "compute_dtype"))
def bottleneck_forward(x_nchw, params, *, stride=1, compute_dtype=jnp.bfloat16):
    """Bottleneck forward. x_nchw: (N, Cin, H, W) float32 -> (N, 4*planes, Ho, Wo)."""
    x = jnp.transpose(x_nchw, (0, 2, 3, 1)).astype(jnp.float32)   # NCHW -> NHWC
    N, H, W, Cin = x.shape
    P = params["w1"].shape[1]
    E = params["w3"].shape[1]
    Ho = (H - 1) // stride + 1
    Wo = (W - 1) // stride + 1
    use_sc_conv = (stride != 1) or (Cin != E)
    cdt = compute_dtype

    # lane-dense channel padding (multiples of 128); padded channels stay zero
    Cinp = _round_up(Cin, LANE)
    Pp = _round_up(P, LANE)
    Ep = _round_up(E, LANE)

    xp = _pad_last(x, Cinp)
    w1 = _pad2(params["w1"], Cinp, Pp).astype(cdt)
    w2 = jnp.pad(params["w2"], ((0, 0), (0, 0), (0, Pp - P), (0, Pp - P)))
    w2 = w2.reshape(9 * Pp, Pp).astype(cdt)                       # im2col layout
    w3 = _pad2(params["w3"], Pp, Ep).astype(cdt)
    g1, b1 = _pad_last(params["g1"], Pp), _pad_last(params["b1"], Pp)
    g2, b2 = _pad_last(params["g2"], Pp), _pad_last(params["b2"], Pp)
    g3, b3 = _pad_last(params["g3"], Ep), _pad_last(params["b3"], Ep)

    # ---- stage 1: conv1 (1x1) + batch-stat partials -------------------------
    x_flat = xp.reshape(N * H * W, Cinp)
    t1, st1 = _conv1x1_stats(x_flat, w1, cdt)
    s1, o1 = _bn_scale_bias(st1, N * H * W, g1, b1)

    # ---- stage 2: bn1+relu fused into conv2 (3x3, im2col) + partials --------
    t2, st2 = _conv3x3_stats(t1.reshape(N, H, W, Pp), s1, o1, w2, stride, cdt)
    s2, o2 = _bn_scale_bias(st2, N * Ho * Wo, g2, b2)

    # ---- stage 3: bn2+relu fused into conv3 (1x1) + partials ----------------
    t3, st3 = _affine_conv1x1_stats(t2.reshape(N * Ho * Wo, Pp), s2, o2, w3, cdt)
    s3, o3 = _bn_scale_bias(st3, N * Ho * Wo, g3, b3)

    # ---- stage 4: bn3 + shortcut + add + relu -------------------------------
    xs = xp if stride == 1 else xp[:, ::stride, ::stride, :]      # skip no-op slice
    xs_flat = xs.reshape(N * Ho * Wo, Cinp)
    ws = _pad2(params["ws"], Cinp, Ep).astype(cdt) if use_sc_conv else None
    out = _output_fuse(t3, s3, o3, xs_flat, ws, cdt)

    out = out.reshape(N, Ho, Wo, Ep)[..., :E]
    return jnp.transpose(out, (0, 3, 1, 2))                       # NHWC -> NCHW


# --------------------------------------------------------------------------- #
# pure-JAX reference (for correctness check)
# --------------------------------------------------------------------------- #
def _ref_forward(x_nchw, p, *, stride=1):
    x = jnp.transpose(x_nchw, (0, 2, 3, 1))

    def conv(t, w_hwio, s, pad):
        return jax.lax.conv_general_dilated(
            t, w_hwio, (s, s), pad, dimension_numbers=("NHWC", "HWIO", "NHWC"))

    def bn(t, g, b, relu):
        mean = jnp.mean(t, axis=(0, 1, 2), keepdims=True)
        var = jnp.mean((t - mean) ** 2, axis=(0, 1, 2), keepdims=True)
        y = (t - mean) * jax.lax.rsqrt(var + EPS) * g.reshape(1, 1, 1, -1) \
            + b.reshape(1, 1, 1, -1)
        return jnp.maximum(y, 0.0) if relu else y

    Cin = x.shape[-1]
    E = p["w3"].shape[1]
    o = bn(conv(x, p["w1"][None, None], 1, "VALID"), p["g1"], p["b1"], True)
    o = bn(conv(o, p["w2"], stride, ((1, 1), (1, 1))), p["g2"], p["b2"], True)
    o = bn(conv(o, p["w3"][None, None], 1, "VALID"), p["g3"], p["b3"], False)
    if stride != 1 or Cin != E:
        sc = conv(x, p["ws"][None, None], stride, "VALID")
    else:
        sc = x
    o = jnp.maximum(o + sc, 0.0)
    return jnp.transpose(o, (0, 3, 1, 2))


def init_params(key, in_planes, planes, expansion=4):
    E = expansion * planes
    ks = jax.random.split(key, 8)
    f32 = jnp.float32
    return {
        "w1": 0.3 * jax.random.normal(ks[0], (in_planes, planes), f32),
        "w2": 0.3 * jax.random.normal(ks[1], (3, 3, planes, planes), f32),
        "w3": 0.3 * jax.random.normal(ks[2], (planes, E), f32),
        "ws": 0.3 * jax.random.normal(ks[3], (in_planes, E), f32),
        "g1": 1.0 + 0.1 * jax.random.normal(ks[4], (1, planes), f32),
        "b1": 0.1 * jax.random.normal(ks[5], (1, planes), f32),
        "g2": 1.0 + 0.1 * jax.random.normal(ks[6], (1, planes), f32),
        "b2": 0.1 * jax.random.normal(ks[7], (1, planes), f32),
        "g3": jnp.ones((1, E), f32),
        "b3": jnp.zeros((1, E), f32),
    }


if __name__ == "__main__":
    key = jax.random.PRNGKey(0)
    N, H, W = 2, 16, 16

    # (in_planes, planes, stride): projection / strided / identity shortcut paths
    configs = [(4, 4, 1), (4, 4, 2), (16, 4, 1)]
    for (in_planes, planes, stride) in configs:
        kx, kp = jax.random.split(jax.random.fold_in(key, 100 * in_planes + stride))
        x = jax.random.normal(kx, (N, in_planes, H, W), jnp.float32)
        params = init_params(kp, in_planes, planes)
        ref = jax.block_until_ready(_ref_forward(x, params, stride=stride))

        # strict semantic check with f32 matmul operands
        out32 = jax.block_until_ready(
            bottleneck_forward(x, params, stride=stride, compute_dtype=jnp.float32))
        assert out32.shape == ref.shape, (out32.shape, ref.shape)
        err32 = float(jnp.max(jnp.abs(out32 - ref)))
        assert jnp.allclose(out32, ref, rtol=1e-3, atol=1e-3), \
            (in_planes, planes, stride, err32)

    # bf16-operand fast path (f32 accumulation, f32 BN math) — loose check
    kx, kp = jax.random.split(key)
    in_planes, planes, stride = 4, 4, 1
    x = jax.random.normal(kx, (N, in_planes, H, W), jnp.float32)
    params = init_params(kp, in_planes, planes)
    ref = _ref_forward(x, params, stride=stride)
    out_bf16 = jax.block_until_ready(
        bottleneck_forward(x, params, stride=stride, compute_dtype=jnp.bfloat16))
    err_bf16 = float(jnp.max(jnp.abs(out_bf16 - ref)))
    assert err_bf16 < 0.15, err_bf16

    print("KERNEL_OK")
</pallas_src>

<mosaic_0001>
module attributes {stable_mosaic.version = 11 : i64} {
  func.func @_conv1x1_stats_kernel(%arg0: i32, %arg1: memref<512x128xf32, #tpu.memory_space<vmem>>, %arg2: memref<128x128xf32, #tpu.memory_space<vmem>>, %arg3: memref<512x128xf32, #tpu.memory_space<vmem>>, %arg4: memref<1x2x128xf32, #tpu.memory_space<vmem>>) attributes {dimension_semantics = [#tpu.dimension_semantics<parallel>], iteration_bounds = array<i64: 1>, scalar_prefetch = 0 : i64, scratch_operands = 0 : i64, tpu.core_type = #tpu.core_type<tc>, window_params = [{transform_indices = @transform_0, window_bounds = array<i64: 512, 128>}, {pipeline_mode = #tpu.pipeline_mode<synchronous>, transform_indices = @transform_1, window_bounds = array<i64: 128, 128>}, {transform_indices = @transform_2, window_bounds = array<i64: 512, 128>}, {transform_indices = @transform_3, window_bounds = array<i64: 1, 2, 128>}]} {
    %c0 = arith.constant 0 : index
    %c0_0 = arith.constant 0 : index
    %0 = vector.load %arg1[%c0, %c0_0] : memref<512x128xf32, #tpu.memory_space<vmem>>, vector<512x128xf32>
    %c0_1 = arith.constant 0 : index
    %c0_2 = arith.constant 0 : index
    %1 = vector.load %arg2[%c0_1, %c0_2] : memref<128x128xf32, #tpu.memory_space<vmem>>, vector<128x128xf32>
    %cst = arith.constant dense<0.000000e+00> : vector<512x128xf32>
    %2 = tpu.matmul %0, %1, %cst {dimension_numbers = #tpu.dot_dimension_numbers<[1], [0], [0], [1], [0, 0, 1, 1], [], []>} : vector<512x128xf32>, vector<128x128xf32>, vector<512x128xf32> -> vector<512x128xf32>
    %c0_3 = arith.constant 0 : index
    %c0_4 = arith.constant 0 : index
    %3 = vector.load %arg3[%c0_3, %c0_4] : memref<512x128xf32, #tpu.memory_space<vmem>>, vector<512x128xf32>
    tpu.vector_store %arg3[%c0_3, %c0_4], %2 {strides = array<i32>} : memref<512x128xf32, #tpu.memory_space<vmem>>, vector<512x128xf32>,
    %cst_5 = arith.constant dense<0.000000e+00> : vector<128xf32>
    %4 = vector.multi_reduction <add>, %2, %cst_5 [0] : vector<512x128xf32> to vector<128xf32>
    %5 = vector.shape_cast %4 : vector<128xf32> to vector<1x128xf32>
    %6 = arith.mulf %2, %2 : vector<512x128xf32>
    %cst_6 = arith.constant dense<0.000000e+00> : vector<128xf32>
    %7 = vector.multi_reduction <add>, %6, %cst_6 [0] : vector<512x128xf32> to vector<128xf32>
    %8 = vector.shape_cast %7 : vector<128xf32> to vector<1x128xf32>
    %9 = tpu.concatenate %5, %8 in 0 : vector<1x128xf32>, vector<1x128xf32> -> vector<2x128xf32>
    %10 = vector.shape_cast %9 : vector<2x128xf32> to vector<1x2x128xf32>
    %c0_7 = arith.constant 0 : index
    %c0_8 = arith.constant 0 : index
    %c0_9 = arith.constant 0 : index
    %11 = vector.load %arg4[%c0_7, %c0_8, %c0_9] : memref<1x2x128xf32, #tpu.memory_space<vmem>>, vector<1x2x128xf32>
    tpu.vector_store %arg4[%c0_7, %c0_8, %c0_9], %10 {strides = array<i32>} : memref<1x2x128xf32, #tpu.memory_space<vmem>>, vector<1x2x128xf32>,
    return
  }
  func.func @transform_0(%arg0: i32) -> (i32, i32) {
    %c0_i32 = arith.constant 0 : i32
    %c0_i32_0 = arith.constant 0 : i32
    return %arg0, %c0_i32 : i32, i32
  }
  func.func @transform_1(%arg0: i32) -> (i32, i32) {
    %c0_i32 = arith.constant 0 : i32
    %c0_i32_0 = arith.constant 0 : i32
    %c0_i32_1 = arith.constant 0 : i32
    return %c0_i32, %c0_i32_0 : i32, i32
  }
  func.func @transform_2(%arg0: i32) -> (i32, i32) {
    %c0_i32 = arith.constant 0 : i32
    %c0_i32_0 = arith.constant 0 : i32
    return %arg0, %c0_i32 : i32, i32
  }
  func.func @transform_3(%arg0: i32) -> (i32, i32, i32) {
    %c0_i32 = arith.constant 0 : i32
    %c0_i32_0 = arith.constant 0 : i32
    %c0_i32_1 = arith.constant 0 : i32
    return %arg0, %c0_i32, %c0_i32_0 : i32, i32, i32
  }
}

module attributes {stable_mosaic.version = 11 : i64} {
  func.func @_conv3x3_stats_kernel(%arg0: i32, %arg1: memref<1x16x16x128xf32, #tpu.memory_space<vmem>>, %arg2: memref<1x128xf32, #tpu.memory_space<vmem>>, %arg3: memref<1x128xf32, #tpu.memory_space<vmem>>, %arg4: memref<1152x128xf32, #tpu.memory_space<vmem>>, %arg5: memref<1x16x16x128xf32, #tpu.memory_space<vmem>>, %arg6: memref<1x2x128xf32, #tpu.memory_space<vmem>>, %arg7: memref<18x18x128xf32, #tpu.memory_space<vmem>>) attributes {dimension_semantics = [#tpu.dimension_semantics<parallel>], iteration_bounds = array<i64: 2>, scalar_prefetch = 0 : i64, scratch_operands = 1 : i64, tpu.core_type = #tpu.core_type<tc>, window_params = [{transform_indices = @transform_0, window_bounds = array<i64: 1, 16, 16, 128>}, {pipeline_mode = #tpu.pipeline_mode<synchronous>, transform_indices = @transform_1, window_bounds = array<i64: 1, 128>}, {pipeline_mode = #tpu.pipeline_mode<synchronous>, transform_indices = @transform_2, window_bounds = array<i64: 1, 128>}, {pipeline_mode = #tpu.pipeline_mode<synchronous>, transform_indices = @transform_3, window_bounds = array<i64: 1152, 128>}, {transform_indices = @transform_4, window_bounds = array<i64: 1, 16, 16, 128>}, {transform_indices = @transform_5, window_bounds = array<i64: 1, 2, 128>}]} {
    %c0 = arith.constant 0 : index
    %c0_0 = arith.constant 0 : index
    %c0_1 = arith.constant 0 : index
    %c0_2 = arith.constant 0 : index
    %0 = vector.load %arg1[%c0, %c0_0, %c0_1, %c0_2] : memref<1x16x16x128xf32, #tpu.memory_space<vmem>>, vector<1x16x16x128xf32>
    %1 = vector.shape_cast %0 : vector<1x16x16x128xf32> to vector<16x16x128xf32>
    %c0_3 = arith.constant 0 : index
    %c0_4 = arith.constant 0 : index
    %2 = vector.load %arg2[%c0_3, %c0_4] : memref<1x128xf32, #tpu.memory_space<vmem>>, vector<1x128xf32>
    %3 = vector.shape_cast %2 : vector<1x128xf32> to vector<1x1x128xf32>
    %4 = vector.broadcast %3 : vector<1x1x128xf32> to vector<16x16x128xf32>
    %5 = arith.mulf %1, %4 : vector<16x16x128xf32>
    %c0_5 = arith.constant 0 : index
    %c0_6 = arith.constant 0 : index
    %6 = vector.load %arg3[%c0_5, %c0_6] : memref<1x128xf32, #tpu.memory_space<vmem>>, vector<1x128xf32>
    %7 = vector.shape_cast %6 : vector<1x128xf32> to vector<1x1x128xf32>
    %8 = vector.broadcast %7 : vector<1x1x128xf32> to vector<16x16x128xf32>
    %9 = arith.addf %5, %8 : vector<16x16x128xf32>
    %cst = arith.constant 0.000000e+00 : f32
    %10 = vector.broadcast %cst : f32 to vector<16x16x128xf32>
    %11 = arith.maximumf %9, %10 : vector<16x16x128xf32>
    %cst_7 = arith.constant 0.000000e+00 : f32
    %12 = vector.broadcast %cst_7 : f32 to vector<1x18x128xf32>
    %cst_8 = arith.constant 0.000000e+00 : f32
    %13 = vector.broadcast %cst_8 : f32 to vector<16x1x128xf32>
    %c0_9 = arith.constant 0 : index
    %c0_10 = arith.constant 0 : index
    %c0_11 = arith.constant 0 : index
    %14 = vector.load %arg7[%c0_9, %c0_10, %c0_11] : memref<18x18x128xf32, #tpu.memory_space<vmem>>, vector<1x18x128xf32>
    tpu.vector_store %arg7[%c0_9, %c0_10, %c0_11], %12 {strides = array<i32>} : memref<18x18x128xf32, #tpu.memory_space<vmem>>, vector<1x18x128xf32>,
    %c17 = arith.constant 17 : index
    %c0_12 = arith.constant 0 : index
    %c0_13 = arith.constant 0 : index
    %15 = vector.load %arg7[%c17, %c0_12, %c0_13] : memref<18x18x128xf32, #tpu.memory_space<vmem>>, vector<1x18x128xf32>
    tpu.vector_store %arg7[%c17, %c0_12, %c0_13], %12 {strides = array<i32>} : memref<18x18x128xf32, #tpu.memory_space<vmem>>, vector<1x18x128xf32>,
    %c1 = arith.constant 1 : index
    %c0_14 = arith.constant 0 : index
    %c0_15 = arith.constant 0 : index
    %16 = vector.load %arg7[%c1, %c0_14, %c0_15] : memref<18x18x128xf32, #tpu.memory_space<vmem>>, vector<16x1x128xf32>
    tpu.vector_store %arg7[%c1, %c0_14, %c0_15], %13 {strides = array<i32>} : memref<18x18x128xf32, #tpu.memory_space<vmem>>, vector<16x1x128xf32>,
    %c1_16 = arith.constant 1 : index
    %c17_17 = arith.constant 17 : index
    %c0_18 = arith.constant 0 : index
    %17 = vector.load %arg7[%c1_16, %c17_17, %c0_18] : memref<18x18x128xf32, #tpu.memory_space<vmem>>, vector<16x1x128xf32>
    tpu.vector_store %arg7[%c1_16, %c17_17, %c0_18], %13 {strides = array<i32>} : memref<18x18x128xf32, #tpu.memory_space<vmem>>, vector<16x1x128xf32>,
    %c1_19 = arith.constant 1 : index
    %c1_20 = arith.constant 1 : index
    %c0_21 = arith.constant 0 : index
    %18 = vector.load %arg7[%c1_19, %c1_20, %c0_21] : memref<18x18x128xf32, #tpu.memory_space<vmem>>, vector<16x16x128xf32>
    tpu.vector_store %arg7[%c1_19, %c1_20, %c0_21], %11 {strides = array<i32>} : memref<18x18x128xf32, #tpu.memory_space<vmem>>, vector<16x16x128xf32>,
    %c0_22 = arith.constant 0 : index
    %c0_23 = arith.constant 0 : index
    %c0_24 = arith.constant 0 : index
    %19 = vector.load %arg7[%c0_22, %c0_23, %c0_24] : memref<18x18x128xf32, #tpu.memory_space<vmem>>, vector<16x16x128xf32>
    %20 = vector.shape_cast %19 : vector<16x16x128xf32> to vector<256x128xf32>
    %c0_25 = arith.constant 0 : index
    %c1_26 = arith.constant 1 : index
    %c0_27 = arith.constant 0 : index
    %21 = vector.load %arg7[%c0_25, %c1_26, %c0_27] : memref<18x18x128xf32, #tpu.memory_space<vmem>>, vector<16x16x128xf32>
    %22 = vector.shape_cast %21 : vector<16x16x128xf32> to vector<256x128xf32>
    %c0_28 = arith.constant 0 : index
    %c2 = arith.constant 2 : index
    %c0_29 = arith.constant 0 : index
    %23 = vector.load %arg7[%c0_28, %c2, %c0_29] : memref<18x18x128xf32, #tpu.memory_space<vmem>>, vector<16x16x128xf32>
    %24 = vector.shape_cast %23 : vector<16x16x128xf32> to vector<256x128xf32>
    %c1_30 = arith.constant 1 : index
    %c0_31 = arith.constant 0 : index
    %c0_32 = arith.constant 0 : index
    %25 = vector.load %arg7[%c1_30, %c0_31, %c0_32] : memref<18x18x128xf32, #tpu.memory_space<vmem>>, vector<16x16x128xf32>
    %26 = vector.shape_cast %25 : vector<16x16x128xf32> to vector<256x128xf32>
    %c1_33 = arith.constant 1 : index
    %c1_34 = arith.constant 1 : index
    %c0_35 = arith.constant 0 : index
    %27 = vector.load %arg7[%c1_33, %c1_34, %c0_35] : memref<18x18x128xf32, #tpu.memory_space<vmem>>, vector<16x16x128xf32>
    %28 = vector.shape_cast %27 : vector<16x16x128xf32> to vector<256x128xf32>
    %c1_36 = arith.constant 1 : index
    %c2_37 = arith.constant 2 : index
    %c0_38 = arith.constant 0 : index
    %29 = vector.load %arg7[%c1_36, %c2_37, %c0_38] : memref<18x18x128xf32, #tpu.memory_space<vmem>>, vector<16x16x128xf32>
    %30 = vector.shape_cast %29 : vector<16x16x128xf32> to vector<256x128xf32>
    %c2_39 = arith.constant 2 : index
    %c0_40 = arith.constant 0 : index
    %c0_41 = arith.constant 0 : index
    %31 = vector.load %arg7[%c2_39, %c0_40, %c0_41] : memref<18x18x128xf32, #tpu.memory_space<vmem>>, vector<16x16x128xf32>
    %32 = vector.shape_cast %31 : vector<16x16x128xf32> to vector<256x128xf32>
    %c2_42 = arith.constant 2 : index
    %c1_43 = arith.constant 1 : index
    %c0_44 = arith.constant 0 : index
    %33 = vector.load %arg7[%c2_42, %c1_43, %c0_44] : memref<18x18x128xf32, #tpu.memory_space<vmem>>, vector<16x16x128xf32>
    %34 = vector.shape_cast %33 : vector<16x16x128xf32> to vector<256x128xf32>
    %c2_45 = arith.constant 2 : index
    %c2_46 = arith.constant 2 : index
    %c0_47 = arith.constant 0 : index
    %35 = vector.load %arg7[%c2_45, %c2_46, %c0_47] : memref<18x18x128xf32, #tpu.memory_space<vmem>>, vector<16x16x128xf32>
    %36 = vector.shape_cast %35 : vector<16x16x128xf32> to vector<256x128xf32>
    %37 = tpu.concatenate %20, %22, %24, %26, %28, %30, %32, %34, %36 in 1 : vector<256x128xf32>, vector<256x128xf32>, vector<256x128xf32>, vector<256x128xf32>, vector<256x128xf32>, vector<256x128xf32>, vector<256x128xf32>, vector<256x128xf32>, vector<256x128xf32> -> vector<256x1152xf32>
    %c0_48 = arith.constant 0 : index
    %c0_49 = arith.constant 0 : index
    %38 = vector.load %arg4[%c0_48, %c0_49] : memref<1152x128xf32, #tpu.memory_space<vmem>>, vector<1152x128xf32>
    %cst_50 = arith.constant dense<0.000000e+00> : vector<256x128xf32>
    %39 = tpu.matmul %37, %38, %cst_50 {dimension_numbers = #tpu.dot_dimension_numbers<[1], [0], [0], [1], [0, 0, 1, 1], [], []>} : vector<256x1152xf32>, vector<1152x128xf32>, vector<256x128xf32> -> vector<256x128xf32>
    %40 = vector.shape_cast %39 : vector<256x128xf32> to vector<1x16x16x128xf32>
    %c0_51 = arith.constant 0 : index
    %c0_52 = arith.constant 0 : index
    %c0_53 = arith.constant 0 : index
    %c0_54 = arith.constant 0 : index
    %41 = vector.load %arg5[%c0_51, %c0_52, %c0_53, %c0_54] : memref<1x16x16x128xf32, #tpu.memory_space<vmem>>, vector<1x16x16x128xf32>
    tpu.vector_store %arg5[%c0_51, %c0_52, %c0_53, %c0_54], %40 {strides = array<i32>} : memref<1x16x16x128xf32, #tpu.memory_space<vmem>>, vector<1x16x16x128xf32>,
    %cst_55 = arith.constant dense<0.000000e+00> : vector<128xf32>
    %42 = vector.multi_reduction <add>, %39, %cst_55 [0] : vector<256x128xf32> to vector<128xf32>
    %43 = vector.shape_cast %42 : vector<128xf32> to vector<1x128xf32>
    %44 = arith.mulf %39, %39 : vector<256x128xf32>
    %cst_56 = arith.constant dense<0.000000e+00> : vector<128xf32>
    %45 = vector.multi_reduction <add>, %44, %cst_56 [0] : vector<256x128xf32> to vector<128xf32>
    %46 = vector.shape_cast %45 : vector<128xf32> to vector<1x128xf32>
    %47 = tpu.concatenate %43, %46 in 0 : vector<1x128xf32>, vector<1x128xf32> -> vector<2x128xf32>
    %48 = vector.shape_cast %47 : vector<2x128xf32> to vector<1x2x128xf32>
    %c0_57 = arith.constant 0 : index
    %c0_58 = arith.constant 0 : index
    %c0_59 = arith.constant 0 : index
    %49 = vector.load %arg6[%c0_57, %c0_58, %c0_59] : memref<1x2x128xf32, #tpu.memory_space<vmem>>, vector<1x2x128xf32>
    tpu.vector_store %arg6[%c0_57, %c0_58, %c0_59], %48 {strides = array<i32>} : memref<1x2x128xf32, #tpu.memory_space<vmem>>, vector<1x2x128xf32>,
    return
  }
  func.func @transform_0(%arg0: i32) -> (i32, i32, i32, i32) {
    %c0_i32 = arith.constant 0 : i32
    %c0_i32_0 = arith.constant 0 : i32
    %c0_i32_1 = arith.constant 0 : i32
    %c0_i32_2 = arith.constant 0 : i32
    return %arg0, %c0_i32, %c0_i32_0, %c0_i32_1 : i32, i32, i32, i32
  }
  func.func @transform_1(%arg0: i32) -> (i32, i32) {
    %c0_i32 = arith.constant 0 : i32
    %c0_i32_0 = arith.constant 0 : i32
    %c0_i32_1 = arith.constant 0 : i32
    return %c0_i32, %c0_i32_0 : i32, i32
  }
  func.func @transform_2(%arg0: i32) -> (i32, i32) {
    %c0_i32 = arith.constant 0 : i32
    %c0_i32_0 = arith.constant 0 : i32
    %c0_i32_1 = arith.constant 0 : i32
    return %c0_i32, %c0_i32_0 : i32, i32
  }
  func.func @transform_3(%arg0: i32) -> (i32, i32) {
    %c0_i32 = arith.constant 0 : i32
    %c0_i32_0 = arith.constant 0 : i32
    %c0_i32_1 = arith.constant 0 : i32
    return %c0_i32, %c0_i32_0 : i32, i32
  }
  func.func @transform_4(%arg0: i32) -> (i32, i32, i32, i32) {
    %c0_i32 = arith.constant 0 : i32
    %c0_i32_0 = arith.constant 0 : i32
    %c0_i32_1 = arith.constant 0 : i32
    %c0_i32_2 = arith.constant 0 : i32
    return %arg0, %c0_i32, %c0_i32_0, %c0_i32_1 : i32, i32, i32, i32
  }
  func.func @transform_5(%arg0: i32) -> (i32, i32, i32) {
    %c0_i32 = arith.constant 0 : i32
    %c0_i32_0 = arith.constant 0 : i32
    %c0_i32_1 = arith.constant 0 : i32
    return %arg0, %c0_i32, %c0_i32_0 : i32, i32, i32
  }
}

module attributes {stable_mosaic.version = 11 : i64} {
  func.func @_affine_conv1x1_stats_kernel(%arg0: i32, %arg1: memref<512x128xf32, #tpu.memory_space<vmem>>, %arg2: memref<1x128xf32, #tpu.memory_space<vmem>>, %arg3: memref<1x128xf32, #tpu.memory_space<vmem>>, %arg4: memref<128x128xf32, #tpu.memory_space<vmem>>, %arg5: memref<512x128xf32, #tpu.memory_space<vmem>>, %arg6: memref<1x2x128xf32, #tpu.memory_space<vmem>>) attributes {dimension_semantics = [#tpu.dimension_semantics<parallel>], iteration_bounds = array<i64: 1>, scalar_prefetch = 0 : i64, scratch_operands = 0 : i64, tpu.core_type = #tpu.core_type<tc>, window_params = [{transform_indices = @transform_0, window_bounds = array<i64: 512, 128>}, {pipeline_mode = #tpu.pipeline_mode<synchronous>, transform_indices = @transform_1, window_bounds = array<i64: 1, 128>}, {pipeline_mode = #tpu.pipeline_mode<synchronous>, transform_indices = @transform_2, window_bounds = array<i64: 1, 128>}, {pipeline_mode = #tpu.pipeline_mode<synchronous>, transform_indices = @transform_3, window_bounds = array<i64: 128, 128>}, {transform_indices = @transform_4, window_bounds = array<i64: 512, 128>}, {transform_indices = @transform_5, window_bounds = array<i64: 1, 2, 128>}]} {
    %c0 = arith.constant 0 : index
    %c0_0 = arith.constant 0 : index
    %0 = vector.load %arg1[%c0, %c0_0] : memref<512x128xf32, #tpu.memory_space<vmem>>, vector<512x128xf32>
    %c0_1 = arith.constant 0 : index
    %c0_2 = arith.constant 0 : index
    %1 = vector.load %arg2[%c0_1, %c0_2] : memref<1x128xf32, #tpu.memory_space<vmem>>, vector<1x128xf32>
    %2 = vector.broadcast %1 : vector<1x128xf32> to vector<512x128xf32>
    %3 = arith.mulf %0, %2 : vector<512x128xf32>
    %c0_3 = arith.constant 0 : index
    %c0_4 = arith.constant 0 : index
    %4 = vector.load %arg3[%c0_3, %c0_4] : memref<1x128xf32, #tpu.memory_space<vmem>>, vector<1x128xf32>
    %5 = vector.broadcast %4 : vector<1x128xf32> to vector<512x128xf32>
    %6 = arith.addf %3, %5 : vector<512x128xf32>
    %cst = arith.constant 0.000000e+00 : f32
    %7 = vector.broadcast %cst : f32 to vector<512x128xf32>
    %8 = arith.maximumf %6, %7 : vector<512x128xf32>
    %c0_5 = arith.constant 0 : index
    %c0_6 = arith.constant 0 : index
    %9 = vector.load %arg4[%c0_5, %c0_6] : memref<128x128xf32, #tpu.memory_space<vmem>>, vector<128x128xf32>
    %cst_7 = arith.constant dense<0.000000e+00> : vector<512x128xf32>
    %10 = tpu.matmul %8, %9, %cst_7 {dimension_numbers = #tpu.dot_dimension_numbers<[1], [0], [0], [1], [0, 0, 1, 1], [], []>} : vector<512x128xf32>, vector<128x128xf32>, vector<512x128xf32> -> vector<512x128xf32>
    %c0_8 = arith.constant 0 : index
    %c0_9 = arith.constant 0 : index
    %11 = vector.load %arg5[%c0_8, %c0_9] : memref<512x128xf32, #tpu.memory_space<vmem>>, vector<512x128xf32>
    tpu.vector_store %arg5[%c0_8, %c0_9], %10 {strides = array<i32>} : memref<512x128xf32, #tpu.memory_space<vmem>>, vector<512x128xf32>,
    %cst_10 = arith.constant dense<0.000000e+00> : vector<128xf32>
    %12 = vector.multi_reduction <add>, %10, %cst_10 [0] : vector<512x128xf32> to vector<128xf32>
    %13 = vector.shape_cast %12 : vector<128xf32> to vector<1x128xf32>
    %14 = arith.mulf %10, %10 : vector<512x128xf32>
    %cst_11 = arith.constant dense<0.000000e+00> : vector<128xf32>
    %15 = vector.multi_reduction <add>, %14, %cst_11 [0] : vector<512x128xf32> to vector<128xf32>
    %16 = vector.shape_cast %15 : vector<128xf32> to vector<1x128xf32>
    %17 = tpu.concatenate %13, %16 in 0 : vector<1x128xf32>, vector<1x128xf32> -> vector<2x128xf32>
    %18 = vector.shape_cast %17 : vector<2x128xf32> to vector<1x2x128xf32>
    %c0_12 = arith.constant 0 : index
    %c0_13 = arith.constant 0 : index
    %c0_14 = arith.constant 0 : index
    %19 = vector.load %arg6[%c0_12, %c0_13, %c0_14] : memref<1x2x128xf32, #tpu.memory_space<vmem>>, vector<1x2x128xf32>
    tpu.vector_store %arg6[%c0_12, %c0_13, %c0_14], %18 {strides = array<i32>} : memref<1x2x128xf32, #tpu.memory_space<vmem>>, vector<1x2x128xf32>,
    return
  }
  func.func @transform_0(%arg0: i32) -> (i32, i32) {
    %c0_i32 = arith.constant 0 : i32
    %c0_i32_0 = arith.constant 0 : i32
    return %arg0, %c0_i32 : i32, i32
  }
  func.func @transform_1(%arg0: i32) -> (i32, i32) {
    %c0_i32 = arith.constant 0 : i32
    %c0_i32_0 = arith.constant 0 : i32
    %c0_i32_1 = arith.constant 0 : i32
    return %c0_i32, %c0_i32_0 : i32, i32
  }
  func.func @transform_2(%arg0: i32) -> (i32, i32) {
    %c0_i32 = arith.constant 0 : i32
    %c0_i32_0 = arith.constant 0 : i32
    %c0_i32_1 = arith.constant 0 : i32
    return %c0_i32, %c0_i32_0 : i32, i32
  }
  func.func @transform_3(%arg0: i32) -> (i32, i32) {
    %c0_i32 = arith.constant 0 : i32
    %c0_i32_0 = arith.constant 0 : i32
    %c0_i32_1 = arith.constant 0 : i32
    return %c0_i32, %c0_i32_0 : i32, i32
  }
  func.func @transform_4(%arg0: i32) -> (i32, i32) {
    %c0_i32 = arith.constant 0 : i32
    %c0_i32_0 = arith.constant 0 : i32
    return %arg0, %c0_i32 : i32, i32
  }
  func.func @transform_5(%arg0: i32) -> (i32, i32, i32) {
    %c0_i32 = arith.constant 0 : i32
    %c0_i32_0 = arith.constant 0 : i32
    %c0_i32_1 = arith.constant 0 : i32
    return %arg0, %c0_i32, %c0_i32_0 : i32, i32, i32
  }
}

module attributes {stable_mosaic.version = 11 : i64} {
  func.func @_output_kernel_conv(%arg0: i32, %arg1: memref<512x128xf32, #tpu.memory_space<vmem>>, %arg2: memref<1x128xf32, #tpu.memory_space<vmem>>, %arg3: memref<1x128xf32, #tpu.memory_space<vmem>>, %arg4: memref<512x128xf32, #tpu.memory_space<vmem>>, %arg5: memref<128x128xf32, #tpu.memory_space<vmem>>, %arg6: memref<512x128xf32, #tpu.memory_space<vmem>>) attributes {dimension_semantics = [#tpu.dimension_semantics<parallel>], iteration_bounds = array<i64: 1>, scalar_prefetch = 0 : i64, scratch_operands = 0 : i64, tpu.core_type = #tpu.core_type<tc>, window_params = [{transform_indices = @transform_0, window_bounds = array<i64: 512, 128>}, {pipeline_mode = #tpu.pipeline_mode<synchronous>, transform_indices = @transform_1, window_bounds = array<i64: 1, 128>}, {pipeline_mode = #tpu.pipeline_mode<synchronous>, transform_indices = @transform_2, window_bounds = array<i64: 1, 128>}, {transform_indices = @transform_3, window_bounds = array<i64: 512, 128>}, {pipeline_mode = #tpu.pipeline_mode<synchronous>, transform_indices = @transform_4, window_bounds = array<i64: 128, 128>}, {transform_indices = @transform_5, window_bounds = array<i64: 512, 128>}]} {
    %c0 = arith.constant 0 : index
    %c0_0 = arith.constant 0 : index
    %0 = vector.load %arg4[%c0, %c0_0] : memref<512x128xf32, #tpu.memory_space<vmem>>, vector<512x128xf32>
    %c0_1 = arith.constant 0 : index
    %c0_2 = arith.constant 0 : index
    %1 = vector.load %arg5[%c0_1, %c0_2] : memref<128x128xf32, #tpu.memory_space<vmem>>, vector<128x128xf32>
    %cst = arith.constant dense<0.000000e+00> : vector<512x128xf32>
    %2 = tpu.matmul %0, %1, %cst {dimension_numbers = #tpu.dot_dimension_numbers<[1], [0], [0], [1], [0, 0, 1, 1], [], []>} : vector<512x128xf32>, vector<128x128xf32>, vector<512x128xf32> -> vector<512x128xf32>
    %c0_3 = arith.constant 0 : index
    %c0_4 = arith.constant 0 : index
    %3 = vector.load %arg1[%c0_3, %c0_4] : memref<512x128xf32, #tpu.memory_space<vmem>>, vector<512x128xf32>
    %c0_5 = arith.constant 0 : index
    %c0_6 = arith.constant 0 : index
    %4 = vector.load %arg2[%c0_5, %c0_6] : memref<1x128xf32, #tpu.memory_space<vmem>>, vector<1x128xf32>
    %5 = vector.broadcast %4 : vector<1x128xf32> to vector<512x128xf32>
    %6 = arith.mulf %3, %5 : vector<512x128xf32>
    %c0_7 = arith.constant 0 : index
    %c0_8 = arith.constant 0 : index
    %7 = vector.load %arg3[%c0_7, %c0_8] : memref<1x128xf32, #tpu.memory_space<vmem>>, vector<1x128xf32>
    %8 = vector.broadcast %7 : vector<1x128xf32> to vector<512x128xf32>
    %9 = arith.addf %6, %8 : vector<512x128xf32>
    %10 = arith.addf %9, %2 : vector<512x128xf32>
    %cst_9 = arith.constant 0.000000e+00 : f32
    %11 = vector.broadcast %cst_9 : f32 to vector<512x128xf32>
    %12 = arith.maximumf %10, %11 : vector<512x128xf32>
    %c0_10 = arith.constant 0 : index
    %c0_11 = arith.constant 0 : index
    %13 = vector.load %arg6[%c0_10, %c0_11] : memref<512x128xf32, #tpu.memory_space<vmem>>, vector<512x128xf32>
    tpu.vector_store %arg6[%c0_10, %c0_11], %12 {strides = array<i32>} : memref<512x128xf32, #tpu.memory_space<vmem>>, vector<512x128xf32>,
    return
  }
  func.func @transform_0(%arg0: i32) -> (i32, i32) {
    %c0_i32 = arith.constant 0 : i32
    %c0_i32_0 = arith.constant 0 : i32
    return %arg0, %c0_i32 : i32, i32
  }
  func.func @transform_1(%arg0: i32) -> (i32, i32) {
    %c0_i32 = arith.constant 0 : i32
    %c0_i32_0 = arith.constant 0 : i32
    %c0_i32_1 = arith.constant 0 : i32
    return %c0_i32, %c0_i32_0 : i32, i32
  }
  func.func @transform_2(%arg0: i32) -> (i32, i32) {
    %c0_i32 = arith.constant 0 : i32
    %c0_i32_0 = arith.constant 0 : i32
    %c0_i32_1 = arith.constant 0 : i32
    return %c0_i32, %c0_i32_0 : i32, i32
  }
  func.func @transform_3(%arg0: i32) -> (i32, i32) {
    %c0_i32 = arith.constant 0 : i32
    %c0_i32_0 = arith.constant 0 : i32
    return %arg0, %c0_i32 : i32, i32
  }
  func.func @transform_4(%arg0: i32) -> (i32, i32) {
    %c0_i32 = arith.constant 0 : i32
    %c0_i32_0 = arith.constant 0 : i32
    %c0_i32_1 = arith.constant 0 : i32
    return %c0_i32, %c0_i32_0 : i32, i32
  }
  func.func @transform_5(%arg0: i32) -> (i32, i32) {
    %c0_i32 = arith.constant 0 : i32
    %c0_i32_0 = arith.constant 0 : i32
    return %arg0, %c0_i32 : i32, i32
  }
}

</mosaic_0001>

<llo_original>
// kernel: bottleneck_forward.4
$region0: #{bottleneck_forward.4}
  #allocation0 [shape = 'u32[]', space=smem, size = 0x4, offset = 0x4, fixed_abs, tag = 'smem constant byte address 0x4 - core index']
  #allocation1 [shape = 'u32[144,128]{1,0:T(1,128)}', space=vmem, size = 0x12000, scoped, tag = 'internal scratch']
  %s0 = inlined_call_operand.vmem [shape: f32[512,128], index: 0, kind: input, shape index: {}]
  %s1 = inlined_call_operand.vmem [shape: f32[128,128], index: 1, kind: input, shape index: {}]
  %s2 = inlined_call_operand.vmem [shape: f32[512,128], index: 2, kind: output, shape index: {0}]
  %s3 = inlined_call_operand.vmem [shape: f32[1,2,128], index: 3, kind: output, shape index: {1}]
  %4 = xla_tuple %s2, %s3
  %s5 = sld [smem:[#allocation0]]
  $region26: #{bottleneck_forward.4} parent=0
    _
  %s7 = ssub.s32 1, %s5
  %s8 = scalar_select 0, %s7, %s5
  // Predicated region
  $region2: #{bottleneck_forward.4} parent=0 // pred_check
    _
  $region3: #{bottleneck_forward.4} parent=0 // pred_check_branch
    %10 = sbr.rel (0) target = $region5
  $region4: #{bottleneck_forward.4} parent=0 // pred_region
    _
  $region5: #{bottleneck_forward.4} parent=0 // pred_fallthru
    _
  // Predicated region
  $region6: #{bottleneck_forward.4} parent=0 // pred_check
    _
  $region7: #{bottleneck_forward.4} parent=0 // pred_check_branch
    %12 = sbr.rel (0) target = $region9
  $region8: #{bottleneck_forward.4} parent=0 // pred_region
    _
  $region9: #{bottleneck_forward.4} parent=0 // pred_fallthru
    _
  %v13 = vld [vmem:[%s0] sm:$0xff]
  %v14 = vld [vmem:[%s0 + $0x8] sm:$0xff]
  %v15 = vld [vmem:[%s0 + $0x10] sm:$0xff]
  %v16 = vld [vmem:[%s0 + $0x18] sm:$0xff]
  %v17 = vld [vmem:[%s0 + $0x20] sm:$0xff]
  %v18 = vld [vmem:[%s0 + $0x28] sm:$0xff]
  %v19 = vld [vmem:[%s0 + $0x30] sm:$0xff]
  %v20 = vld [vmem:[%s0 + $0x38] sm:$0xff]
  %v21 = vld [vmem:[%s0 + $0x40] sm:$0xff]
  %v22 = vld [vmem:[%s0 + $0x48] sm:$0xff]
  %v23 = vld [vmem:[%s0 + $0x50] sm:$0xff]
  %v24 = vld [vmem:[%s0 + $0x58] sm:$0xff]
  %v25 = vld [vmem:[%s0 + $0x60] sm:$0xff]
  %v26 = vld [vmem:[%s0 + $0x68] sm:$0xff]
  %v27 = vld [vmem:[%s0 + $0x70] sm:$0xff]
  %v28 = vld [vmem:[%s0 + $0x78] sm:$0xff]
  %v29 = vld [vmem:[%s0 + $0x80] sm:$0xff]
  %v30 = vld [vmem:[%s0 + $0x88] sm:$0xff]
  %v31 = vld [vmem:[%s0 + $0x90] sm:$0xff]
  %v32 = vld [vmem:[%s0 + $0x98] sm:$0xff]
  %v33 = vld [vmem:[%s0 + $0xa0] sm:$0xff]
  %v34 = vld [vmem:[%s0 + $0xa8] sm:$0xff]
  %v35 = vld [vmem:[%s0 + $0xb0] sm:$0xff]
  %v36 = vld [vmem:[%s0 + $0xb8] sm:$0xff]
  %v37 = vld [vmem:[%s0 + $0xc0] sm:$0xff]
  %v38 = vld [vmem:[%s0 + $0xc8] sm:$0xff]
  %v39 = vld [vmem:[%s0 + $0xd0] sm:$0xff]
  %v40 = vld [vmem:[%s0 + $0xd8] sm:$0xff]
  %v41 = vld [vmem:[%s0 + $0xe0] sm:$0xff]
  %v42 = vld [vmem:[%s0 + $0xe8] sm:$0xff]
  %v43 = vld [vmem:[%s0 + $0xf0] sm:$0xff]
  %v44 = vld [vmem:[%s0 + $0xf8] sm:$0xff]
  %v45 = vld [vmem:[%s0 + $0x100] sm:$0xff]
  %v46 = vld [vmem:[%s0 + $0x108] sm:$0xff]
  %v47 = vld [vmem:[%s0 + $0x110] sm:$0xff]
  %v48 = vld [vmem:[%s0 + $0x118] sm:$0xff]
  %v49 = vld [vmem:[%s0 + $0x120] sm:$0xff]
  %v50 = vld [vmem:[%s0 + $0x128] sm:$0xff]
  %v51 = vld [vmem:[%s0 + $0x130] sm:$0xff]
  %v52 = vld [vmem:[%s0 + $0x138] sm:$0xff]
  %v53 = vld [vmem:[%s0 + $0x140] sm:$0xff]
  %v54 = vld [vmem:[%s0 + $0x148] sm:$0xff]
  %v55 = vld [vmem:[%s0 + $0x150] sm:$0xff]
  %v56 = vld [vmem:[%s0 + $0x158] sm:$0xff]
  %v57 = vld [vmem:[%s0 + $0x160] sm:$0xff]
  %v58 = vld [vmem:[%s0 + $0x168] sm:$0xff]
  %v59 = vld [vmem:[%s0 + $0x170] sm:$0xff]
  %v60 = vld [vmem:[%s0 + $0x178] sm:$0xff]
  %v61 = vld [vmem:[%s0 + $0x180] sm:$0xff]
  %v62 = vld [vmem:[%s0 + $0x188] sm:$0xff]
  %v63 = vld [vmem:[%s0 + $0x190] sm:$0xff]
  %v64 = vld [vmem:[%s0 + $0x198] sm:$0xff]
  %v65 = vld [vmem:[%s0 + $0x1a0] sm:$0xff]
  %v66 = vld [vmem:[%s0 + $0x1a8] sm:$0xff]
  %v67 = vld [vmem:[%s0 + $0x1b0] sm:$0xff]
  %v68 = vld [vmem:[%s0 + $0x1b8] sm:$0xff]
  %v69 = vld [vmem:[%s0 + $0x1c0] sm:$0xff]
  %v70 = vld [vmem:[%s0 + $0x1c8] sm:$0xff]
  %v71 = vld [vmem:[%s0 + $0x1d0] sm:$0xff]
  %v72 = vld [vmem:[%s0 + $0x1d8] sm:$0xff]
  %v73 = vld [vmem:[%s0 + $0x1e0] sm:$0xff]
  %v74 = vld [vmem:[%s0 + $0x1e8] sm:$0xff]
  %v75 = vld [vmem:[%s0 + $0x1f0] sm:$0xff]
  %v76 = vld [vmem:[%s0 + $0x1f8] sm:$0xff]
  %v77 = vld [vmem:[%s1] sm:$0xff]
  %v78 = vld [vmem:[%s1 + $0x8] sm:$0xff]
  %v79 = vld [vmem:[%s1 + $0x10] sm:$0xff]
  %v80 = vld [vmem:[%s1 + $0x18] sm:$0xff]
  %v81 = vld [vmem:[%s1 + $0x20] sm:$0xff]
  %v82 = vld [vmem:[%s1 + $0x28] sm:$0xff]
  %v83 = vld [vmem:[%s1 + $0x30] sm:$0xff]
  %v84 = vld [vmem:[%s1 + $0x38] sm:$0xff]
  %v85 = vld [vmem:[%s1 + $0x40] sm:$0xff]
  %v86 = vld [vmem:[%s1 + $0x48] sm:$0xff]
  %v87 = vld [vmem:[%s1 + $0x50] sm:$0xff]
  %v88 = vld [vmem:[%s1 + $0x58] sm:$0xff]
  %v89 = vld [vmem:[%s1 + $0x60] sm:$0xff]
  %v90 = vld [vmem:[%s1 + $0x68] sm:$0xff]
  %v91 = vld [vmem:[%s1 + $0x70] sm:$0xff]
  %v92 = vld [vmem:[%s1 + $0x78] sm:$0xff]
  %93 = vmatprep.subr.mxu0 0.0
  %94 = vmatpush1.msra.mxu0 %v92
  %95 = vmatprep.subr.mxu0 0.0
  %96 = vmatpush1.msra.mxu0 %v91
  %97 = vmatprep.subr.mxu0 0.0
  %98 = vmatpush1.msra.mxu0 %v90
  %99 = vmatprep.subr.mxu0 0.0
  %100 = vmatpush1.msra.mxu0 %v89
  %101 = vmatprep.subr.mxu0 0.0
  %102 = vmatpush1.msra.mxu0 %v88
  %103 = vmatprep.subr.mxu0 0.0
  %104 = vmatpush1.msra.mxu0 %v87
  %105 = vmatprep.subr.mxu0 0.0
  %106 = vmatpush1.msra.mxu0 %v86
  %107 = vmatprep.subr.mxu0 0.0
  %108 = vmatpush1.msra.mxu0 %v85
  %109 = vmatprep.subr.mxu0 0.0
  %110 = vmatpush1.msra.mxu0 %v84
  %111 = vmatprep.subr.mxu0 0.0
  %112 = vmatpush1.msra.mxu0 %v83
  %113 = vmatprep.subr.mxu0 0.0
  %114 = vmatpush1.msra.mxu0 %v82
  %115 = vmatprep.subr.mxu0 0.0
  %116 = vmatpush1.msra.mxu0 %v81
  %117 = vmatprep.subr.mxu0 0.0
  %118 = vmatpush1.msra.mxu0 %v80
  %119 = vmatprep.subr.mxu0 0.0
  %120 = vmatpush1.msra.mxu0 %v79
  %121 = vmatprep.subr.mxu0 0.0
  %122 = vmatpush1.msra.mxu0 %v78
  %123 = vmatprep.subr.mxu0 0.0
  %124 = vmatpush1.msra.mxu0 %v77
  %125 = vmatprep.subr.mxu0 0.0
  %126 = vmatpush2.msra.mxu0 0.0
  %127 = vmatprep.subr.mxu0 0.0
  %128 = vmatpush2.msra.mxu0 0.0
  %129 = vmatprep.subr.mxu0 0.0
  %130 = vmatpush2.msra.mxu0 0.0
  %131 = vmatprep.subr.mxu0 0.0
  %132 = vmatpush2.msra.mxu0 0.0
  %133 = vmatprep.subr.mxu0 0.0
  %134 = vmatpush2.msra.mxu0 0.0
  %135 = vmatprep.subr.mxu0 0.0
  %136 = vmatpush2.msra.mxu0 0.0
  %137 = vmatprep.subr.mxu0 0.0
  %138 = vmatpush2.msra.mxu0 0.0
  %139 = vmatprep.subr.mxu0 0.0
  %140 = vmatpush2.msra.mxu0 0.0
  %141 = vmatprep.subr.mxu0 0.0
  %142 = vmatpush2.msra.mxu0 0.0
  %143 = vmatprep.subr.mxu0 0.0
  %144 = vmatpush2.msra.mxu0 0.0
  %145 = vmatprep.subr.mxu0 0.0
  %146 = vmatpush2.msra.mxu0 0.0
  %147 = vmatprep.subr.mxu0 0.0
  %148 = vmatpush2.msra.mxu0 0.0
  %149 = vmatprep.subr.mxu0 0.0
  %150 = vmatpush2.msra.mxu0 0.0
  %151 = vmatprep.subr.mxu0 0.0
  %152 = vmatpush2.msra.mxu0 0.0
  %153 = vmatprep.subr.mxu0 0.0
  %154 = vmatpush2.msra.mxu0 0.0
  %155 = vmatprep.subr.mxu0 0.0
  %156 = vmatpush2.msra.mxu0 0.0
  %157 = vmatprep.mubr.f32.mxu0 0.0
  %158 = vmatmul.mubr.f32.gmra.mxu0 %v13
  %v159 = vpop.f32.mrf.mxu0
  %v160 = vadd.f32 0.0, %v159
  %v161 = vpop.f32.mrf.mxu0
  %162 = vmatprep.mubr.f32.mxu0 0.0
  %163 = vmatmul.mubr.f32.gmra.mxu0 %v14
  %v164 = vpop.f32.mrf.mxu0
  %v165 = vadd.f32 0.0, %v164
  %v166 = vpop.f32.mrf.mxu0
  %167 = vmatprep.mubr.f32.mxu0 0.0
  %168 = vmatmul.mubr.f32.gmra.mxu0 %v15
  %v169 = vpop.f32.mrf.mxu0
  %v170 = vadd.f32 0.0, %v169
  %v171 = vpop.f32.mrf.mxu0
  %172 = vmatprep.mubr.f32.mxu0 0.0
  %173 = vmatmul.mubr.f32.gmra.mxu0 %v16
  %v174 = vpop.f32.mrf.mxu0
  %v175 = vadd.f32 0.0, %v174
  %v176 = vpop.f32.mrf.mxu0
  %177 = vmatprep.mubr.f32.mxu0 0.0
  %178 = vmatmul.mubr.f32.gmra.mxu0 %v17
  %v179 = vpop.f32.mrf.mxu0
  %v180 = vadd.f32 0.0, %v179
  %v181 = vpop.f32.mrf.mxu0
  %182 = vmatprep.mubr.f32.mxu0 0.0
  %183 = vmatmul.mubr.f32.gmra.mxu0 %v18
  %v184 = vpop.f32.mrf.mxu0
  %v185 = vadd.f32 0.0, %v184
  %v186 = vpop.f32.mrf.mxu0
  %187 = vmatprep.mubr.f32.mxu0 0.0
  %188 = vmatmul.mubr.f32.gmra.mxu0 %v19
  %v189 = vpop.f32.mrf.mxu0
  %v190 = vadd.f32 0.0, %v189
  %v191 = vpop.f32.mrf.mxu0
  %192 = vmatprep.mubr.f32.mxu0 0.0
  %193 = vmatmul.mubr.f32.gmra.mxu0 %v20
  %v194 = vpop.f32.mrf.mxu0
  %v195 = vadd.f32 0.0, %v194
  %v196 = vpop.f32.mrf.mxu0
  %197 = vmatprep.mubr.f32.mxu0 0.0
  %198 = vmatmul.mubr.f32.gmra.mxu0 %v21
  %v199 = vpop.f32.mrf.mxu0
  %v200 = vadd.f32 0.0, %v199
  %v201 = vpop.f32.mrf.mxu0
  %202 = vmatprep.mubr.f32.mxu0 0.0
  %203 = vmatmul.mubr.f32.gmra.mxu0 %v22
  %v204 = vpop.f32.mrf.mxu0
  %v205 = vadd.f32 0.0, %v204
  %v206 = vpop.f32.mrf.mxu0
  %207 = vmatprep.mubr.f32.mxu0 0.0
  %208 = vmatmul.mubr.f32.gmra.mxu0 %v23
  %v209 = vpop.f32.mrf.mxu0
  %v210 = vadd.f32 0.0, %v209
  %v211 = vpop.f32.mrf.mxu0
  %212 = vmatprep.mubr.f32.mxu0 0.0
  %213 = vmatmul.mubr.f32.gmra.mxu0 %v24
  %v214 = vpop.f32.mrf.mxu0
  %v215 = vadd.f32 0.0, %v214
  %v216 = vpop.f32.mrf.mxu0
  %217 = vmatprep.mubr.f32.mxu0 0.0
  %218 = vmatmul.mubr.f32.gmra.mxu0 %v25
  %v219 = vpop.f32.mrf.mxu0
  %v220 = vadd.f32 0.0, %v219
  %v221 = vpop.f32.mrf.mxu0
  %222 = vmatprep.mubr.f32.mxu0 0.0
  %223 = vmatmul.mubr.f32.gmra.mxu0 %v26
  %v224 = vpop.f32.mrf.mxu0
  %v225 = vadd.f32 0.0, %v224
  %v226 = vpop.f32.mrf.mxu0
  %227 = vmatprep.mubr.f32.mxu0 0.0
  %228 = vmatmul.mubr.f32.gmra.mxu0 %v27
  %v229 = vpop.f32.mrf.mxu0
  %v230 = vadd.f32 0.0, %v229
  %v231 = vpop.f32.mrf.mxu0
  %232 = vmatprep.mubr.f32.mxu0 0.0
  %233 = vmatmul.mubr.f32.gmra.mxu0 %v28
  %v234 = vpop.f32.mrf.mxu0
  %v235 = vadd.f32 0.0, %v234
  %v236 = vpop.f32.mrf.mxu0
  %237 = vmatprep.mubr.f32.mxu0 0.0
  %238 = vmatmul.mubr.f32.gmra.mxu0 %v29
  %v239 = vpop.f32.mrf.mxu0
  %v240 = vadd.f32 0.0, %v239
  %v241 = vpop.f32.mrf.mxu0
  %242 = vmatprep.mubr.f32.mxu0 0.0
  %243 = vmatmul.mubr.f32.gmra.mxu0 %v30
  %v244 = vpop.f32.mrf.mxu0
  %v245 = vadd.f32 0.0, %v244
  %v246 = vpop.f32.mrf.mxu0
  %247 = vmatprep.mubr.f32.mxu0 0.0
  %248 = vmatmul.mubr.f32.gmra.mxu0 %v31
  %v249 = vpop.f32.mrf.mxu0
  %v250 = vadd.f32 0.0, %v249
  %v251 = vpop.f32.mrf.mxu0
  %252 = vmatprep.mubr.f32.mxu0 0.0
  %253 = vmatmul.mubr.f32.gmra.mxu0 %v32
  %v254 = vpop.f32.mrf.mxu0
  %v255 = vadd.f32 0.0, %v254
  %v256 = vpop.f32.mrf.mxu0
  %257 = vmatprep.mubr.f32.mxu0 0.0
  %258 = vmatmul.mubr.f32.gmra.mxu0 %v33
  %v259 = vpop.f32.mrf.mxu0
  %v260 = vadd.f32 0.0, %v259
  %v261 = vpop.f32.mrf.mxu0
  %262 = vmatprep.mubr.f32.mxu0 0.0
  %263 = vmatmul.mubr.f32.gmra.mxu0 %v34
  %v264 = vpop.f32.mrf.mxu0
  %v265 = vadd.f32 0.0, %v264
  %v266 = vpop.f32.mrf.mxu0
  %267 = vmatprep.mubr.f32.mxu0 0.0
  %268 = vmatmul.mubr.f32.gmra.mxu0 %v35
  %v269 = vpop.f32.mrf.mxu0
  %v270 = vadd.f32 0.0, %v269
  %v271 = vpop.f32.mrf.mxu0
  %272 = vmatprep.mubr.f32.mxu0 0.0
  %273 = vmatmul.mubr.f32.gmra.mxu0 %v36
  %v274 = vpop.f32.mrf.mxu0
  %v275 = vadd.f32 0.0, %v274
  %v276 = vpop.f32.mrf.mxu0
  %277 = vmatprep.mubr.f32.mxu0 0.0
  %278 = vmatmul.mubr.f32.gmra.mxu0 %v37
  %v279 = vpop.f32.mrf.mxu0
  %v280 = vadd.f32 0.0, %v279
  %v281 = vpop.f32.mrf.mxu0
  %282 = vmatprep.mubr.f32.mxu0 0.0
  %283 = vmatmul.mubr.f32.gmra.mxu0 %v38
  %v284 = vpop.f32.mrf.mxu0
  %v285 = vadd.f32 0.0, %v284
  %v286 = vpop.f32.mrf.mxu0
  %287 = vmatprep.mubr.f32.mxu0 0.0
  %288 = vmatmul.mubr.f32.gmra.mxu0 %v39
  %v289 = vpop.f32.mrf.mxu0
  %v290 = vadd.f32 0.0, %v289
  %v291 = vpop.f32.mrf.mxu0
  %292 = vmatprep.mubr.f32.mxu0 0.0
  %293 = vmatmul.mubr.f32.gmra.mxu0 %v40
  %v294 = vpop.f32.mrf.mxu0
  %v295 = vadd.f32 0.0, %v294
  %v296 = vpop.f32.mrf.mxu0
  %297 = vmatprep.mubr.f32.mxu0 0.0
  %298 = vmatmul.mubr.f32.gmra.mxu0 %v41
  %v299 = vpop.f32.mrf.mxu0
  %v300 = vadd.f32 0.0, %v299
  %v301 = vpop.f32.mrf.mxu0
  %302 = vmatprep.mubr.f32.mxu0 0.0
  %303 = vmatmul.mubr.f32.gmra.mxu0 %v42
  %v304 = vpop.f32.mrf.mxu0
  %v305 = vadd.f32 0.0, %v304
  %v306 = vpop.f32.mrf.mxu0
  %307 = vmatprep.mubr.f32.mxu0 0.0
  %308 = vmatmul.mubr.f32.gmra.mxu0 %v43
  %v309 = vpop.f32.mrf.mxu0
  %v310 = vadd.f32 0.0, %v309
  %v311 = vpop.f32.mrf.mxu0
  %312 = vmatprep.mubr.f32.mxu0 0.0
  %313 = vmatmul.mubr.f32.gmra.mxu0 %v44
  %v314 = vpop.f32.mrf.mxu0
  %v315 = vadd.f32 0.0, %v314
  %v316 = vpop.f32.mrf.mxu0
  %317 = vmatprep.mubr.f32.mxu0 0.0
  %318 = vmatmul.mubr.f32.gmra.mxu0 %v45
  %v319 = vpop.f32.mrf.mxu0
  %v320 = vadd.f32 0.0, %v319
  %v321 = vpop.f32.mrf.mxu0
  %322 = vmatprep.mubr.f32.mxu0 0.0
  %323 = vmatmul.mubr.f32.gmra.mxu0 %v46
  %v324 = vpop.f32.mrf.mxu0
  %v325 = vadd.f32 0.0, %v324
  %v326 = vpop.f32.mrf.mxu0
  %327 = vmatprep.mubr.f32.mxu0 0.0
  %328 = vmatmul.mubr.f32.gmra.mxu0 %v47
  %v329 = vpop.f32.mrf.mxu0
  %v330 = vadd.f32 0.0, %v329
  %v331 = vpop.f32.mrf.mxu0
  %332 = vmatprep.mubr.f32.mxu0 0.0
  %333 = vmatmul.mubr.f32.gmra.mxu0 %v48
  %v334 = vpop.f32.mrf.mxu0
  %v335 = vadd.f32 0.0, %v334
  %v336 = vpop.f32.mrf.mxu0
  %337 = vmatprep.mubr.f32.mxu0 0.0
  %338 = vmatmul.mubr.f32.gmra.mxu0 %v49
  %v339 = vpop.f32.mrf.mxu0
  %v340 = vadd.f32 0.0, %v339
  %v341 = vpop.f32.mrf.mxu0
  %342 = vmatprep.mubr.f32.mxu0 0.0
  %343 = vmatmul.mubr.f32.gmra.mxu0 %v50
  %v344 = vpop.f32.mrf.mxu0
  %v345 = vadd.f32 0.0, %v344
  %v346 = vpop.f32.mrf.mxu0
  %347 = vmatprep.mubr.f32.mxu0 0.0
  %348 = vmatmul.mubr.f32.gmra.mxu0 %v51
  %v349 = vpop.f32.mrf.mxu0
  %v350 = vadd.f32 0.0, %v349
  %v351 = vpop.f32.mrf.mxu0
  %352 = vmatprep.mubr.f32.mxu0 0.0
  %353 = vmatmul.mubr.f32.gmra.mxu0 %v52
  %v354 = vpop.f32.mrf.mxu0
  %v355 = vadd.f32 0.0, %v354
  %v356 = vpop.f32.mrf.mxu0
  %357 = vmatprep.mubr.f32.mxu0 0.0
  %358 = vmatmul.mubr.f32.gmra.mxu0 %v53
  %v359 = vpop.f32.mrf.mxu0
  %v360 = vadd.f32 0.0, %v359
  %v361 = vpop.f32.mrf.mxu0
  %362 = vmatprep.mubr.f32.mxu0 0.0
  %363 = vmatmul.mubr.f32.gmra.mxu0 %v54
  %v364 = vpop.f32.mrf.mxu0
  %v365 = vadd.f32 0.0, %v364
  %v366 = vpop.f32.mrf.mxu0
  %367 = vmatprep.mubr.f32.mxu0 0.0
  %368 = vmatmul.mubr.f32.gmra.mxu0 %v55
  %v369 = vpop.f32.mrf.mxu0
  %v370 = vadd.f32 0.0, %v369
  %v371 = vpop.f32.mrf.mxu0
  %372 = vmatprep.mubr.f32.mxu0 0.0
  %373 = vmatmul.mubr.f32.gmra.mxu0 %v56
  %v374 = vpop.f32.mrf.mxu0
  %v375 = vadd.f32 0.0, %v374
  %v376 = vpop.f32.mrf.mxu0
  %377 = vmatprep.mubr.f32.mxu0 0.0
  %378 = vmatmul.mubr.f32.gmra.mxu0 %v57
  %v379 = vpop.f32.mrf.mxu0
  %v380 = vadd.f32 0.0, %v379
  %v381 = vpop.f32.mrf.mxu0
  %382 = vmatprep.mubr.f32.mxu0 0.0
  %383 = vmatmul.mubr.f32.gmra.mxu0 %v58
  %v384 = vpop.f32.mrf.mxu0
  %v385 = vadd.f32 0.0, %v384
  %v386 = vpop.f32.mrf.mxu0
  %387 = vmatprep.mubr.f32.mxu0 0.0
  %388 = vmatmul.mubr.f32.gmra.mxu0 %v59
  %v389 = vpop.f32.mrf.mxu0
  %v390 = vadd.f32 0.0, %v389
  %v391 = vpop.f32.mrf.mxu0
  %392 = vmatprep.mubr.f32.mxu0 0.0
  %393 = vmatmul.mubr.f32.gmra.mxu0 %v60
  %v394 = vpop.f32.mrf.mxu0
  %v395 = vadd.f32 0.0, %v394
  %v396 = vpop.f32.mrf.mxu0
  %397 = vmatprep.mubr.f32.mxu0 0.0
  %398 = vmatmul.mubr.f32.gmra.mxu0 %v61
  %v399 = vpop.f32.mrf.mxu0
  %v400 = vadd.f32 0.0, %v399
  %v401 = vpop.f32.mrf.mxu0
  %402 = vmatprep.mubr.f32.mxu0 0.0
  %403 = vmatmul.mubr.f32.gmra.mxu0 %v62
  %v404 = vpop.f32.mrf.mxu0
  %v405 = vadd.f32 0.0, %v404
  %v406 = vpop.f32.mrf.mxu0
  %407 = vmatprep.mubr.f32.mxu0 0.0
  %408 = vmatmul.mubr.f32.gmra.mxu0 %v63
  %v409 = vpop.f32.mrf.mxu0
  %v410 = vadd.f32 0.0, %v409
  %v411 = vpop.f32.mrf.mxu0
  %412 = vmatprep.mubr.f32.mxu0 0.0
  %413 = vmatmul.mubr.f32.gmra.mxu0 %v64
  %v414 = vpop.f32.mrf.mxu0
  %v415 = vadd.f32 0.0, %v414
  %v416 = vpop.f32.mrf.mxu0
  %417 = vmatprep.mubr.f32.mxu0 0.0
  %418 = vmatmul.mubr.f32.gmra.mxu0 %v65
  %v419 = vpop.f32.mrf.mxu0
  %v420 = vadd.f32 0.0, %v419
  %v421 = vpop.f32.mrf.mxu0
  %422 = vmatprep.mubr.f32.mxu0 0.0
  %423 = vmatmul.mubr.f32.gmra.mxu0 %v66
  %v424 = vpop.f32.mrf.mxu0
  %v425 = vadd.f32 0.0, %v424
  %v426 = vpop.f32.mrf.mxu0
  %427 = vmatprep.mubr.f32.mxu0 0.0
  %428 = vmatmul.mubr.f32.gmra.mxu0 %v67
  %v429 = vpop.f32.mrf.mxu0
  %v430 = vadd.f32 0.0, %v429
  %v431 = vpop.f32.mrf.mxu0
  %432 = vmatprep.mubr.f32.mxu0 0.0
  %433 = vmatmul.mubr.f32.gmra.mxu0 %v68
  %v434 = vpop.f32.mrf.mxu0
  %v435 = vadd.f32 0.0, %v434
  %v436 = vpop.f32.mrf.mxu0
  %437 = vmatprep.mubr.f32.mxu0 0.0
  %438 = vmatmul.mubr.f32.gmra.mxu0 %v69
  %v439 = vpop.f32.mrf.mxu0
  %v440 = vadd.f32 0.0, %v439
  %v441 = vpop.f32.mrf.mxu0
  %442 = vmatprep.mubr.f32.mxu0 0.0
  %443 = vmatmul.mubr.f32.gmra.mxu0 %v70
  %v444 = vpop.f32.mrf.mxu0
  %v445 = vadd.f32 0.0, %v444
  %v446 = vpop.f32.mrf.mxu0
  %447 = vmatprep.mubr.f32.mxu0 0.0
  %448 = vmatmul.mubr.f32.gmra.mxu0 %v71
  %v449 = vpop.f32.mrf.mxu0
  %v450 = vadd.f32 0.0, %v449
  %v451 = vpop.f32.mrf.mxu0
  %452 = vmatprep.mubr.f32.mxu0 0.0
  %453 = vmatmul.mubr.f32.gmra.mxu0 %v72
  %v454 = vpop.f32.mrf.mxu0
  %v455 = vadd.f32 0.0, %v454
  %v456 = vpop.f32.mrf.mxu0
  %457 = vmatprep.mubr.f32.mxu0 0.0
  %458 = vmatmul.mubr.f32.gmra.mxu0 %v73
  %v459 = vpop.f32.mrf.mxu0
  %v460 = vadd.f32 0.0, %v459
  %v461 = vpop.f32.mrf.mxu0
  %462 = vmatprep.mubr.f32.mxu0 0.0
  %463 = vmatmul.mubr.f32.gmra.mxu0 %v74
  %v464 = vpop.f32.mrf.mxu0
  %v465 = vadd.f32 0.0, %v464
  %v466 = vpop.f32.mrf.mxu0
  %467 = vmatprep.mubr.f32.mxu0 0.0
  %468 = vmatmul.mubr.f32.gmra.mxu0 %v75
  %v469 = vpop.f32.mrf.mxu0
  %v470 = vadd.f32 0.0, %v469
  %v471 = vpop.f32.mrf.mxu0
  %472 = vmatprep.mubr.f32.mxu0 0.0
  %473 = vmatmul.mubr.f32.gmra.mxu0 %v76
  %v474 = vpop.f32.mrf.mxu0
  %v475 = vadd.f32 0.0, %v474
  %v476 = vpop.f32.mrf.mxu0
  %477 = vdwg.mxu0
  %478 = vst [vmem:[%s2] sm:$0xff] %v160
  %479 = vst [vmem:[%s2 + $0x8] sm:$0xff] %v165
  %480 = vst [vmem:[%s2 + $0x10] sm:$0xff] %v170
  %481 = vst [vmem:[%s2 + $0x18] sm:$0xff] %v175
  %482 = vst [vmem:[%s2 + $0x20] sm:$0xff] %v180
  %483 = vst [vmem:[%s2 + $0x28] sm:$0xff] %v185
  %484 = vst [vmem:[%s2 + $0x30] sm:$0xff] %v190
  %485 = vst [vmem:[%s2 + $0x38] sm:$0xff] %v195
  %486 = vst [vmem:[%s2 + $0x40] sm:$0xff] %v200
  %487 = vst [vmem:[%s2 + $0x48] sm:$0xff] %v205
  %488 = vst [vmem:[%s2 + $0x50] sm:$0xff] %v210
  %489 = vst [vmem:[%s2 + $0x58] sm:$0xff] %v215
  %490 = vst [vmem:[%s2 + $0x60] sm:$0xff] %v220
  %491 = vst [vmem:[%s2 + $0x68] sm:$0xff] %v225
  %492 = vst [vmem:[%s2 + $0x70] sm:$0xff] %v230
  %493 = vst [vmem:[%s2 + $0x78] sm:$0xff] %v235
  %494 = vst [vmem:[%s2 + $0x80] sm:$0xff] %v240
  %495 = vst [vmem:[%s2 + $0x88] sm:$0xff] %v245
  %496 = vst [vmem:[%s2 + $0x90] sm:$0xff] %v250
  %497 = vst [vmem:[%s2 + $0x98] sm:$0xff] %v255
  %498 = vst [vmem:[%s2 + $0xa0] sm:$0xff] %v260
  %499 = vst [vmem:[%s2 + $0xa8] sm:$0xff] %v265
  %500 = vst [vmem:[%s2 + $0xb0] sm:$0xff] %v270
  %501 = vst [vmem:[%s2 + $0xb8] sm:$0xff] %v275
  %502 = vst [vmem:[%s2 + $0xc0] sm:$0xff] %v280
  %503 = vst [vmem:[%s2 + $0xc8] sm:$0xff] %v285
  %504 = vst [vmem:[%s2 + $0xd0] sm:$0xff] %v290
  %505 = vst [vmem:[%s2 + $0xd8] sm:$0xff] %v295
  %506 = vst [vmem:[%s2 + $0xe0] sm:$0xff] %v300
  %507 = vst [vmem:[%s2 + $0xe8] sm:$0xff] %v305
  %508 = vst [vmem:[%s2 + $0xf0] sm:$0xff] %v310
  %509 = vst [vmem:[%s2 + $0xf8] sm:$0xff] %v315
  %510 = vst [vmem:[%s2 + $0x100] sm:$0xff] %v320
  %511 = vst [vmem:[%s2 + $0x108] sm:$0xff] %v325
  %512 = vst [vmem:[%s2 + $0x110] sm:$0xff] %v330
  %513 = vst [vmem:[%s2 + $0x118] sm:$0xff] %v335
  %514 = vst [vmem:[%s2 + $0x120] sm:$0xff] %v340
  %515 = vst [vmem:[%s2 + $0x128] sm:$0xff] %v345
  %516 = vst [vmem:[%s2 + $0x130] sm:$0xff] %v350
  %517 = vst [vmem:[%s2 + $0x138] sm:$0xff] %v355
  %518 = vst [vmem:[%s2 + $0x140] sm:$0xff] %v360
  %519 = vst [vmem:[%s2 + $0x148] sm:$0xff] %v365
  %520 = vst [vmem:[%s2 + $0x150] sm:$0xff] %v370
  %521 = vst [vmem:[%s2 + $0x158] sm:$0xff] %v375
  %522 = vst [vmem:[%s2 + $0x160] sm:$0xff] %v380
  %523 = vst [vmem:[%s2 + $0x168] sm:$0xff] %v385
  %524 = vst [vmem:[%s2 + $0x170] sm:$0xff] %v390
  %525 = vst [vmem:[%s2 + $0x178] sm:$0xff] %v395
  %526 = vst [vmem:[%s2 + $0x180] sm:$0xff] %v400
  %527 = vst [vmem:[%s2 + $0x188] sm:$0xff] %v405
  %528 = vst [vmem:[%s2 + $0x190] sm:$0xff] %v410
  %529 = vst [vmem:[%s2 + $0x198] sm:$0xff] %v415
  %530 = vst [vmem:[%s2 + $0x1a0] sm:$0xff] %v420
  %531 = vst [vmem:[%s2 + $0x1a8] sm:$0xff] %v425
  %532 = vst [vmem:[%s2 + $0x1b0] sm:$0xff] %v430
  %533 = vst [vmem:[%s2 + $0x1b8] sm:$0xff] %v435
  %534 = vst [vmem:[%s2 + $0x1c0] sm:$0xff] %v440
  %535 = vst [vmem:[%s2 + $0x1c8] sm:$0xff] %v445
  %536 = vst [vmem:[%s2 + $0x1d0] sm:$0xff] %v450
  %537 = vst [vmem:[%s2 + $0x1d8] sm:$0xff] %v455
  %538 = vst [vmem:[%s2 + $0x1e0] sm:$0xff] %v460
  %539 = vst [vmem:[%s2 + $0x1e8] sm:$0xff] %v465
  %540 = vst [vmem:[%s2 + $0x1f0] sm:$0xff] %v470
  %541 = vst [vmem:[%s2 + $0x1f8] sm:$0xff] %v475
  %v542 = vadd.f32 %v160, %v165
  %v543 = vadd.f32 %v542, %v170
  %v544 = vadd.f32 %v543, %v175
  %v545 = vadd.f32 %v544, %v180
  %v546 = vadd.f32 %v545, %v185
  %v547 = vadd.f32 %v546, %v190
  %v548 = vadd.f32 %v547, %v195
  %v549 = vadd.f32 %v548, %v200
  %v550 = vadd.f32 %v549, %v205
  %v551 = vadd.f32 %v550, %v210
  %v552 = vadd.f32 %v551, %v215
  %v553 = vadd.f32 %v552, %v220
  %v554 = vadd.f32 %v553, %v225
  %v555 = vadd.f32 %v554, %v230
  %v556 = vadd.f32 %v555, %v235
  %v557 = vadd.f32 %v556, %v240
  %v558 = vadd.f32 %v557, %v245
  %v559 = vadd.f32 %v558, %v250
  %v560 = vadd.f32 %v559, %v255
  %v561 = vadd.f32 %v560, %v260
  %v562 = vadd.f32 %v561, %v265
  %v563 = vadd.f32 %v562, %v270
  %v564 = vadd.f32 %v563, %v275
  %v565 = vadd.f32 %v564, %v280
  %v566 = vadd.f32 %v565, %v285
  %v567 = vadd.f32 %v566, %v290
  %v568 = vadd.f32 %v567, %v295
  %v569 = vadd.f32 %v568, %v300
  %v570 = vadd.f32 %v569, %v305
  %v571 = vadd.f32 %v570, %v310
  %v572 = vadd.f32 %v571, %v315
  %v573 = vadd.f32 %v572, %v320
  %v574 = vadd.f32 %v573, %v325
  %v575 = vadd.f32 %v574, %v330
  %v576 = vadd.f32 %v575, %v335
  %v577 = vadd.f32 %v576, %v340
  %v578 = vadd.f32 %v577, %v345
  %v579 = vadd.f32 %v578, %v350
  %v580 = vadd.f32 %v579, %v355
  %v581 = vadd.f32 %v580, %v360
  %v582 = vadd.f32 %v581, %v365
  %v583 = vadd.f32 %v582, %v370
  %v584 = vadd.f32 %v583, %v375
  %v585 = vadd.f32 %v584, %v380
  %v586 = vadd.f32 %v585, %v385
  %v587 = vadd.f32 %v586, %v390
  %v588 = vadd.f32 %v587, %v395
  %v589 = vadd.f32 %v588, %v400
  %v590 = vadd.f32 %v589, %v405
  %v591 = vadd.f32 %v590, %v410
  %v592 = vadd.f32 %v591, %v415
  %v593 = vadd.f32 %v592, %v420
  %v594 = vadd.f32 %v593, %v425
  %v595 = vadd.f32 %v594, %v430
  %v596 = vadd.f32 %v595, %v435
  %v597 = vadd.f32 %v596, %v440
  %v598 = vadd.f32 %v597, %v445
  %v599 = vadd.f32 %v598, %v450
  %v600 = vadd.f32 %v599, %v455
  %v601 = vadd.f32 %v600, %v460
  %v602 = vadd.f32 %v601, %v465
  %v603 = vadd.f32 %v602, %v470
  %v604 = vadd.f32 %v603, %v475
  %v605 = vrot.slane %v604, 4
  %v606 = vadd.f32 %v604, %v605
  %v607 = vrot.slane %v606, 2
  %v608 = vadd.f32 %v606, %v607
  %v609 = vrot.slane %v608, 1
  %v610 = vadd.f32 %v608, %v609
  %v611 = vmul.f32 %v160, %v160
  %v612 = vmul.f32 %v165, %v165
  %v613 = vmul.f32 %v170, %v170
  %v614 = vmul.f32 %v175, %v175
  %v615 = vmul.f32 %v180, %v180
  %v616 = vmul.f32 %v185, %v185
  %v617 = vmul.f32 %v190, %v190
  %v618 = vmul.f32 %v195, %v195
  %v619 = vmul.f32 %v200, %v200
  %v620 = vmul.f32 %v205, %v205
  %v621 = vmul.f32 %v210, %v210
  %v622 = vmul.f32 %v215, %v215
  %v623 = vmul.f32 %v220, %v220
  %v624 = vmul.f32 %v225, %v225
  %v625 = vmul.f32 %v230, %v230
  %v626 = vmul.f32 %v235, %v235
  %v627 = vmul.f32 %v240, %v240
  %v628 = vmul.f32 %v245, %v245
  %v629 = vmul.f32 %v250, %v250
  %v630 = vmul.f32 %v255, %v255
  %v631 = vmul.f32 %v260, %v260
  %v632 = vmul.f32 %v265, %v265
  %v633 = vmul.f32 %v270, %v270
  %v634 = vmul.f32 %v275, %v275
  %v635 = vmul.f32 %v280, %v280
  %v636 = vmul.f32 %v285, %v285
  %v637 = vmul.f32 %v290, %v290
  %v638 = vmul.f32 %v295, %v295
  %v639 = vmul.f32 %v300, %v300
  %v640 = vmul.f32 %v305, %v305
  %v641 = vmul.f32 %v310, %v310
  %v642 = vmul.f32 %v315, %v315
  %v643 = vmul.f32 %v320, %v320
  %v644 = vmul.f32 %v325, %v325
  %v645 = vmul.f32 %v330, %v330
  %v646 = vmul.f32 %v335, %v335
  %v647 = vmul.f32 %v340, %v340
  %v648 = vmul.f32 %v345, %v345
  %v649 = vmul.f32 %v350, %v350
  %v650 = vmul.f32 %v355, %v355
  %v651 = vmul.f32 %v360, %v360
  %v652 = vmul.f32 %v365, %v365
  %v653 = vmul.f32 %v370, %v370
  %v654 = vmul.f32 %v375, %v375
  %v655 = vmul.f32 %v380, %v380
  %v656 = vmul.f32 %v385, %v385
  %v657 = vmul.f32 %v390, %v390
  %v658 = vmul.f32 %v395, %v395
  %v659 = vmul.f32 %v400, %v400
  %v660 = vmul.f32 %v405, %v405
  %v661 = vmul.f32 %v410, %v410
  %v662 = vmul.f32 %v415, %v415
  %v663 = vmul.f32 %v420, %v420
  %v664 = vmul.f32 %v425, %v425
  %v665 = vmul.f32 %v430, %v430
  %v666 = vmul.f32 %v435, %v435
  %v667 = vmul.f32 %v440, %v440
  %v668 = vmul.f32 %v445, %v445
  %v669 = vmul.f32 %v450, %v450
  %v670 = vmul.f32 %v455, %v455
  %v671 = vmul.f32 %v460, %v460
  %v672 = vmul.f32 %v465, %v465
  %v673 = vmul.f32 %v470, %v470
  %v674 = vmul.f32 %v475, %v475
  %v675 = vadd.f32 %v611, %v612
  %v676 = vadd.f32 %v675, %v613
  %v677 = vadd.f32 %v676, %v614
  %v678 = vadd.f32 %v677, %v615
  %v679 = vadd.f32 %v678, %v616
  %v680 = vadd.f32 %v679, %v617
  %v681 = vadd.f32 %v680, %v618
  %v682 = vadd.f32 %v681, %v619
  %v683 = vadd.f32 %v682, %v620
  %v684 = vadd.f32 %v683, %v621
  %v685 = vadd.f32 %v684, %v622
  %v686 = vadd.f32 %v685, %v623
  %v687 = vadd.f32 %v686, %v624
  %v688 = vadd.f32 %v687, %v625
  %v689 = vadd.f32 %v688, %v626
  %v690 = vadd.f32 %v689, %v627
  %v691 = vadd.f32 %v690, %v628
  %v692 = vadd.f32 %v691, %v629
  %v693 = vadd.f32 %v692, %v630
  %v694 = vadd.f32 %v693, %v631
  %v695 = vadd.f32 %v694, %v632
  %v696 = vadd.f32 %v695, %v633
  %v697 = vadd.f32 %v696, %v634
  %v698 = vadd.f32 %v697, %v635
  %v699 = vadd.f32 %v698, %v636
  %v700 = vadd.f32 %v699, %v637
  %v701 = vadd.f32 %v700, %v638
  %v702 = vadd.f32 %v701, %v639
  %v703 = vadd.f32 %v702, %v640
  %v704 = vadd.f32 %v703, %v641
  %v705 = vadd.f32 %v704, %v642
  %v706 = vadd.f32 %v705, %v643
  %v707 = vadd.f32 %v706, %v644
  %v708 = vadd.f32 %v707, %v645
  %v709 = vadd.f32 %v708, %v646
  %v710 = vadd.f32 %v709, %v647
  %v711 = vadd.f32 %v710, %v648
  %v712 = vadd.f32 %v711, %v649
  %v713 = vadd.f32 %v712, %v650
  %v714 = vadd.f32 %v713, %v651
  %v715 = vadd.f32 %v714, %v652
  %v716 = vadd.f32 %v715, %v653
  %v717 = vadd.f32 %v716, %v654
  %v718 = vadd.f32 %v717, %v655
  %v719 = vadd.f32 %v718, %v656
  %v720 = vadd.f32 %v719, %v657
  %v721 = vadd.f32 %v720, %v658
  %v722 = vadd.f32 %v721, %v659
  %v723 = vadd.f32 %v722, %v660
  %v724 = vadd.f32 %v723, %v661
  %v725 = vadd.f32 %v724, %v662
  %v726 = vadd.f32 %v725, %v663
  %v727 = vadd.f32 %v726, %v664
  %v728 = vadd.f32 %v727, %v665
  %v729 = vadd.f32 %v728, %v666
  %v730 = vadd.f32 %v729, %v667
  %v731 = vadd.f32 %v730, %v668
  %v732 = vadd.f32 %v731, %v669
  %v733 = vadd.f32 %v732, %v670
  %v734 = vadd.f32 %v733, %v671
  %v735 = vadd.f32 %v734, %v672
  %v736 = vadd.f32 %v735, %v673
  %v737 = vadd.f32 %v736, %v674
  %v738 = vrot.slane %v737, 4
  %v739 = vadd.f32 %v737, %v738
  %v740 = vrot.slane %v739, 2
  %v741 = vadd.f32 %v739, %v740
  %v742 = vrot.slane %v741, 1
  %v743 = vadd.f32 %v741, %v742
  %vm744 = vcmask 1040384
  %v745 = vsel %vm744, %v610, %v743
  %746 = vst [vmem:[%s3] sm:$0x3] %v745
  // Predicated region
  $region10: #{bottleneck_forward.4} parent=0 // pred_check
    _
  $region11: #{bottleneck_forward.4} parent=0 // pred_check_branch
    %748 = sbr.rel (0) target = $region13
  $region12: #{bottleneck_forward.4} parent=0 // pred_region
    _
  $region13: #{bottleneck_forward.4} parent=0 // pred_fallthru
    _
  // Predicated region
  $region14: #{bottleneck_forward.4} parent=0 // pred_check
    _
  $region15: #{bottleneck_forward.4} parent=0 // pred_check_branch
    %750 = sbr.rel (0) target = $region17
  $region16: #{bottleneck_forward.4} parent=0 // pred_region
    _
  $region17: #{bottleneck_forward.4} parent=0 // pred_fallthru
    _
  // Predicated region
  $region18: #{bottleneck_forward.4} parent=0 // pred_check
    _
  $region19: #{bottleneck_forward.4} parent=0 // pred_check_branch
    %752 = sbr.rel (0) target = $region21
  $region20: #{bottleneck_forward.4} parent=0 // pred_region
    _
  $region21: #{bottleneck_forward.4} parent=0 // pred_fallthru
    _
  // Predicated region
  $region22: #{bottleneck_forward.4} parent=0 // pred_check
    _
  $region23: #{bottleneck_forward.4} parent=0 // pred_check_branch
    %754 = sbr.rel (0) target = $region25
  $region24: #{bottleneck_forward.4} parent=0 // pred_region
    _
  $region25: #{bottleneck_forward.4} parent=0 // pred_fallthru
    _

// kernel: bottleneck_forward.6
$region0: #{bottleneck_forward.6}
  #allocation0 [shape = 'u32[]', space=smem, size = 0x4, offset = 0x4, fixed_abs, tag = 'smem constant byte address 0x4 - core index']
  #allocation1 [shape = 'u32[144,128]{1,0:T(1,128)}', space=vmem, size = 0x12000, scoped, tag = 'internal scratch']
  %s0 = inlined_call_operand.vmem [shape: f32[512,128], index: 0, kind: input, shape index: {}]
  %s1 = inlined_call_operand.vmem [shape: f32[1,128], index: 1, kind: input, shape index: {}]
  %s2 = inlined_call_operand.vmem [shape: f32[1,128], index: 2, kind: input, shape index: {}]
  %s3 = inlined_call_operand.vmem [shape: f32[128,128], index: 3, kind: input, shape index: {}]
  %s4 = inlined_call_operand.vmem [shape: f32[512,128], index: 4, kind: output, shape index: {0}]
  %s5 = inlined_call_operand.vmem [shape: f32[1,2,128], index: 5, kind: output, shape index: {1}]
  %6 = xla_tuple %s4, %s5
  %s7 = sld [smem:[#allocation0]]
  $region34: #{bottleneck_forward.6} parent=0
    _
  %s9 = ssub.s32 1, %s7
  %s10 = scalar_select 0, %s9, %s7
  // Predicated region
  $region2: #{bottleneck_forward.6} parent=0 // pred_check
    _
  $region3: #{bottleneck_forward.6} parent=0 // pred_check_branch
    %12 = sbr.rel (0) target = $region5
  $region4: #{bottleneck_forward.6} parent=0 // pred_region
    _
  $region5: #{bottleneck_forward.6} parent=0 // pred_fallthru
    _
  // Predicated region
  $region6: #{bottleneck_forward.6} parent=0 // pred_check
    _
  $region7: #{bottleneck_forward.6} parent=0 // pred_check_branch
    %14 = sbr.rel (0) target = $region9
  $region8: #{bottleneck_forward.6} parent=0 // pred_region
    _
  $region9: #{bottleneck_forward.6} parent=0 // pred_fallthru
    _
  // Predicated region
  $region10: #{bottleneck_forward.6} parent=0 // pred_check
    _
  $region11: #{bottleneck_forward.6} parent=0 // pred_check_branch
    %16 = sbr.rel (0) target = $region13
  $region12: #{bottleneck_forward.6} parent=0 // pred_region
    _
  $region13: #{bottleneck_forward.6} parent=0 // pred_fallthru
    _
  // Predicated region
  $region14: #{bottleneck_forward.6} parent=0 // pred_check
    _
  $region15: #{bottleneck_forward.6} parent=0 // pred_check_branch
    %18 = sbr.rel (0) target = $region17
  $region16: #{bottleneck_forward.6} parent=0 // pred_region
    _
  $region17: #{bottleneck_forward.6} parent=0 // pred_fallthru
    _
  %v19 = vld [vmem:[%s0] sm:$0xff]
  %v20 = vld [vmem:[%s0 + $0x8] sm:$0xff]
  %v21 = vld [vmem:[%s0 + $0x10] sm:$0xff]
  %v22 = vld [vmem:[%s0 + $0x18] sm:$0xff]
  %v23 = vld [vmem:[%s0 + $0x20] sm:$0xff]
  %v24 = vld [vmem:[%s0 + $0x28] sm:$0xff]
  %v25 = vld [vmem:[%s0 + $0x30] sm:$0xff]
  %v26 = vld [vmem:[%s0 + $0x38] sm:$0xff]
  %v27 = vld [vmem:[%s0 + $0x40] sm:$0xff]
  %v28 = vld [vmem:[%s0 + $0x48] sm:$0xff]
  %v29 = vld [vmem:[%s0 + $0x50] sm:$0xff]
  %v30 = vld [vmem:[%s0 + $0x58] sm:$0xff]
  %v31 = vld [vmem:[%s0 + $0x60] sm:$0xff]
  %v32 = vld [vmem:[%s0 + $0x68] sm:$0xff]
  %v33 = vld [vmem:[%s0 + $0x70] sm:$0xff]
  %v34 = vld [vmem:[%s0 + $0x78] sm:$0xff]
  %v35 = vld [vmem:[%s0 + $0x80] sm:$0xff]
  %v36 = vld [vmem:[%s0 + $0x88] sm:$0xff]
  %v37 = vld [vmem:[%s0 + $0x90] sm:$0xff]
  %v38 = vld [vmem:[%s0 + $0x98] sm:$0xff]
  %v39 = vld [vmem:[%s0 + $0xa0] sm:$0xff]
  %v40 = vld [vmem:[%s0 + $0xa8] sm:$0xff]
  %v41 = vld [vmem:[%s0 + $0xb0] sm:$0xff]
  %v42 = vld [vmem:[%s0 + $0xb8] sm:$0xff]
  %v43 = vld [vmem:[%s0 + $0xc0] sm:$0xff]
  %v44 = vld [vmem:[%s0 + $0xc8] sm:$0xff]
  %v45 = vld [vmem:[%s0 + $0xd0] sm:$0xff]
  %v46 = vld [vmem:[%s0 + $0xd8] sm:$0xff]
  %v47 = vld [vmem:[%s0 + $0xe0] sm:$0xff]
  %v48 = vld [vmem:[%s0 + $0xe8] sm:$0xff]
  %v49 = vld [vmem:[%s0 + $0xf0] sm:$0xff]
  %v50 = vld [vmem:[%s0 + $0xf8] sm:$0xff]
  %v51 = vld [vmem:[%s0 + $0x100] sm:$0xff]
  %v52 = vld [vmem:[%s0 + $0x108] sm:$0xff]
  %v53 = vld [vmem:[%s0 + $0x110] sm:$0xff]
  %v54 = vld [vmem:[%s0 + $0x118] sm:$0xff]
  %v55 = vld [vmem:[%s0 + $0x120] sm:$0xff]
  %v56 = vld [vmem:[%s0 + $0x128] sm:$0xff]
  %v57 = vld [vmem:[%s0 + $0x130] sm:$0xff]
  %v58 = vld [vmem:[%s0 + $0x138] sm:$0xff]
  %v59 = vld [vmem:[%s0 + $0x140] sm:$0xff]
  %v60 = vld [vmem:[%s0 + $0x148] sm:$0xff]
  %v61 = vld [vmem:[%s0 + $0x150] sm:$0xff]
  %v62 = vld [vmem:[%s0 + $0x158] sm:$0xff]
  %v63 = vld [vmem:[%s0 + $0x160] sm:$0xff]
  %v64 = vld [vmem:[%s0 + $0x168] sm:$0xff]
  %v65 = vld [vmem:[%s0 + $0x170] sm:$0xff]
  %v66 = vld [vmem:[%s0 + $0x178] sm:$0xff]
  %v67 = vld [vmem:[%s0 + $0x180] sm:$0xff]
  %v68 = vld [vmem:[%s0 + $0x188] sm:$0xff]
  %v69 = vld [vmem:[%s0 + $0x190] sm:$0xff]
  %v70 = vld [vmem:[%s0 + $0x198] sm:$0xff]
  %v71 = vld [vmem:[%s0 + $0x1a0] sm:$0xff]
  %v72 = vld [vmem:[%s0 + $0x1a8] sm:$0xff]
  %v73 = vld [vmem:[%s0 + $0x1b0] sm:$0xff]
  %v74 = vld [vmem:[%s0 + $0x1b8] sm:$0xff]
  %v75 = vld [vmem:[%s0 + $0x1c0] sm:$0xff]
  %v76 = vld [vmem:[%s0 + $0x1c8] sm:$0xff]
  %v77 = vld [vmem:[%s0 + $0x1d0] sm:$0xff]
  %v78 = vld [vmem:[%s0 + $0x1d8] sm:$0xff]
  %v79 = vld [vmem:[%s0 + $0x1e0] sm:$0xff]
  %v80 = vld [vmem:[%s0 + $0x1e8] sm:$0xff]
  %v81 = vld [vmem:[%s0 + $0x1f0] sm:$0xff]
  %v82 = vld [vmem:[%s0 + $0x1f8] sm:$0xff]
  %v83 = vld [vmem:[%s1] sm:$0x1]
  %v85 = vlaneseq
  %v86 = vshrl.u32 %v85, 7
  %v87 = vsub.s32 0, %v86
  %v88 = vrot.slane %v83, %v87
  %v90 = vmul.f32 %v19, %v88
  %v91 = vmul.f32 %v20, %v88
  %v92 = vmul.f32 %v21, %v88
  %v93 = vmul.f32 %v22, %v88
  %v94 = vmul.f32 %v23, %v88
  %v95 = vmul.f32 %v24, %v88
  %v96 = vmul.f32 %v25, %v88
  %v97 = vmul.f32 %v26, %v88
  %v98 = vmul.f32 %v27, %v88
  %v99 = vmul.f32 %v28, %v88
  %v100 = vmul.f32 %v29, %v88
  %v101 = vmul.f32 %v30, %v88
  %v102 = vmul.f32 %v31, %v88
  %v103 = vmul.f32 %v32, %v88
  %v104 = vmul.f32 %v33, %v88
  %v105 = vmul.f32 %v34, %v88
  %v106 = vmul.f32 %v35, %v88
  %v107 = vmul.f32 %v36, %v88
  %v108 = vmul.f32 %v37, %v88
  %v109 = vmul.f32 %v38, %v88
  %v110 = vmul.f32 %v39, %v88
  %v111 = vmul.f32 %v40, %v88
  %v112 = vmul.f32 %v41, %v88
  %v113 = vmul.f32 %v42, %v88
  %v114 = vmul.f32 %v43, %v88
  %v115 = vmul.f32 %v44, %v88
  %v116 = vmul.f32 %v45, %v88
  %v117 = vmul.f32 %v46, %v88
  %v118 = vmul.f32 %v47, %v88
  %v119 = vmul.f32 %v48, %v88
  %v120 = vmul.f32 %v49, %v88
  %v121 = vmul.f32 %v50, %v88
  %v122 = vmul.f32 %v51, %v88
  %v123 = vmul.f32 %v52, %v88
  %v124 = vmul.f32 %v53, %v88
  %v125 = vmul.f32 %v54, %v88
  %v126 = vmul.f32 %v55, %v88
  %v127 = vmul.f32 %v56, %v88
  %v128 = vmul.f32 %v57, %v88
  %v129 = vmul.f32 %v58, %v88
  %v130 = vmul.f32 %v59, %v88
  %v131 = vmul.f32 %v60, %v88
  %v132 = vmul.f32 %v61, %v88
  %v133 = vmul.f32 %v62, %v88
  %v134 = vmul.f32 %v63, %v88
  %v135 = vmul.f32 %v64, %v88
  %v136 = vmul.f32 %v65, %v88
  %v137 = vmul.f32 %v66, %v88
  %v138 = vmul.f32 %v67, %v88
  %v139 = vmul.f32 %v68, %v88
  %v140 = vmul.f32 %v69, %v88
  %v141 = vmul.f32 %v70, %v88
  %v142 = vmul.f32 %v71, %v88
  %v143 = vmul.f32 %v72, %v88
  %v144 = vmul.f32 %v73, %v88
  %v145 = vmul.f32 %v74, %v88
  %v146 = vmul.f32 %v75, %v88
  %v147 = vmul.f32 %v76, %v88
  %v148 = vmul.f32 %v77, %v88
  %v149 = vmul.f32 %v78, %v88
  %v150 = vmul.f32 %v79, %v88
  %v151 = vmul.f32 %v80, %v88
  %v152 = vmul.f32 %v81, %v88
  %v153 = vmul.f32 %v82, %v88
  %v154 = vld [vmem:[%s2] sm:$0x1]
  %v156 = vlaneseq
  %v157 = vshrl.u32 %v156, 7
  %v158 = vsub.s32 0, %v157
  %v159 = vrot.slane %v154, %v158
  %v161 = vadd.f32 %v90, %v159
  %v162 = vadd.f32 %v91, %v159
  %v163 = vadd.f32 %v92, %v159
  %v164 = vadd.f32 %v93, %v159
  %v165 = vadd.f32 %v94, %v159
  %v166 = vadd.f32 %v95, %v159
  %v167 = vadd.f32 %v96, %v159
  %v168 = vadd.f32 %v97, %v159
  %v169 = vadd.f32 %v98, %v159
  %v170 = vadd.f32 %v99, %v159
  %v171 = vadd.f32 %v100, %v159
  %v172 = vadd.f32 %v101, %v159
  %v173 = vadd.f32 %v102, %v159
  %v174 = vadd.f32 %v103, %v159
  %v175 = vadd.f32 %v104, %v159
  %v176 = vadd.f32 %v105, %v159
  %v177 = vadd.f32 %v106, %v159
  %v178 = vadd.f32 %v107, %v159
  %v179 = vadd.f32 %v108, %v159
  %v180 = vadd.f32 %v109, %v159
  %v181 = vadd.f32 %v110, %v159
  %v182 = vadd.f32 %v111, %v159
  %v183 = vadd.f32 %v112, %v159
  %v184 = vadd.f32 %v113, %v159
  %v185 = vadd.f32 %v114, %v159
  %v186 = vadd.f32 %v115, %v159
  %v187 = vadd.f32 %v116, %v159
  %v188 = vadd.f32 %v117, %v159
  %v189 = vadd.f32 %v118, %v159
  %v190 = vadd.f32 %v119, %v159
  %v191 = vadd.f32 %v120, %v159
  %v192 = vadd.f32 %v121, %v159
  %v193 = vadd.f32 %v122, %v159
  %v194 = vadd.f32 %v123, %v159
  %v195 = vadd.f32 %v124, %v159
  %v196 = vadd.f32 %v125, %v159
  %v197 = vadd.f32 %v126, %v159
  %v198 = vadd.f32 %v127, %v159
  %v199 = vadd.f32 %v128, %v159
  %v200 = vadd.f32 %v129, %v159
  %v201 = vadd.f32 %v130, %v159
  %v202 = vadd.f32 %v131, %v159
  %v203 = vadd.f32 %v132, %v159
  %v204 = vadd.f32 %v133, %v159
  %v205 = vadd.f32 %v134, %v159
  %v206 = vadd.f32 %v135, %v159
  %v207 = vadd.f32 %v136, %v159
  %v208 = vadd.f32 %v137, %v159
  %v209 = vadd.f32 %v138, %v159
  %v210 = vadd.f32 %v139, %v159
  %v211 = vadd.f32 %v140, %v159
  %v212 = vadd.f32 %v141, %v159
  %v213 = vadd.f32 %v142, %v159
  %v214 = vadd.f32 %v143, %v159
  %v215 = vadd.f32 %v144, %v159
  %v216 = vadd.f32 %v145, %v159
  %v217 = vadd.f32 %v146, %v159
  %v218 = vadd.f32 %v147, %v159
  %v219 = vadd.f32 %v148, %v159
  %v220 = vadd.f32 %v149, %v159
  %v221 = vadd.f32 %v150, %v159
  %v222 = vadd.f32 %v151, %v159
  %v223 = vadd.f32 %v152, %v159
  %v224 = vadd.f32 %v153, %v159
  %v225 = vmax.f32 %v161, 0.0
  %v226 = vmax.f32 %v162, 0.0
  %v227 = vmax.f32 %v163, 0.0
  %v228 = vmax.f32 %v164, 0.0
  %v229 = vmax.f32 %v165, 0.0
  %v230 = vmax.f32 %v166, 0.0
  %v231 = vmax.f32 %v167, 0.0
  %v232 = vmax.f32 %v168, 0.0
  %v233 = vmax.f32 %v169, 0.0
  %v234 = vmax.f32 %v170, 0.0
  %v235 = vmax.f32 %v171, 0.0
  %v236 = vmax.f32 %v172, 0.0
  %v237 = vmax.f32 %v173, 0.0
  %v238 = vmax.f32 %v174, 0.0
  %v239 = vmax.f32 %v175, 0.0
  %v240 = vmax.f32 %v176, 0.0
  %v241 = vmax.f32 %v177, 0.0
  %v242 = vmax.f32 %v178, 0.0
  %v243 = vmax.f32 %v179, 0.0
  %v244 = vmax.f32 %v180, 0.0
  %v245 = vmax.f32 %v181, 0.0
  %v246 = vmax.f32 %v182, 0.0
  %v247 = vmax.f32 %v183, 0.0
  %v248 = vmax.f32 %v184, 0.0
  %v249 = vmax.f32 %v185, 0.0
  %v250 = vmax.f32 %v186, 0.0
  %v251 = vmax.f32 %v187, 0.0
  %v252 = vmax.f32 %v188, 0.0
  %v253 = vmax.f32 %v189, 0.0
  %v254 = vmax.f32 %v190, 0.0
  %v255 = vmax.f32 %v191, 0.0
  %v256 = vmax.f32 %v192, 0.0
  %v257 = vmax.f32 %v193, 0.0
  %v258 = vmax.f32 %v194, 0.0
  %v259 = vmax.f32 %v195, 0.0
  %v260 = vmax.f32 %v196, 0.0
  %v261 = vmax.f32 %v197, 0.0
  %v262 = vmax.f32 %v198, 0.0
  %v263 = vmax.f32 %v199, 0.0
  %v264 = vmax.f32 %v200, 0.0
  %v265 = vmax.f32 %v201, 0.0
  %v266 = vmax.f32 %v202, 0.0
  %v267 = vmax.f32 %v203, 0.0
  %v268 = vmax.f32 %v204, 0.0
  %v269 = vmax.f32 %v205, 0.0
  %v270 = vmax.f32 %v206, 0.0
  %v271 = vmax.f32 %v207, 0.0
  %v272 = vmax.f32 %v208, 0.0
  %v273 = vmax.f32 %v209, 0.0
  %v274 = vmax.f32 %v210, 0.0
  %v275 = vmax.f32 %v211, 0.0
  %v276 = vmax.f32 %v212, 0.0
  %v277 = vmax.f32 %v213, 0.0
  %v278 = vmax.f32 %v214, 0.0
  %v279 = vmax.f32 %v215, 0.0
  %v280 = vmax.f32 %v216, 0.0
  %v281 = vmax.f32 %v217, 0.0
  %v282 = vmax.f32 %v218, 0.0
  %v283 = vmax.f32 %v219, 0.0
  %v284 = vmax.f32 %v220, 0.0
  %v285 = vmax.f32 %v221, 0.0
  %v286 = vmax.f32 %v222, 0.0
  %v287 = vmax.f32 %v223, 0.0
  %v288 = vmax.f32 %v224, 0.0
  %v289 = vld [vmem:[%s3] sm:$0xff]
  %v290 = vld [vmem:[%s3 + $0x8] sm:$0xff]
  %v291 = vld [vmem:[%s3 + $0x10] sm:$0xff]
  %v292 = vld [vmem:[%s3 + $0x18] sm:$0xff]
  %v293 = vld [vmem:[%s3 + $0x20] sm:$0xff]
  %v294 = vld [vmem:[%s3 + $0x28] sm:$0xff]
  %v295 = vld [vmem:[%s3 + $0x30] sm:$0xff]
  %v296 = vld [vmem:[%s3 + $0x38] sm:$0xff]
  %v297 = vld [vmem:[%s3 + $0x40] sm:$0xff]
  %v298 = vld [vmem:[%s3 + $0x48] sm:$0xff]
  %v299 = vld [vmem:[%s3 + $0x50] sm:$0xff]
  %v300 = vld [vmem:[%s3 + $0x58] sm:$0xff]
  %v301 = vld [vmem:[%s3 + $0x60] sm:$0xff]
  %v302 = vld [vmem:[%s3 + $0x68] sm:$0xff]
  %v303 = vld [vmem:[%s3 + $0x70] sm:$0xff]
  %v304 = vld [vmem:[%s3 + $0x78] sm:$0xff]
  %305 = vmatprep.subr.mxu0 0.0
  %306 = vmatpush1.msra.mxu0 %v304
  %307 = vmatprep.subr.mxu0 0.0
  %308 = vmatpush1.msra.mxu0 %v303
  %309 = vmatprep.subr.mxu0 0.0
  %310 = vmatpush1.msra.mxu0 %v302
  %311 = vmatprep.subr.mxu0 0.0
  %312 = vmatpush1.msra.mxu0 %v301
  %313 = vmatprep.subr.mxu0 0.0
  %314 = vmatpush1.msra.mxu0 %v300
  %315 = vmatprep.subr.mxu0 0.0
  %316 = vmatpush1.msra.mxu0 %v299
  %317 = vmatprep.subr.mxu0 0.0
  %318 = vmatpush1.msra.mxu0 %v298
  %319 = vmatprep.subr.mxu0 0.0
  %320 = vmatpush1.msra.mxu0 %v297
  %321 = vmatprep.subr.mxu0 0.0
  %322 = vmatpush1.msra.mxu0 %v296
  %323 = vmatprep.subr.mxu0 0.0
  %324 = vmatpush1.msra.mxu0 %v295
  %325 = vmatprep.subr.mxu0 0.0
  %326 = vmatpush1.msra.mxu0 %v294
  %327 = vmatprep.subr.mxu0 0.0
  %328 = vmatpush1.msra.mxu0 %v293
  %329 = vmatprep.subr.mxu0 0.0
  %330 = vmatpush1.msra.mxu0 %v292
  %331 = vmatprep.subr.mxu0 0.0
  %332 = vmatpush1.msra.mxu0 %v291
  %333 = vmatprep.subr.mxu0 0.0
  %334 = vmatpush1.msra.mxu0 %v290
  %335 = vmatprep.subr.mxu0 0.0
  %336 = vmatpush1.msra.mxu0 %v289
  %337 = vmatprep.subr.mxu0 0.0
  %338 = vmatpush2.msra.mxu0 0.0
  %339 = vmatprep.subr.mxu0 0.0
  %340 = vmatpush2.msra.mxu0 0.0
  %341 = vmatprep.subr.mxu0 0.0
  %342 = vmatpush2.msra.mxu0 0.0
  %343 = vmatprep.subr.mxu0 0.0
  %344 = vmatpush2.msra.mxu0 0.0
  %345 = vmatprep.subr.mxu0 0.0
  %346 = vmatpush2.msra.mxu0 0.0
  %347 = vmatprep.subr.mxu0 0.0
  %348 = vmatpush2.msra.mxu0 0.0
  %349 = vmatprep.subr.mxu0 0.0
  %350 = vmatpush2.msra.mxu0 0.0
  %351 = vmatprep.subr.mxu0 0.0
  %352 = vmatpush2.msra.mxu0 0.0
  %353 = vmatprep.subr.mxu0 0.0
  %354 = vmatpush2.msra.mxu0 0.0
  %355 = vmatprep.subr.mxu0 0.0
  %356 = vmatpush2.msra.mxu0 0.0
  %357 = vmatprep.subr.mxu0 0.0
  %358 = vmatpush2.msra.mxu0 0.0
  %359 = vmatprep.subr.mxu0 0.0
  %360 = vmatpush2.msra.mxu0 0.0
  %361 = vmatprep.subr.mxu0 0.0
  %362 = vmatpush2.msra.mxu0 0.0
  %363 = vmatprep.subr.mxu0 0.0
  %364 = vmatpush2.msra.mxu0 0.0
  %365 = vmatprep.subr.mxu0 0.0
  %366 = vmatpush2.msra.mxu0 0.0
  %367 = vmatprep.subr.mxu0 0.0
  %368 = vmatpush2.msra.mxu0 0.0
  %369 = vmatprep.mubr.f32.mxu0 0.0
  %370 = vmatmul.mubr.f32.gmra.mxu0 %v225
  %v371 = vpop.f32.mrf.mxu0
  %v372 = vadd.f32 0.0, %v371
  %v373 = vpop.f32.mrf.mxu0
  %374 = vmatprep.mubr.f32.mxu0 0.0
  %375 = vmatmul.mubr.f32.gmra.mxu0 %v226
  %v376 = vpop.f32.mrf.mxu0
  %v377 = vadd.f32 0.0, %v376
  %v378 = vpop.f32.mrf.mxu0
  %379 = vmatprep.mubr.f32.mxu0 0.0
  %380 = vmatmul.mubr.f32.gmra.mxu0 %v227
  %v381 = vpop.f32.mrf.mxu0
  %v382 = vadd.f32 0.0, %v381
  %v383 = vpop.f32.mrf.mxu0
  %384 = vmatprep.mubr.f32.mxu0 0.0
  %385 = vmatmul.mubr.f32.gmra.mxu0 %v228
  %v386 = vpop.f32.mrf.mxu0
  %v387 = vadd.f32 0.0, %v386
  %v388 = vpop.f32.mrf.mxu0
  %389 = vmatprep.mubr.f32.mxu0 0.0
  %390 = vmatmul.mubr.f32.gmra.mxu0 %v229
  %v391 = vpop.f32.mrf.mxu0
  %v392 = vadd.f32 0.0, %v391
  %v393 = vpop.f32.mrf.mxu0
  %394 = vmatprep.mubr.f32.mxu0 0.0
  %395 = vmatmul.mubr.f32.gmra.mxu0 %v230
  %v396 = vpop.f32.mrf.mxu0
  %v397 = vadd.f32 0.0, %v396
  %v398 = vpop.f32.mrf.mxu0
  %399 = vmatprep.mubr.f32.mxu0 0.0
  %400 = vmatmul.mubr.f32.gmra.mxu0 %v231
  %v401 = vpop.f32.mrf.mxu0
  %v402 = vadd.f32 0.0, %v401
  %v403 = vpop.f32.mrf.mxu0
  %404 = vmatprep.mubr.f32.mxu0 0.0
  %405 = vmatmul.mubr.f32.gmra.mxu0 %v232
  %v406 = vpop.f32.mrf.mxu0
  %v407 = vadd.f32 0.0, %v406
  %v408 = vpop.f32.mrf.mxu0
  %409 = vmatprep.mubr.f32.mxu0 0.0
  %410 = vmatmul.mubr.f32.gmra.mxu0 %v233
  %v411 = vpop.f32.mrf.mxu0
  %v412 = vadd.f32 0.0, %v411
  %v413 = vpop.f32.mrf.mxu0
  %414 = vmatprep.mubr.f32.mxu0 0.0
  %415 = vmatmul.mubr.f32.gmra.mxu0 %v234
  %v416 = vpop.f32.mrf.mxu0
  %v417 = vadd.f32 0.0, %v416
  %v418 = vpop.f32.mrf.mxu0
  %419 = vmatprep.mubr.f32.mxu0 0.0
  %420 = vmatmul.mubr.f32.gmra.mxu0 %v235
  %v421 = vpop.f32.mrf.mxu0
  %v422 = vadd.f32 0.0, %v421
  %v423 = vpop.f32.mrf.mxu0
  %424 = vmatprep.mubr.f32.mxu0 0.0
  %425 = vmatmul.mubr.f32.gmra.mxu0 %v236
  %v426 = vpop.f32.mrf.mxu0
  %v427 = vadd.f32 0.0, %v426
  %v428 = vpop.f32.mrf.mxu0
  %429 = vmatprep.mubr.f32.mxu0 0.0
  %430 = vmatmul.mubr.f32.gmra.mxu0 %v237
  %v431 = vpop.f32.mrf.mxu0
  %v432 = vadd.f32 0.0, %v431
  %v433 = vpop.f32.mrf.mxu0
  %434 = vmatprep.mubr.f32.mxu0 0.0
  %435 = vmatmul.mubr.f32.gmra.mxu0 %v238
  %v436 = vpop.f32.mrf.mxu0
  %v437 = vadd.f32 0.0, %v436
  %v438 = vpop.f32.mrf.mxu0
  %439 = vmatprep.mubr.f32.mxu0 0.0
  %440 = vmatmul.mubr.f32.gmra.mxu0 %v239
  %v441 = vpop.f32.mrf.mxu0
  %v442 = vadd.f32 0.0, %v441
  %v443 = vpop.f32.mrf.mxu0
  %444 = vmatprep.mubr.f32.mxu0 0.0
  %445 = vmatmul.mubr.f32.gmra.mxu0 %v240
  %v446 = vpop.f32.mrf.mxu0
  %v447 = vadd.f32 0.0, %v446
  %v448 = vpop.f32.mrf.mxu0
  %449 = vmatprep.mubr.f32.mxu0 0.0
  %450 = vmatmul.mubr.f32.gmra.mxu0 %v241
  %v451 = vpop.f32.mrf.mxu0
  %v452 = vadd.f32 0.0, %v451
  %v453 = vpop.f32.mrf.mxu0
  %454 = vmatprep.mubr.f32.mxu0 0.0
  %455 = vmatmul.mubr.f32.gmra.mxu0 %v242
  %v456 = vpop.f32.mrf.mxu0
  %v457 = vadd.f32 0.0, %v456
  %v458 = vpop.f32.mrf.mxu0
  %459 = vmatprep.mubr.f32.mxu0 0.0
  %460 = vmatmul.mubr.f32.gmra.mxu0 %v243
  %v461 = vpop.f32.mrf.mxu0
  %v462 = vadd.f32 0.0, %v461
  %v463 = vpop.f32.mrf.mxu0
  %464 = vmatprep.mubr.f32.mxu0 0.0
  %465 = vmatmul.mubr.f32.gmra.mxu0 %v244
  %v466 = vpop.f32.mrf.mxu0
  %v467 = vadd.f32 0.0, %v466
  %v468 = vpop.f32.mrf.mxu0
  %469 = vmatprep.mubr.f32.mxu0 0.0
  %470 = vmatmul.mubr.f32.gmra.mxu0 %v245
  %v471 = vpop.f32.mrf.mxu0
  %v472 = vadd.f32 0.0, %v471
  %v473 = vpop.f32.mrf.mxu0
  %474 = vmatprep.mubr.f32.mxu0 0.0
  %475 = vmatmul.mubr.f32.gmra.mxu0 %v246
  %v476 = vpop.f32.mrf.mxu0
  %v477 = vadd.f32 0.0, %v476
  %v478 = vpop.f32.mrf.mxu0
  %479 = vmatprep.mubr.f32.mxu0 0.0
  %480 = vmatmul.mubr.f32.gmra.mxu0 %v247
  %v481 = vpop.f32.mrf.mxu0
  %v482 = vadd.f32 0.0, %v481
  %v483 = vpop.f32.mrf.mxu0
  %484 = vmatprep.mubr.f32.mxu0 0.0
  %485 = vmatmul.mubr.f32.gmra.mxu0 %v248
  %v486 = vpop.f32.mrf.mxu0
  %v487 = vadd.f32 0.0, %v486
  %v488 = vpop.f32.mrf.mxu0
  %489 = vmatprep.mubr.f32.mxu0 0.0
  %490 = vmatmul.mubr.f32.gmra.mxu0 %v249
  %v491 = vpop.f32.mrf.mxu0
  %v492 = vadd.f32 0.0, %v491
  %v493 = vpop.f32.mrf.mxu0
  %494 = vmatprep.mubr.f32.mxu0 0.0
  %495 = vmatmul.mubr.f32.gmra.mxu0 %v250
  %v496 = vpop.f32.mrf.mxu0
  %v497 = vadd.f32 0.0, %v496
  %v498 = vpop.f32.mrf.mxu0
  %499 = vmatprep.mubr.f32.mxu0 0.0
  %500 = vmatmul.mubr.f32.gmra.mxu0 %v251
  %v501 = vpop.f32.mrf.mxu0
  %v502 = vadd.f32 0.0, %v501
  %v503 = vpop.f32.mrf.mxu0
  %504 = vmatprep.mubr.f32.mxu0 0.0
  %505 = vmatmul.mubr.f32.gmra.mxu0 %v252
  %v506 = vpop.f32.mrf.mxu0
  %v507 = vadd.f32 0.0, %v506
  %v508 = vpop.f32.mrf.mxu0
  %509 = vmatprep.mubr.f32.mxu0 0.0
  %510 = vmatmul.mubr.f32.gmra.mxu0 %v253
  %v511 = vpop.f32.mrf.mxu0
  %v512 = vadd.f32 0.0, %v511
  %v513 = vpop.f32.mrf.mxu0
  %514 = vmatprep.mubr.f32.mxu0 0.0
  %515 = vmatmul.mubr.f32.gmra.mxu0 %v254
  %v516 = vpop.f32.mrf.mxu0
  %v517 = vadd.f32 0.0, %v516
  %v518 = vpop.f32.mrf.mxu0
  %519 = vmatprep.mubr.f32.mxu0 0.0
  %520 = vmatmul.mubr.f32.gmra.mxu0 %v255
  %v521 = vpop.f32.mrf.mxu0
  %v522 = vadd.f32 0.0, %v521
  %v523 = vpop.f32.mrf.mxu0
  %524 = vmatprep.mubr.f32.mxu0 0.0
  %525 = vmatmul.mubr.f32.gmra.mxu0 %v256
  %v526 = vpop.f32.mrf.mxu0
  %v527 = vadd.f32 0.0, %v526
  %v528 = vpop.f32.mrf.mxu0
  %529 = vmatprep.mubr.f32.mxu0 0.0
  %530 = vmatmul.mubr.f32.gmra.mxu0 %v257
  %v531 = vpop.f32.mrf.mxu0
  %v532 = vadd.f32 0.0, %v531
  %v533 = vpop.f32.mrf.mxu0
  %534 = vmatprep.mubr.f32.mxu0 0.0
  %535 = vmatmul.mubr.f32.gmra.mxu0 %v258
  %v536 = vpop.f32.mrf.mxu0
  %v537 = vadd.f32 0.0, %v536
  %v538 = vpop.f32.mrf.mxu0
  %539 = vmatprep.mubr.f32.mxu0 0.0
  %540 = vmatmul.mubr.f32.gmra.mxu0 %v259
  %v541 = vpop.f32.mrf.mxu0
  %v542 = vadd.f32 0.0, %v541
  %v543 = vpop.f32.mrf.mxu0
  %544 = vmatprep.mubr.f32.mxu0 0.0
  %545 = vmatmul.mubr.f32.gmra.mxu0 %v260
  %v546 = vpop.f32.mrf.mxu0
  %v547 = vadd.f32 0.0, %v546
  %v548 = vpop.f32.mrf.mxu0
  %549 = vmatprep.mubr.f32.mxu0 0.0
  %550 = vmatmul.mubr.f32.gmra.mxu0 %v261
  %v551 = vpop.f32.mrf.mxu0
  %v552 = vadd.f32 0.0, %v551
  %v553 = vpop.f32.mrf.mxu0
  %554 = vmatprep.mubr.f32.mxu0 0.0
  %555 = vmatmul.mubr.f32.gmra.mxu0 %v262
  %v556 = vpop.f32.mrf.mxu0
  %v557 = vadd.f32 0.0, %v556
  %v558 = vpop.f32.mrf.mxu0
  %559 = vmatprep.mubr.f32.mxu0 0.0
  %560 = vmatmul.mubr.f32.gmra.mxu0 %v263
  %v561 = vpop.f32.mrf.mxu0
  %v562 = vadd.f32 0.0, %v561
  %v563 = vpop.f32.mrf.mxu0
  %564 = vmatprep.mubr.f32.mxu0 0.0
  %565 = vmatmul.mubr.f32.gmra.mxu0 %v264
  %v566 = vpop.f32.mrf.mxu0
  %v567 = vadd.f32 0.0, %v566
  %v568 = vpop.f32.mrf.mxu0
  %569 = vmatprep.mubr.f32.mxu0 0.0
  %570 = vmatmul.mubr.f32.gmra.mxu0 %v265
  %v571 = vpop.f32.mrf.mxu0
  %v572 = vadd.f32 0.0, %v571
  %v573 = vpop.f32.mrf.mxu0
  %574 = vmatprep.mubr.f32.mxu0 0.0
  %575 = vmatmul.mubr.f32.gmra.mxu0 %v266
  %v576 = vpop.f32.mrf.mxu0
  %v577 = vadd.f32 0.0, %v576
  %v578 = vpop.f32.mrf.mxu0
  %579 = vmatprep.mubr.f32.mxu0 0.0
  %580 = vmatmul.mubr.f32.gmra.mxu0 %v267
  %v581 = vpop.f32.mrf.mxu0
  %v582 = vadd.f32 0.0, %v581
  %v583 = vpop.f32.mrf.mxu0
  %584 = vmatprep.mubr.f32.mxu0 0.0
  %585 = vmatmul.mubr.f32.gmra.mxu0 %v268
  %v586 = vpop.f32.mrf.mxu0
  %v587 = vadd.f32 0.0, %v586
  %v588 = vpop.f32.mrf.mxu0
  %589 = vmatprep.mubr.f32.mxu0 0.0
  %590 = vmatmul.mubr.f32.gmra.mxu0 %v269
  %v591 = vpop.f32.mrf.mxu0
  %v592 = vadd.f32 0.0, %v591
  %v593 = vpop.f32.mrf.mxu0
  %594 = vmatprep.mubr.f32.mxu0 0.0
  %595 = vmatmul.mubr.f32.gmra.mxu0 %v270
  %v596 = vpop.f32.mrf.mxu0
  %v597 = vadd.f32 0.0, %v596
  %v598 = vpop.f32.mrf.mxu0
  %599 = vmatprep.mubr.f32.mxu0 0.0
  %600 = vmatmul.mubr.f32.gmra.mxu0 %v271
  %v601 = vpop.f32.mrf.mxu0
  %v602 = vadd.f32 0.0, %v601
  %v603 = vpop.f32.mrf.mxu0
  %604 = vmatprep.mubr.f32.mxu0 0.0
  %605 = vmatmul.mubr.f32.gmra.mxu0 %v272
  %v606 = vpop.f32.mrf.mxu0
  %v607 = vadd.f32 0.0, %v606
  %v608 = vpop.f32.mrf.mxu0
  %609 = vmatprep.mubr.f32.mxu0 0.0
  %610 = vmatmul.mubr.f32.gmra.mxu0 %v273
  %v611 = vpop.f32.mrf.mxu0
  %v612 = vadd.f32 0.0, %v611
  %v613 = vpop.f32.mrf.mxu0
  %614 = vmatprep.mubr.f32.mxu0 0.0
  %615 = vmatmul.mubr.f32.gmra.mxu0 %v274
  %v616 = vpop.f32.mrf.mxu0
  %v617 = vadd.f32 0.0, %v616
  %v618 = vpop.f32.mrf.mxu0
  %619 = vmatprep.mubr.f32.mxu0 0.0
  %620 = vmatmul.mubr.f32.gmra.mxu0 %v275
  %v621 = vpop.f32.mrf.mxu0
  %v622 = vadd.f32 0.0, %v621
  %v623 = vpop.f32.mrf.mxu0
  %624 = vmatprep.mubr.f32.mxu0 0.0
  %625 = vmatmul.mubr.f32.gmra.mxu0 %v276
  %v626 = vpop.f32.mrf.mxu0
  %v627 = vadd.f32 0.0, %v626
  %v628 = vpop.f32.mrf.mxu0
  %629 = vmatprep.mubr.f32.mxu0 0.0
  %630 = vmatmul.mubr.f32.gmra.mxu0 %v277
  %v631 = vpop.f32.mrf.mxu0
  %v632 = vadd.f32 0.0, %v631
  %v633 = vpop.f32.mrf.mxu0
  %634 = vmatprep.mubr.f32.mxu0 0.0
  %635 = vmatmul.mubr.f32.gmra.mxu0 %v278
  %v636 = vpop.f32.mrf.mxu0
  %v637 = vadd.f32 0.0, %v636
  %v638 = vpop.f32.mrf.mxu0
  %639 = vmatprep.mubr.f32.mxu0 0.0
  %640 = vmatmul.mubr.f32.gmra.mxu0 %v279
  %v641 = vpop.f32.mrf.mxu0
  %v642 = vadd.f32 0.0, %v641
  %v643 = vpop.f32.mrf.mxu0
  %644 = vmatprep.mubr.f32.mxu0 0.0
  %645 = vmatmul.mubr.f32.gmra.mxu0 %v280
  %v646 = vpop.f32.mrf.mxu0
  %v647 = vadd.f32 0.0, %v646
  %v648 = vpop.f32.mrf.mxu0
  %649 = vmatprep.mubr.f32.mxu0 0.0
  %650 = vmatmul.mubr.f32.gmra.mxu0 %v281
  %v651 = vpop.f32.mrf.mxu0
  %v652 = vadd.f32 0.0, %v651
  %v653 = vpop.f32.mrf.mxu0
  %654 = vmatprep.mubr.f32.mxu0 0.0
  %655 = vmatmul.mubr.f32.gmra.mxu0 %v282
  %v656 = vpop.f32.mrf.mxu0
  %v657 = vadd.f32 0.0, %v656
  %v658 = vpop.f32.mrf.mxu0
  %659 = vmatprep.mubr.f32.mxu0 0.0
  %660 = vmatmul.mubr.f32.gmra.mxu0 %v283
  %v661 = vpop.f32.mrf.mxu0
  %v662 = vadd.f32 0.0, %v661
  %v663 = vpop.f32.mrf.mxu0
  %664 = vmatprep.mubr.f32.mxu0 0.0
  %665 = vmatmul.mubr.f32.gmra.mxu0 %v284
  %v666 = vpop.f32.mrf.mxu0
  %v667 = vadd.f32 0.0, %v666
  %v668 = vpop.f32.mrf.mxu0
  %669 = vmatprep.mubr.f32.mxu0 0.0
  %670 = vmatmul.mubr.f32.gmra.mxu0 %v285
  %v671 = vpop.f32.mrf.mxu0
  %v672 = vadd.f32 0.0, %v671
  %v673 = vpop.f32.mrf.mxu0
  %674 = vmatprep.mubr.f32.mxu0 0.0
  %675 = vmatmul.mubr.f32.gmra.mxu0 %v286
  %v676 = vpop.f32.mrf.mxu0
  %v677 = vadd.f32 0.0, %v676
  %v678 = vpop.f32.mrf.mxu0
  %679 = vmatprep.mubr.f32.mxu0 0.0
  %680 = vmatmul.mubr.f32.gmra.mxu0 %v287
  %v681 = vpop.f32.mrf.mxu0
  %v682 = vadd.f32 0.0, %v681
  %v683 = vpop.f32.mrf.mxu0
  %684 = vmatprep.mubr.f32.mxu0 0.0
  %685 = vmatmul.mubr.f32.gmra.mxu0 %v288
  %v686 = vpop.f32.mrf.mxu0
  %v687 = vadd.f32 0.0, %v686
  %v688 = vpop.f32.mrf.mxu0
  %689 = vdwg.mxu0
  %690 = vst [vmem:[%s4] sm:$0xff] %v372
  %691 = vst [vmem:[%s4 + $0x8] sm:$0xff] %v377
  %692 = vst [vmem:[%s4 + $0x10] sm:$0xff] %v382
  %693 = vst [vmem:[%s4 + $0x18] sm:$0xff] %v387
  %694 = vst [vmem:[%s4 + $0x20] sm:$0xff] %v392
  %695 = vst [vmem:[%s4 + $0x28] sm:$0xff] %v397
  %696 = vst [vmem:[%s4 + $0x30] sm:$0xff] %v402
  %697 = vst [vmem:[%s4 + $0x38] sm:$0xff] %v407
  %698 = vst [vmem:[%s4 + $0x40] sm:$0xff] %v412
  %699 = vst [vmem:[%s4 + $0x48] sm:$0xff] %v417
  %700 = vst [vmem:[%s4 + $0x50] sm:$0xff] %v422
  %701 = vst [vmem:[%s4 + $0x58] sm:$0xff] %v427
  %702 = vst [vmem:[%s4 + $0x60] sm:$0xff] %v432
  %703 = vst [vmem:[%s4 + $0x68] sm:$0xff] %v437
  %704 = vst [vmem:[%s4 + $0x70] sm:$0xff] %v442
  %705 = vst [vmem:[%s4 + $0x78] sm:$0xff] %v447
  %706 = vst [vmem:[%s4 + $0x80] sm:$0xff] %v452
  %707 = vst [vmem:[%s4 + $0x88] sm:$0xff] %v457
  %708 = vst [vmem:[%s4 + $0x90] sm:$0xff] %v462
  %709 = vst [vmem:[%s4 + $0x98] sm:$0xff] %v467
  %710 = vst [vmem:[%s4 + $0xa0] sm:$0xff] %v472
  %711 = vst [vmem:[%s4 + $0xa8] sm:$0xff] %v477
  %712 = vst [vmem:[%s4 + $0xb0] sm:$0xff] %v482
  %713 = vst [vmem:[%s4 + $0xb8] sm:$0xff] %v487
  %714 = vst [vmem:[%s4 + $0xc0] sm:$0xff] %v492
  %715 = vst [vmem:[%s4 + $0xc8] sm:$0xff] %v497
  %716 = vst [vmem:[%s4 + $0xd0] sm:$0xff] %v502
  %717 = vst [vmem:[%s4 + $0xd8] sm:$0xff] %v507
  %718 = vst [vmem:[%s4 + $0xe0] sm:$0xff] %v512
  %719 = vst [vmem:[%s4 + $0xe8] sm:$0xff] %v517
  %720 = vst [vmem:[%s4 + $0xf0] sm:$0xff] %v522
  %721 = vst [vmem:[%s4 + $0xf8] sm:$0xff] %v527
  %722 = vst [vmem:[%s4 + $0x100] sm:$0xff] %v532
  %723 = vst [vmem:[%s4 + $0x108] sm:$0xff] %v537
  %724 = vst [vmem:[%s4 + $0x110] sm:$0xff] %v542
  %725 = vst [vmem:[%s4 + $0x118] sm:$0xff] %v547
  %726 = vst [vmem:[%s4 + $0x120] sm:$0xff] %v552
  %727 = vst [vmem:[%s4 + $0x128] sm:$0xff] %v557
  %728 = vst [vmem:[%s4 + $0x130] sm:$0xff] %v562
  %729 = vst [vmem:[%s4 + $0x138] sm:$0xff] %v567
  %730 = vst [vmem:[%s4 + $0x140] sm:$0xff] %v572
  %731 = vst [vmem:[%s4 + $0x148] sm:$0xff] %v577
  %732 = vst [vmem:[%s4 + $0x150] sm:$0xff] %v582
  %733 = vst [vmem:[%s4 + $0x158] sm:$0xff] %v587
  %734 = vst [vmem:[%s4 + $0x160] sm:$0xff] %v592
  %735 = vst [vmem:[%s4 + $0x168] sm:$0xff] %v597
  %736 = vst [vmem:[%s4 + $0x170] sm:$0xff] %v602
  %737 = vst [vmem:[%s4 + $0x178] sm:$0xff] %v607
  %738 = vst [vmem:[%s4 + $0x180] sm:$0xff] %v612
  %739 = vst [vmem:[%s4 + $0x188] sm:$0xff] %v617
  %740 = vst [vmem:[%s4 + $0x190] sm:$0xff] %v622
  %741 = vst [vmem:[%s4 + $0x198] sm:$0xff] %v627
  %742 = vst [vmem:[%s4 + $0x1a0] sm:$0xff] %v632
  %743 = vst [vmem:[%s4 + $0x1a8] sm:$0xff] %v637
  %744 = vst [vmem:[%s4 + $0x1b0] sm:$0xff] %v642
  %745 = vst [vmem:[%s4 + $0x1b8] sm:$0xff] %v647
  %746 = vst [vmem:[%s4 + $0x1c0] sm:$0xff] %v652
  %747 = vst [vmem:[%s4 + $0x1c8] sm:$0xff] %v657
  %748 = vst [vmem:[%s4 + $0x1d0] sm:$0xff] %v662
  %749 = vst [vmem:[%s4 + $0x1d8] sm:$0xff] %v667
  %750 = vst [vmem:[%s4 + $0x1e0] sm:$0xff] %v672
  %751 = vst [vmem:[%s4 + $0x1e8] sm:$0xff] %v677
  %752 = vst [vmem:[%s4 + $0x1f0] sm:$0xff] %v682
  %753 = vst [vmem:[%s4 + $0x1f8] sm:$0xff] %v687
  %v754 = vadd.f32 %v372, %v377
  %v755 = vadd.f32 %v754, %v382
  %v756 = vadd.f32 %v755, %v387
  %v757 = vadd.f32 %v756, %v392
  %v758 = vadd.f32 %v757, %v397
  %v759 = vadd.f32 %v758, %v402
  %v760 = vadd.f32 %v759, %v407
  %v761 = vadd.f32 %v760, %v412
  %v762 = vadd.f32 %v761, %v417
  %v763 = vadd.f32 %v762, %v422
  %v764 = vadd.f32 %v763, %v427
  %v765 = vadd.f32 %v764, %v432
  %v766 = vadd.f32 %v765, %v437
  %v767 = vadd.f32 %v766, %v442
  %v768 = vadd.f32 %v767, %v447
  %v769 = vadd.f32 %v768, %v452
  %v770 = vadd.f32 %v769, %v457
  %v771 = vadd.f32 %v770, %v462
  %v772 = vadd.f32 %v771, %v467
  %v773 = vadd.f32 %v772, %v472
  %v774 = vadd.f32 %v773, %v477
  %v775 = vadd.f32 %v774, %v482
  %v776 = vadd.f32 %v775, %v487
  %v777 = vadd.f32 %v776, %v492
  %v778 = vadd.f32 %v777, %v497
  %v779 = vadd.f32 %v778, %v502
  %v780 = vadd.f32 %v779, %v507
  %v781 = vadd.f32 %v780, %v512
  %v782 = vadd.f32 %v781, %v517
  %v783 = vadd.f32 %v782, %v522
  %v784 = vadd.f32 %v783, %v527
  %v785 = vadd.f32 %v784, %v532
  %v786 = vadd.f32 %v785, %v537
  %v787 = vadd.f32 %v786, %v542
  %v788 = vadd.f32 %v787, %v547
  %v789 = vadd.f32 %v788, %v552
  %v790 = vadd.f32 %v789, %v557
  %v791 = vadd.f32 %v790, %v562
  %v792 = vadd.f32 %v791, %v567
  %v793 = vadd.f32 %v792, %v572
  %v794 = vadd.f32 %v793, %v577
  %v795 = vadd.f32 %v794, %v582
  %v796 = vadd.f32 %v795, %v587
  %v797 = vadd.f32 %v796, %v592
  %v798 = vadd.f32 %v797, %v597
  %v799 = vadd.f32 %v798, %v602
  %v800 = vadd.f32 %v799, %v607
  %v801 = vadd.f32 %v800, %v612
  %v802 = vadd.f32 %v801, %v617
  %v803 = vadd.f32 %v802, %v622
  %v804 = vadd.f32 %v803, %v627
  %v805 = vadd.f32 %v804, %v632
  %v806 = vadd.f32 %v805, %v637
  %v807 = vadd.f32 %v806, %v642
  %v808 = vadd.f32 %v807, %v647
  %v809 = vadd.f32 %v808, %v652
  %v810 = vadd.f32 %v809, %v657
  %v811 = vadd.f32 %v810, %v662
  %v812 = vadd.f32 %v811, %v667
  %v813 = vadd.f32 %v812, %v672
  %v814 = vadd.f32 %v813, %v677
  %v815 = vadd.f32 %v814, %v682
  %v816 = vadd.f32 %v815, %v687
  %v817 = vrot.slane %v816, 4
  %v818 = vadd.f32 %v816, %v817
  %v819 = vrot.slane %v818, 2
  %v820 = vadd.f32 %v818, %v819
  %v821 = vrot.slane %v820, 1
  %v822 = vadd.f32 %v820, %v821
  %v823 = vmul.f32 %v372, %v372
  %v824 = vmul.f32 %v377, %v377
  %v825 = vmul.f32 %v382, %v382
  %v826 = vmul.f32 %v387, %v387
  %v827 = vmul.f32 %v392, %v392
  %v828 = vmul.f32 %v397, %v397
  %v829 = vmul.f32 %v402, %v402
  %v830 = vmul.f32 %v407, %v407
  %v831 = vmul.f32 %v412, %v412
  %v832 = vmul.f32 %v417, %v417
  %v833 = vmul.f32 %v422, %v422
  %v834 = vmul.f32 %v427, %v427
  %v835 = vmul.f32 %v432, %v432
  %v836 = vmul.f32 %v437, %v437
  %v837 = vmul.f32 %v442, %v442
  %v838 = vmul.f32 %v447, %v447
  %v839 = vmul.f32 %v452, %v452
  %v840 = vmul.f32 %v457, %v457
  %v841 = vmul.f32 %v462, %v462
  %v842 = vmul.f32 %v467, %v467
  %v843 = vmul.f32 %v472, %v472
  %v844 = vmul.f32 %v477, %v477
  %v845 = vmul.f32 %v482, %v482
  %v846 = vmul.f32 %v487, %v487
  %v847 = vmul.f32 %v492, %v492
  %v848 = vmul.f32 %v497, %v497
  %v849 = vmul.f32 %v502, %v502
  %v850 = vmul.f32 %v507, %v507
  %v851 = vmul.f32 %v512, %v512
  %v852 = vmul.f32 %v517, %v517
  %v853 = vmul.f32 %v522, %v522
  %v854 = vmul.f32 %v527, %v527
  %v855 = vmul.f32 %v532, %v532
  %v856 = vmul.f32 %v537, %v537
  %v857 = vmul.f32 %v542, %v542
  %v858 = vmul.f32 %v547, %v547
  %v859 = vmul.f32 %v552, %v552
  %v860 = vmul.f32 %v557, %v557
  %v861 = vmul.f32 %v562, %v562
  %v862 = vmul.f32 %v567, %v567
  %v863 = vmul.f32 %v572, %v572
  %v864 = vmul.f32 %v577, %v577
  %v865 = vmul.f32 %v582, %v582
  %v866 = vmul.f32 %v587, %v587
  %v867 = vmul.f32 %v592, %v592
  %v868 = vmul.f32 %v597, %v597
  %v869 = vmul.f32 %v602, %v602
  %v870 = vmul.f32 %v607, %v607
  %v871 = vmul.f32 %v612, %v612
  %v872 = vmul.f32 %v617, %v617
  %v873 = vmul.f32 %v622, %v622
  %v874 = vmul.f32 %v627, %v627
  %v875 = vmul.f32 %v632, %v632
  %v876 = vmul.f32 %v637, %v637
  %v877 = vmul.f32 %v642, %v642
  %v878 = vmul.f32 %v647, %v647
  %v879 = vmul.f32 %v652, %v652
  %v880 = vmul.f32 %v657, %v657
  %v881 = vmul.f32 %v662, %v662
  %v882 = vmul.f32 %v667, %v667
  %v883 = vmul.f32 %v672, %v672
  %v884 = vmul.f32 %v677, %v677
  %v885 = vmul.f32 %v682, %v682
  %v886 = vmul.f32 %v687, %v687
  %v887 = vadd.f32 %v823, %v824
  %v888 = vadd.f32 %v887, %v825
  %v889 = vadd.f32 %v888, %v826
  %v890 = vadd.f32 %v889, %v827
  %v891 = vadd.f32 %v890, %v828
  %v892 = vadd.f32 %v891, %v829
  %v893 = vadd.f32 %v892, %v830
  %v894 = vadd.f32 %v893, %v831
  %v895 = vadd.f32 %v894, %v832
  %v896 = vadd.f32 %v895, %v833
  %v897 = vadd.f32 %v896, %v834
  %v898 = vadd.f32 %v897, %v835
  %v899 = vadd.f32 %v898, %v836
  %v900 = vadd.f32 %v899, %v837
  %v901 = vadd.f32 %v900, %v838
  %v902 = vadd.f32 %v901, %v839
  %v903 = vadd.f32 %v902, %v840
  %v904 = vadd.f32 %v903, %v841
  %v905 = vadd.f32 %v904, %v842
  %v906 = vadd.f32 %v905, %v843
  %v907 = vadd.f32 %v906, %v844
  %v908 = vadd.f32 %v907, %v845
  %v909 = vadd.f32 %v908, %v846
  %v910 = vadd.f32 %v909, %v847
  %v911 = vadd.f32 %v910, %v848
  %v912 = vadd.f32 %v911, %v849
  %v913 = vadd.f32 %v912, %v850
  %v914 = vadd.f32 %v913, %v851
  %v915 = vadd.f32 %v914, %v852
  %v916 = vadd.f32 %v915, %v853
  %v917 = vadd.f32 %v916, %v854
  %v918 = vadd.f32 %v917, %v855
  %v919 = vadd.f32 %v918, %v856
  %v920 = vadd.f32 %v919, %v857
  %v921 = vadd.f32 %v920, %v858
  %v922 = vadd.f32 %v921, %v859
  %v923 = vadd.f32 %v922, %v860
  %v924 = vadd.f32 %v923, %v861
  %v925 = vadd.f32 %v924, %v862
  %v926 = vadd.f32 %v925, %v863
  %v927 = vadd.f32 %v926, %v864
  %v928 = vadd.f32 %v927, %v865
  %v929 = vadd.f32 %v928, %v866
  %v930 = vadd.f32 %v929, %v867
  %v931 = vadd.f32 %v930, %v868
  %v932 = vadd.f32 %v931, %v869
  %v933 = vadd.f32 %v932, %v870
  %v934 = vadd.f32 %v933, %v871
  %v935 = vadd.f32 %v934, %v872
  %v936 = vadd.f32 %v935, %v873
  %v937 = vadd.f32 %v936, %v874
  %v938 = vadd.f32 %v937, %v875
  %v939 = vadd.f32 %v938, %v876
  %v940 = vadd.f32 %v939, %v877
  %v941 = vadd.f32 %v940, %v878
  %v942 = vadd.f32 %v941, %v879
  %v943 = vadd.f32 %v942, %v880
  %v944 = vadd.f32 %v943, %v881
  %v945 = vadd.f32 %v944, %v882
  %v946 = vadd.f32 %v945, %v883
  %v947 = vadd.f32 %v946, %v884
  %v948 = vadd.f32 %v947, %v885
  %v949 = vadd.f32 %v948, %v886
  %v950 = vrot.slane %v949, 4
  %v951 = vadd.f32 %v949, %v950
  %v952 = vrot.slane %v951, 2
  %v953 = vadd.f32 %v951, %v952
  %v954 = vrot.slane %v953, 1
  %v955 = vadd.f32 %v953, %v954
  %vm956 = vcmask 1040384
  %v957 = vsel %vm956, %v822, %v955
  %958 = vst [vmem:[%s5] sm:$0x3] %v957
  // Predicated region
  $region18: #{bottleneck_forward.6} parent=0 // pred_check
    _
  $region19: #{bottleneck_forward.6} parent=0 // pred_check_branch
    %960 = sbr.rel (0) target = $region21
  $region20: #{bottleneck_forward.6} parent=0 // pred_region
    _
  $region21: #{bottleneck_forward.6} parent=0 // pred_fallthru
    _
  // Predicated region
  $region22: #{bottleneck_forward.6} parent=0 // pred_check
    _
  $region23: #{bottleneck_forward.6} parent=0 // pred_check_branch
    %962 = sbr.rel (0) target = $region25
  $region24: #{bottleneck_forward.6} parent=0 // pred_region
    _
  $region25: #{bottleneck_forward.6} parent=0 // pred_fallthru
    _
  // Predicated region
  $region26: #{bottleneck_forward.6} parent=0 // pred_check
    _
  $region27: #{bottleneck_forward.6} parent=0 // pred_check_branch
    %964 = sbr.rel (0) target = $region29
  $region28: #{bottleneck_forward.6} parent=0 // pred_region
    _
  $region29: #{bottleneck_forward.6} parent=0 // pred_fallthru
    _
  // Predicated region
  $region30: #{bottleneck_forward.6} parent=0 // pred_check
    _
  $region31: #{bottleneck_forward.6} parent=0 // pred_check_branch
    %966 = sbr.rel (0) target = $region33
  $region32: #{bottleneck_forward.6} parent=0 // pred_region
    _
  $region33: #{bottleneck_forward.6} parent=0 // pred_fallthru
    _

// kernel: bottleneck_forward.7
$region0: #{bottleneck_forward.7}
  #allocation0 [shape = 'u32[]', space=smem, size = 0x4, offset = 0x4, fixed_abs, tag = 'smem constant byte address 0x4 - core index']
  #allocation1 [shape = 'u32[144,128]{1,0:T(1,128)}', space=vmem, size = 0x12000, scoped, tag = 'internal scratch']
  %s0 = inlined_call_operand.vmem [shape: f32[512,128], index: 0, kind: input, shape index: {}]
  %s1 = inlined_call_operand.vmem [shape: f32[1,128], index: 1, kind: input, shape index: {}]
  %s2 = inlined_call_operand.vmem [shape: f32[1,128], index: 2, kind: input, shape index: {}]
  %s3 = inlined_call_operand.vmem [shape: f32[512,128], index: 3, kind: input, shape index: {}]
  %s4 = inlined_call_operand.vmem [shape: f32[128,128], index: 4, kind: input, shape index: {}]
  %s5 = inlined_call_operand.vmem [shape: f32[512,128], index: 5, kind: output, shape index: {}]
  %s6 = sld [smem:[#allocation0]]
  $region30: #{bottleneck_forward.7} parent=0
    _
  %s8 = ssub.s32 1, %s6
  %s9 = scalar_select 0, %s8, %s6
  // Predicated region
  $region2: #{bottleneck_forward.7} parent=0 // pred_check
    _
  $region3: #{bottleneck_forward.7} parent=0 // pred_check_branch
    %11 = sbr.rel (0) target = $region5
  $region4: #{bottleneck_forward.7} parent=0 // pred_region
    _
  $region5: #{bottleneck_forward.7} parent=0 // pred_fallthru
    _
  // Predicated region
  $region6: #{bottleneck_forward.7} parent=0 // pred_check
    _
  $region7: #{bottleneck_forward.7} parent=0 // pred_check_branch
    %13 = sbr.rel (0) target = $region9
  $region8: #{bottleneck_forward.7} parent=0 // pred_region
    _
  $region9: #{bottleneck_forward.7} parent=0 // pred_fallthru
    _
  // Predicated region
  $region10: #{bottleneck_forward.7} parent=0 // pred_check
    _
  $region11: #{bottleneck_forward.7} parent=0 // pred_check_branch
    %15 = sbr.rel (0) target = $region13
  $region12: #{bottleneck_forward.7} parent=0 // pred_region
    _
  $region13: #{bottleneck_forward.7} parent=0 // pred_fallthru
    _
  // Predicated region
  $region14: #{bottleneck_forward.7} parent=0 // pred_check
    _
  $region15: #{bottleneck_forward.7} parent=0 // pred_check_branch
    %17 = sbr.rel (0) target = $region17
  $region16: #{bottleneck_forward.7} parent=0 // pred_region
    _
  $region17: #{bottleneck_forward.7} parent=0 // pred_fallthru
    _
  // Predicated region
  $region18: #{bottleneck_forward.7} parent=0 // pred_check
    _
  $region19: #{bottleneck_forward.7} parent=0 // pred_check_branch
    %19 = sbr.rel (0) target = $region21
  $region20: #{bottleneck_forward.7} parent=0 // pred_region
    _
  $region21: #{bottleneck_forward.7} parent=0 // pred_fallthru
    _
  %v20 = vld [vmem:[%s3] sm:$0xff]
  %v21 = vld [vmem:[%s3 + $0x8] sm:$0xff]
  %v22 = vld [vmem:[%s3 + $0x10] sm:$0xff]
  %v23 = vld [vmem:[%s3 + $0x18] sm:$0xff]
  %v24 = vld [vmem:[%s3 + $0x20] sm:$0xff]
  %v25 = vld [vmem:[%s3 + $0x28] sm:$0xff]
  %v26 = vld [vmem:[%s3 + $0x30] sm:$0xff]
  %v27 = vld [vmem:[%s3 + $0x38] sm:$0xff]
  %v28 = vld [vmem:[%s3 + $0x40] sm:$0xff]
  %v29 = vld [vmem:[%s3 + $0x48] sm:$0xff]
  %v30 = vld [vmem:[%s3 + $0x50] sm:$0xff]
  %v31 = vld [vmem:[%s3 + $0x58] sm:$0xff]
  %v32 = vld [vmem:[%s3 + $0x60] sm:$0xff]
  %v33 = vld [vmem:[%s3 + $0x68] sm:$0xff]
  %v34 = vld [vmem:[%s3 + $0x70] sm:$0xff]
  %v35 = vld [vmem:[%s3 + $0x78] sm:$0xff]
  %v36 = vld [vmem:[%s3 + $0x80] sm:$0xff]
  %v37 = vld [vmem:[%s3 + $0x88] sm:$0xff]
  %v38 = vld [vmem:[%s3 + $0x90] sm:$0xff]
  %v39 = vld [vmem:[%s3 + $0x98] sm:$0xff]
  %v40 = vld [vmem:[%s3 + $0xa0] sm:$0xff]
  %v41 = vld [vmem:[%s3 + $0xa8] sm:$0xff]
  %v42 = vld [vmem:[%s3 + $0xb0] sm:$0xff]
  %v43 = vld [vmem:[%s3 + $0xb8] sm:$0xff]
  %v44 = vld [vmem:[%s3 + $0xc0] sm:$0xff]
  %v45 = vld [vmem:[%s3 + $0xc8] sm:$0xff]
  %v46 = vld [vmem:[%s3 + $0xd0] sm:$0xff]
  %v47 = vld [vmem:[%s3 + $0xd8] sm:$0xff]
  %v48 = vld [vmem:[%s3 + $0xe0] sm:$0xff]
  %v49 = vld [vmem:[%s3 + $0xe8] sm:$0xff]
  %v50 = vld [vmem:[%s3 + $0xf0] sm:$0xff]
  %v51 = vld [vmem:[%s3 + $0xf8] sm:$0xff]
  %v52 = vld [vmem:[%s3 + $0x100] sm:$0xff]
  %v53 = vld [vmem:[%s3 + $0x108] sm:$0xff]
  %v54 = vld [vmem:[%s3 + $0x110] sm:$0xff]
  %v55 = vld [vmem:[%s3 + $0x118] sm:$0xff]
  %v56 = vld [vmem:[%s3 + $0x120] sm:$0xff]
  %v57 = vld [vmem:[%s3 + $0x128] sm:$0xff]
  %v58 = vld [vmem:[%s3 + $0x130] sm:$0xff]
  %v59 = vld [vmem:[%s3 + $0x138] sm:$0xff]
  %v60 = vld [vmem:[%s3 + $0x140] sm:$0xff]
  %v61 = vld [vmem:[%s3 + $0x148] sm:$0xff]
  %v62 = vld [vmem:[%s3 + $0x150] sm:$0xff]
  %v63 = vld [vmem:[%s3 + $0x158] sm:$0xff]
  %v64 = vld [vmem:[%s3 + $0x160] sm:$0xff]
  %v65 = vld [vmem:[%s3 + $0x168] sm:$0xff]
  %v66 = vld [vmem:[%s3 + $0x170] sm:$0xff]
  %v67 = vld [vmem:[%s3 + $0x178] sm:$0xff]
  %v68 = vld [vmem:[%s3 + $0x180] sm:$0xff]
  %v69 = vld [vmem:[%s3 + $0x188] sm:$0xff]
  %v70 = vld [vmem:[%s3 + $0x190] sm:$0xff]
  %v71 = vld [vmem:[%s3 + $0x198] sm:$0xff]
  %v72 = vld [vmem:[%s3 + $0x1a0] sm:$0xff]
  %v73 = vld [vmem:[%s3 + $0x1a8] sm:$0xff]
  %v74 = vld [vmem:[%s3 + $0x1b0] sm:$0xff]
  %v75 = vld [vmem:[%s3 + $0x1b8] sm:$0xff]
  %v76 = vld [vmem:[%s3 + $0x1c0] sm:$0xff]
  %v77 = vld [vmem:[%s3 + $0x1c8] sm:$0xff]
  %v78 = vld [vmem:[%s3 + $0x1d0] sm:$0xff]
  %v79 = vld [vmem:[%s3 + $0x1d8] sm:$0xff]
  %v80 = vld [vmem:[%s3 + $0x1e0] sm:$0xff]
  %v81 = vld [vmem:[%s3 + $0x1e8] sm:$0xff]
  %v82 = vld [vmem:[%s3 + $0x1f0] sm:$0xff]
  %v83 = vld [vmem:[%s3 + $0x1f8] sm:$0xff]
  %v84 = vld [vmem:[%s4] sm:$0xff]
  %v85 = vld [vmem:[%s4 + $0x8] sm:$0xff]
  %v86 = vld [vmem:[%s4 + $0x10] sm:$0xff]
  %v87 = vld [vmem:[%s4 + $0x18] sm:$0xff]
  %v88 = vld [vmem:[%s4 + $0x20] sm:$0xff]
  %v89 = vld [vmem:[%s4 + $0x28] sm:$0xff]
  %v90 = vld [vmem:[%s4 + $0x30] sm:$0xff]
  %v91 = vld [vmem:[%s4 + $0x38] sm:$0xff]
  %v92 = vld [vmem:[%s4 + $0x40] sm:$0xff]
  %v93 = vld [vmem:[%s4 + $0x48] sm:$0xff]
  %v94 = vld [vmem:[%s4 + $0x50] sm:$0xff]
  %v95 = vld [vmem:[%s4 + $0x58] sm:$0xff]
  %v96 = vld [vmem:[%s4 + $0x60] sm:$0xff]
  %v97 = vld [vmem:[%s4 + $0x68] sm:$0xff]
  %v98 = vld [vmem:[%s4 + $0x70] sm:$0xff]
  %v99 = vld [vmem:[%s4 + $0x78] sm:$0xff]
  %100 = vmatprep.subr.mxu0 0.0
  %101 = vmatpush1.msra.mxu0 %v99
  %102 = vmatprep.subr.mxu0 0.0
  %103 = vmatpush1.msra.mxu0 %v98
  %104 = vmatprep.subr.mxu0 0.0
  %105 = vmatpush1.msra.mxu0 %v97
  %106 = vmatprep.subr.mxu0 0.0
  %107 = vmatpush1.msra.mxu0 %v96
  %108 = vmatprep.subr.mxu0 0.0
  %109 = vmatpush1.msra.mxu0 %v95
  %110 = vmatprep.subr.mxu0 0.0
  %111 = vmatpush1.msra.mxu0 %v94
  %112 = vmatprep.subr.mxu0 0.0
  %113 = vmatpush1.msra.mxu0 %v93
  %114 = vmatprep.subr.mxu0 0.0
  %115 = vmatpush1.msra.mxu0 %v92
  %116 = vmatprep.subr.mxu0 0.0
  %117 = vmatpush1.msra.mxu0 %v91
  %118 = vmatprep.subr.mxu0 0.0
  %119 = vmatpush1.msra.mxu0 %v90
  %120 = vmatprep.subr.mxu0 0.0
  %121 = vmatpush1.msra.mxu0 %v89
  %122 = vmatprep.subr.mxu0 0.0
  %123 = vmatpush1.msra.mxu0 %v88
  %124 = vmatprep.subr.mxu0 0.0
  %125 = vmatpush1.msra.mxu0 %v87
  %126 = vmatprep.subr.mxu0 0.0
  %127 = vmatpush1.msra.mxu0 %v86
  %128 = vmatprep.subr.mxu0 0.0
  %129 = vmatpush1.msra.mxu0 %v85
  %130 = vmatprep.subr.mxu0 0.0
  %131 = vmatpush1.msra.mxu0 %v84
  %132 = vmatprep.subr.mxu0 0.0
  %133 = vmatpush2.msra.mxu0 0.0
  %134 = vmatprep.subr.mxu0 0.0
  %135 = vmatpush2.msra.mxu0 0.0
  %136 = vmatprep.subr.mxu0 0.0
  %137 = vmatpush2.msra.mxu0 0.0
  %138 = vmatprep.subr.mxu0 0.0
  %139 = vmatpush2.msra.mxu0 0.0
  %140 = vmatprep.subr.mxu0 0.0
  %141 = vmatpush2.msra.mxu0 0.0
  %142 = vmatprep.subr.mxu0 0.0
  %143 = vmatpush2.msra.mxu0 0.0
  %144 = vmatprep.subr.mxu0 0.0
  %145 = vmatpush2.msra.mxu0 0.0
  %146 = vmatprep.subr.mxu0 0.0
  %147 = vmatpush2.msra.mxu0 0.0
  %148 = vmatprep.subr.mxu0 0.0
  %149 = vmatpush2.msra.mxu0 0.0
  %150 = vmatprep.subr.mxu0 0.0
  %151 = vmatpush2.msra.mxu0 0.0
  %152 = vmatprep.subr.mxu0 0.0
  %153 = vmatpush2.msra.mxu0 0.0
  %154 = vmatprep.subr.mxu0 0.0
  %155 = vmatpush2.msra.mxu0 0.0
  %156 = vmatprep.subr.mxu0 0.0
  %157 = vmatpush2.msra.mxu0 0.0
  %158 = vmatprep.subr.mxu0 0.0
  %159 = vmatpush2.msra.mxu0 0.0
  %160 = vmatprep.subr.mxu0 0.0
  %161 = vmatpush2.msra.mxu0 0.0
  %162 = vmatprep.subr.mxu0 0.0
  %163 = vmatpush2.msra.mxu0 0.0
  %164 = vmatprep.mubr.f32.mxu0 0.0
  %165 = vmatmul.mubr.f32.gmra.mxu0 %v20
  %v166 = vpop.f32.mrf.mxu0
  %v167 = vadd.f32 0.0, %v166
  %v168 = vpop.f32.mrf.mxu0
  %169 = vmatprep.mubr.f32.mxu0 0.0
  %170 = vmatmul.mubr.f32.gmra.mxu0 %v21
  %v171 = vpop.f32.mrf.mxu0
  %v172 = vadd.f32 0.0, %v171
  %v173 = vpop.f32.mrf.mxu0
  %174 = vmatprep.mubr.f32.mxu0 0.0
  %175 = vmatmul.mubr.f32.gmra.mxu0 %v22
  %v176 = vpop.f32.mrf.mxu0
  %v177 = vadd.f32 0.0, %v176
  %v178 = vpop.f32.mrf.mxu0
  %179 = vmatprep.mubr.f32.mxu0 0.0
  %180 = vmatmul.mubr.f32.gmra.mxu0 %v23
  %v181 = vpop.f32.mrf.mxu0
  %v182 = vadd.f32 0.0, %v181
  %v183 = vpop.f32.mrf.mxu0
  %184 = vmatprep.mubr.f32.mxu0 0.0
  %185 = vmatmul.mubr.f32.gmra.mxu0 %v24
  %v186 = vpop.f32.mrf.mxu0
  %v187 = vadd.f32 0.0, %v186
  %v188 = vpop.f32.mrf.mxu0
  %189 = vmatprep.mubr.f32.mxu0 0.0
  %190 = vmatmul.mubr.f32.gmra.mxu0 %v25
  %v191 = vpop.f32.mrf.mxu0
  %v192 = vadd.f32 0.0, %v191
  %v193 = vpop.f32.mrf.mxu0
  %194 = vmatprep.mubr.f32.mxu0 0.0
  %195 = vmatmul.mubr.f32.gmra.mxu0 %v26
  %v196 = vpop.f32.mrf.mxu0
  %v197 = vadd.f32 0.0, %v196
  %v198 = vpop.f32.mrf.mxu0
  %199 = vmatprep.mubr.f32.mxu0 0.0
  %200 = vmatmul.mubr.f32.gmra.mxu0 %v27
  %v201 = vpop.f32.mrf.mxu0
  %v202 = vadd.f32 0.0, %v201
  %v203 = vpop.f32.mrf.mxu0
  %204 = vmatprep.mubr.f32.mxu0 0.0
  %205 = vmatmul.mubr.f32.gmra.mxu0 %v28
  %v206 = vpop.f32.mrf.mxu0
  %v207 = vadd.f32 0.0, %v206
  %v208 = vpop.f32.mrf.mxu0
  %209 = vmatprep.mubr.f32.mxu0 0.0
  %210 = vmatmul.mubr.f32.gmra.mxu0 %v29
  %v211 = vpop.f32.mrf.mxu0
  %v212 = vadd.f32 0.0, %v211
  %v213 = vpop.f32.mrf.mxu0
  %214 = vmatprep.mubr.f32.mxu0 0.0
  %215 = vmatmul.mubr.f32.gmra.mxu0 %v30
  %v216 = vpop.f32.mrf.mxu0
  %v217 = vadd.f32 0.0, %v216
  %v218 = vpop.f32.mrf.mxu0
  %219 = vmatprep.mubr.f32.mxu0 0.0
  %220 = vmatmul.mubr.f32.gmra.mxu0 %v31
  %v221 = vpop.f32.mrf.mxu0
  %v222 = vadd.f32 0.0, %v221
  %v223 = vpop.f32.mrf.mxu0
  %224 = vmatprep.mubr.f32.mxu0 0.0
  %225 = vmatmul.mubr.f32.gmra.mxu0 %v32
  %v226 = vpop.f32.mrf.mxu0
  %v227 = vadd.f32 0.0, %v226
  %v228 = vpop.f32.mrf.mxu0
  %229 = vmatprep.mubr.f32.mxu0 0.0
  %230 = vmatmul.mubr.f32.gmra.mxu0 %v33
  %v231 = vpop.f32.mrf.mxu0
  %v232 = vadd.f32 0.0, %v231
  %v233 = vpop.f32.mrf.mxu0
  %234 = vmatprep.mubr.f32.mxu0 0.0
  %235 = vmatmul.mubr.f32.gmra.mxu0 %v34
  %v236 = vpop.f32.mrf.mxu0
  %v237 = vadd.f32 0.0, %v236
  %v238 = vpop.f32.mrf.mxu0
  %239 = vmatprep.mubr.f32.mxu0 0.0
  %240 = vmatmul.mubr.f32.gmra.mxu0 %v35
  %v241 = vpop.f32.mrf.mxu0
  %v242 = vadd.f32 0.0, %v241
  %v243 = vpop.f32.mrf.mxu0
  %244 = vmatprep.mubr.f32.mxu0 0.0
  %245 = vmatmul.mubr.f32.gmra.mxu0 %v36
  %v246 = vpop.f32.mrf.mxu0
  %v247 = vadd.f32 0.0, %v246
  %v248 = vpop.f32.mrf.mxu0
  %249 = vmatprep.mubr.f32.mxu0 0.0
  %250 = vmatmul.mubr.f32.gmra.mxu0 %v37
  %v251 = vpop.f32.mrf.mxu0
  %v252 = vadd.f32 0.0, %v251
  %v253 = vpop.f32.mrf.mxu0
  %254 = vmatprep.mubr.f32.mxu0 0.0
  %255 = vmatmul.mubr.f32.gmra.mxu0 %v38
  %v256 = vpop.f32.mrf.mxu0
  %v257 = vadd.f32 0.0, %v256
  %v258 = vpop.f32.mrf.mxu0
  %259 = vmatprep.mubr.f32.mxu0 0.0
  %260 = vmatmul.mubr.f32.gmra.mxu0 %v39
  %v261 = vpop.f32.mrf.mxu0
  %v262 = vadd.f32 0.0, %v261
  %v263 = vpop.f32.mrf.mxu0
  %264 = vmatprep.mubr.f32.mxu0 0.0
  %265 = vmatmul.mubr.f32.gmra.mxu0 %v40
  %v266 = vpop.f32.mrf.mxu0
  %v267 = vadd.f32 0.0, %v266
  %v268 = vpop.f32.mrf.mxu0
  %269 = vmatprep.mubr.f32.mxu0 0.0
  %270 = vmatmul.mubr.f32.gmra.mxu0 %v41
  %v271 = vpop.f32.mrf.mxu0
  %v272 = vadd.f32 0.0, %v271
  %v273 = vpop.f32.mrf.mxu0
  %274 = vmatprep.mubr.f32.mxu0 0.0
  %275 = vmatmul.mubr.f32.gmra.mxu0 %v42
  %v276 = vpop.f32.mrf.mxu0
  %v277 = vadd.f32 0.0, %v276
  %v278 = vpop.f32.mrf.mxu0
  %279 = vmatprep.mubr.f32.mxu0 0.0
  %280 = vmatmul.mubr.f32.gmra.mxu0 %v43
  %v281 = vpop.f32.mrf.mxu0
  %v282 = vadd.f32 0.0, %v281
  %v283 = vpop.f32.mrf.mxu0
  %284 = vmatprep.mubr.f32.mxu0 0.0
  %285 = vmatmul.mubr.f32.gmra.mxu0 %v44
  %v286 = vpop.f32.mrf.mxu0
  %v287 = vadd.f32 0.0, %v286
  %v288 = vpop.f32.mrf.mxu0
  %289 = vmatprep.mubr.f32.mxu0 0.0
  %290 = vmatmul.mubr.f32.gmra.mxu0 %v45
  %v291 = vpop.f32.mrf.mxu0
  %v292 = vadd.f32 0.0, %v291
  %v293 = vpop.f32.mrf.mxu0
  %294 = vmatprep.mubr.f32.mxu0 0.0
  %295 = vmatmul.mubr.f32.gmra.mxu0 %v46
  %v296 = vpop.f32.mrf.mxu0
  %v297 = vadd.f32 0.0, %v296
  %v298 = vpop.f32.mrf.mxu0
  %299 = vmatprep.mubr.f32.mxu0 0.0
  %300 = vmatmul.mubr.f32.gmra.mxu0 %v47
  %v301 = vpop.f32.mrf.mxu0
  %v302 = vadd.f32 0.0, %v301
  %v303 = vpop.f32.mrf.mxu0
  %304 = vmatprep.mubr.f32.mxu0 0.0
  %305 = vmatmul.mubr.f32.gmra.mxu0 %v48
  %v306 = vpop.f32.mrf.mxu0
  %v307 = vadd.f32 0.0, %v306
  %v308 = vpop.f32.mrf.mxu0
  %309 = vmatprep.mubr.f32.mxu0 0.0
  %310 = vmatmul.mubr.f32.gmra.mxu0 %v49
  %v311 = vpop.f32.mrf.mxu0
  %v312 = vadd.f32 0.0, %v311
  %v313 = vpop.f32.mrf.mxu0
  %314 = vmatprep.mubr.f32.mxu0 0.0
  %315 = vmatmul.mubr.f32.gmra.mxu0 %v50
  %v316 = vpop.f32.mrf.mxu0
  %v317 = vadd.f32 0.0, %v316
  %v318 = vpop.f32.mrf.mxu0
  %319 = vmatprep.mubr.f32.mxu0 0.0
  %320 = vmatmul.mubr.f32.gmra.mxu0 %v51
  %v321 = vpop.f32.mrf.mxu0
  %v322 = vadd.f32 0.0, %v321
  %v323 = vpop.f32.mrf.mxu0
  %324 = vmatprep.mubr.f32.mxu0 0.0
  %325 = vmatmul.mubr.f32.gmra.mxu0 %v52
  %v326 = vpop.f32.mrf.mxu0
  %v327 = vadd.f32 0.0, %v326
  %v328 = vpop.f32.mrf.mxu0
  %329 = vmatprep.mubr.f32.mxu0 0.0
  %330 = vmatmul.mubr.f32.gmra.mxu0 %v53
  %v331 = vpop.f32.mrf.mxu0
  %v332 = vadd.f32 0.0, %v331
  %v333 = vpop.f32.mrf.mxu0
  %334 = vmatprep.mubr.f32.mxu0 0.0
  %335 = vmatmul.mubr.f32.gmra.mxu0 %v54
  %v336 = vpop.f32.mrf.mxu0
  %v337 = vadd.f32 0.0, %v336
  %v338 = vpop.f32.mrf.mxu0
  %339 = vmatprep.mubr.f32.mxu0 0.0
  %340 = vmatmul.mubr.f32.gmra.mxu0 %v55
  %v341 = vpop.f32.mrf.mxu0
  %v342 = vadd.f32 0.0, %v341
  %v343 = vpop.f32.mrf.mxu0
  %344 = vmatprep.mubr.f32.mxu0 0.0
  %345 = vmatmul.mubr.f32.gmra.mxu0 %v56
  %v346 = vpop.f32.mrf.mxu0
  %v347 = vadd.f32 0.0, %v346
  %v348 = vpop.f32.mrf.mxu0
  %349 = vmatprep.mubr.f32.mxu0 0.0
  %350 = vmatmul.mubr.f32.gmra.mxu0 %v57
  %v351 = vpop.f32.mrf.mxu0
  %v352 = vadd.f32 0.0, %v351
  %v353 = vpop.f32.mrf.mxu0
  %354 = vmatprep.mubr.f32.mxu0 0.0
  %355 = vmatmul.mubr.f32.gmra.mxu0 %v58
  %v356 = vpop.f32.mrf.mxu0
  %v357 = vadd.f32 0.0, %v356
  %v358 = vpop.f32.mrf.mxu0
  %359 = vmatprep.mubr.f32.mxu0 0.0
  %360 = vmatmul.mubr.f32.gmra.mxu0 %v59
  %v361 = vpop.f32.mrf.mxu0
  %v362 = vadd.f32 0.0, %v361
  %v363 = vpop.f32.mrf.mxu0
  %364 = vmatprep.mubr.f32.mxu0 0.0
  %365 = vmatmul.mubr.f32.gmra.mxu0 %v60
  %v366 = vpop.f32.mrf.mxu0
  %v367 = vadd.f32 0.0, %v366
  %v368 = vpop.f32.mrf.mxu0
  %369 = vmatprep.mubr.f32.mxu0 0.0
  %370 = vmatmul.mubr.f32.gmra.mxu0 %v61
  %v371 = vpop.f32.mrf.mxu0
  %v372 = vadd.f32 0.0, %v371
  %v373 = vpop.f32.mrf.mxu0
  %374 = vmatprep.mubr.f32.mxu0 0.0
  %375 = vmatmul.mubr.f32.gmra.mxu0 %v62
  %v376 = vpop.f32.mrf.mxu0
  %v377 = vadd.f32 0.0, %v376
  %v378 = vpop.f32.mrf.mxu0
  %379 = vmatprep.mubr.f32.mxu0 0.0
  %380 = vmatmul.mubr.f32.gmra.mxu0 %v63
  %v381 = vpop.f32.mrf.mxu0
  %v382 = vadd.f32 0.0, %v381
  %v383 = vpop.f32.mrf.mxu0
  %384 = vmatprep.mubr.f32.mxu0 0.0
  %385 = vmatmul.mubr.f32.gmra.mxu0 %v64
  %v386 = vpop.f32.mrf.mxu0
  %v387 = vadd.f32 0.0, %v386
  %v388 = vpop.f32.mrf.mxu0
  %389 = vmatprep.mubr.f32.mxu0 0.0
  %390 = vmatmul.mubr.f32.gmra.mxu0 %v65
  %v391 = vpop.f32.mrf.mxu0
  %v392 = vadd.f32 0.0, %v391
  %v393 = vpop.f32.mrf.mxu0
  %394 = vmatprep.mubr.f32.mxu0 0.0
  %395 = vmatmul.mubr.f32.gmra.mxu0 %v66
  %v396 = vpop.f32.mrf.mxu0
  %v397 = vadd.f32 0.0, %v396
  %v398 = vpop.f32.mrf.mxu0
  %399 = vmatprep.mubr.f32.mxu0 0.0
  %400 = vmatmul.mubr.f32.gmra.mxu0 %v67
  %v401 = vpop.f32.mrf.mxu0
  %v402 = vadd.f32 0.0, %v401
  %v403 = vpop.f32.mrf.mxu0
  %404 = vmatprep.mubr.f32.mxu0 0.0
  %405 = vmatmul.mubr.f32.gmra.mxu0 %v68
  %v406 = vpop.f32.mrf.mxu0
  %v407 = vadd.f32 0.0, %v406
  %v408 = vpop.f32.mrf.mxu0
  %409 = vmatprep.mubr.f32.mxu0 0.0
  %410 = vmatmul.mubr.f32.gmra.mxu0 %v69
  %v411 = vpop.f32.mrf.mxu0
  %v412 = vadd.f32 0.0, %v411
  %v413 = vpop.f32.mrf.mxu0
  %414 = vmatprep.mubr.f32.mxu0 0.0
  %415 = vmatmul.mubr.f32.gmra.mxu0 %v70
  %v416 = vpop.f32.mrf.mxu0
  %v417 = vadd.f32 0.0, %v416
  %v418 = vpop.f32.mrf.mxu0
  %419 = vmatprep.mubr.f32.mxu0 0.0
  %420 = vmatmul.mubr.f32.gmra.mxu0 %v71
  %v421 = vpop.f32.mrf.mxu0
  %v422 = vadd.f32 0.0, %v421
  %v423 = vpop.f32.mrf.mxu0
  %424 = vmatprep.mubr.f32.mxu0 0.0
  %425 = vmatmul.mubr.f32.gmra.mxu0 %v72
  %v426 = vpop.f32.mrf.mxu0
  %v427 = vadd.f32 0.0, %v426
  %v428 = vpop.f32.mrf.mxu0
  %429 = vmatprep.mubr.f32.mxu0 0.0
  %430 = vmatmul.mubr.f32.gmra.mxu0 %v73
  %v431 = vpop.f32.mrf.mxu0
  %v432 = vadd.f32 0.0, %v431
  %v433 = vpop.f32.mrf.mxu0
  %434 = vmatprep.mubr.f32.mxu0 0.0
  %435 = vmatmul.mubr.f32.gmra.mxu0 %v74
  %v436 = vpop.f32.mrf.mxu0
  %v437 = vadd.f32 0.0, %v436
  %v438 = vpop.f32.mrf.mxu0
  %439 = vmatprep.mubr.f32.mxu0 0.0
  %440 = vmatmul.mubr.f32.gmra.mxu0 %v75
  %v441 = vpop.f32.mrf.mxu0
  %v442 = vadd.f32 0.0, %v441
  %v443 = vpop.f32.mrf.mxu0
  %444 = vmatprep.mubr.f32.mxu0 0.0
  %445 = vmatmul.mubr.f32.gmra.mxu0 %v76
  %v446 = vpop.f32.mrf.mxu0
  %v447 = vadd.f32 0.0, %v446
  %v448 = vpop.f32.mrf.mxu0
  %449 = vmatprep.mubr.f32.mxu0 0.0
  %450 = vmatmul.mubr.f32.gmra.mxu0 %v77
  %v451 = vpop.f32.mrf.mxu0
  %v452 = vadd.f32 0.0, %v451
  %v453 = vpop.f32.mrf.mxu0
  %454 = vmatprep.mubr.f32.mxu0 0.0
  %455 = vmatmul.mubr.f32.gmra.mxu0 %v78
  %v456 = vpop.f32.mrf.mxu0
  %v457 = vadd.f32 0.0, %v456
  %v458 = vpop.f32.mrf.mxu0
  %459 = vmatprep.mubr.f32.mxu0 0.0
  %460 = vmatmul.mubr.f32.gmra.mxu0 %v79
  %v461 = vpop.f32.mrf.mxu0
  %v462 = vadd.f32 0.0, %v461
  %v463 = vpop.f32.mrf.mxu0
  %464 = vmatprep.mubr.f32.mxu0 0.0
  %465 = vmatmul.mubr.f32.gmra.mxu0 %v80
  %v466 = vpop.f32.mrf.mxu0
  %v467 = vadd.f32 0.0, %v466
  %v468 = vpop.f32.mrf.mxu0
  %469 = vmatprep.mubr.f32.mxu0 0.0
  %470 = vmatmul.mubr.f32.gmra.mxu0 %v81
  %v471 = vpop.f32.mrf.mxu0
  %v472 = vadd.f32 0.0, %v471
  %v473 = vpop.f32.mrf.mxu0
  %474 = vmatprep.mubr.f32.mxu0 0.0
  %475 = vmatmul.mubr.f32.gmra.mxu0 %v82
  %v476 = vpop.f32.mrf.mxu0
  %v477 = vadd.f32 0.0, %v476
  %v478 = vpop.f32.mrf.mxu0
  %479 = vmatprep.mubr.f32.mxu0 0.0
  %480 = vmatmul.mubr.f32.gmra.mxu0 %v83
  %v481 = vpop.f32.mrf.mxu0
  %v482 = vadd.f32 0.0, %v481
  %v483 = vpop.f32.mrf.mxu0
  %484 = vdwg.mxu0
  %v485 = vld [vmem:[%s0] sm:$0xff]
  %v486 = vld [vmem:[%s0 + $0x8] sm:$0xff]
  %v487 = vld [vmem:[%s0 + $0x10] sm:$0xff]
  %v488 = vld [vmem:[%s0 + $0x18] sm:$0xff]
  %v489 = vld [vmem:[%s0 + $0x20] sm:$0xff]
  %v490 = vld [vmem:[%s0 + $0x28] sm:$0xff]
  %v491 = vld [vmem:[%s0 + $0x30] sm:$0xff]
  %v492 = vld [vmem:[%s0 + $0x38] sm:$0xff]
  %v493 = vld [vmem:[%s0 + $0x40] sm:$0xff]
  %v494 = vld [vmem:[%s0 + $0x48] sm:$0xff]
  %v495 = vld [vmem:[%s0 + $0x50] sm:$0xff]
  %v496 = vld [vmem:[%s0 + $0x58] sm:$0xff]
  %v497 = vld [vmem:[%s0 + $0x60] sm:$0xff]
  %v498 = vld [vmem:[%s0 + $0x68] sm:$0xff]
  %v499 = vld [vmem:[%s0 + $0x70] sm:$0xff]
  %v500 = vld [vmem:[%s0 + $0x78] sm:$0xff]
  %v501 = vld [vmem:[%s0 + $0x80] sm:$0xff]
  %v502 = vld [vmem:[%s0 + $0x88] sm:$0xff]
  %v503 = vld [vmem:[%s0 + $0x90] sm:$0xff]
  %v504 = vld [vmem:[%s0 + $0x98] sm:$0xff]
  %v505 = vld [vmem:[%s0 + $0xa0] sm:$0xff]
  %v506 = vld [vmem:[%s0 + $0xa8] sm:$0xff]
  %v507 = vld [vmem:[%s0 + $0xb0] sm:$0xff]
  %v508 = vld [vmem:[%s0 + $0xb8] sm:$0xff]
  %v509 = vld [vmem:[%s0 + $0xc0] sm:$0xff]
  %v510 = vld [vmem:[%s0 + $0xc8] sm:$0xff]
  %v511 = vld [vmem:[%s0 + $0xd0] sm:$0xff]
  %v512 = vld [vmem:[%s0 + $0xd8] sm:$0xff]
  %v513 = vld [vmem:[%s0 + $0xe0] sm:$0xff]
  %v514 = vld [vmem:[%s0 + $0xe8] sm:$0xff]
  %v515 = vld [vmem:[%s0 + $0xf0] sm:$0xff]
  %v516 = vld [vmem:[%s0 + $0xf8] sm:$0xff]
  %v517 = vld [vmem:[%s0 + $0x100] sm:$0xff]
  %v518 = vld [vmem:[%s0 + $0x108] sm:$0xff]
  %v519 = vld [vmem:[%s0 + $0x110] sm:$0xff]
  %v520 = vld [vmem:[%s0 + $0x118] sm:$0xff]
  %v521 = vld [vmem:[%s0 + $0x120] sm:$0xff]
  %v522 = vld [vmem:[%s0 + $0x128] sm:$0xff]
  %v523 = vld [vmem:[%s0 + $0x130] sm:$0xff]
  %v524 = vld [vmem:[%s0 + $0x138] sm:$0xff]
  %v525 = vld [vmem:[%s0 + $0x140] sm:$0xff]
  %v526 = vld [vmem:[%s0 + $0x148] sm:$0xff]
  %v527 = vld [vmem:[%s0 + $0x150] sm:$0xff]
  %v528 = vld [vmem:[%s0 + $0x158] sm:$0xff]
  %v529 = vld [vmem:[%s0 + $0x160] sm:$0xff]
  %v530 = vld [vmem:[%s0 + $0x168] sm:$0xff]
  %v531 = vld [vmem:[%s0 + $0x170] sm:$0xff]
  %v532 = vld [vmem:[%s0 + $0x178] sm:$0xff]
  %v533 = vld [vmem:[%s0 + $0x180] sm:$0xff]
  %v534 = vld [vmem:[%s0 + $0x188] sm:$0xff]
  %v535 = vld [vmem:[%s0 + $0x190] sm:$0xff]
  %v536 = vld [vmem:[%s0 + $0x198] sm:$0xff]
  %v537 = vld [vmem:[%s0 + $0x1a0] sm:$0xff]
  %v538 = vld [vmem:[%s0 + $0x1a8] sm:$0xff]
  %v539 = vld [vmem:[%s0 + $0x1b0] sm:$0xff]
  %v540 = vld [vmem:[%s0 + $0x1b8] sm:$0xff]
  %v541 = vld [vmem:[%s0 + $0x1c0] sm:$0xff]
  %v542 = vld [vmem:[%s0 + $0x1c8] sm:$0xff]
  %v543 = vld [vmem:[%s0 + $0x1d0] sm:$0xff]
  %v544 = vld [vmem:[%s0 + $0x1d8] sm:$0xff]
  %v545 = vld [vmem:[%s0 + $0x1e0] sm:$0xff]
  %v546 = vld [vmem:[%s0 + $0x1e8] sm:$0xff]
  %v547 = vld [vmem:[%s0 + $0x1f0] sm:$0xff]
  %v548 = vld [vmem:[%s0 + $0x1f8] sm:$0xff]
  %v549 = vld [vmem:[%s1] sm:$0x1]
  %v551 = vlaneseq
  %v552 = vshrl.u32 %v551, 7
  %v553 = vsub.s32 0, %v552
  %v554 = vrot.slane %v549, %v553
  %v556 = vmul.f32 %v485, %v554
  %v557 = vmul.f32 %v486, %v554
  %v558 = vmul.f32 %v487, %v554
  %v559 = vmul.f32 %v488, %v554
  %v560 = vmul.f32 %v489, %v554
  %v561 = vmul.f32 %v490, %v554
  %v562 = vmul.f32 %v491, %v554
  %v563 = vmul.f32 %v492, %v554
  %v564 = vmul.f32 %v493, %v554
  %v565 = vmul.f32 %v494, %v554
  %v566 = vmul.f32 %v495, %v554
  %v567 = vmul.f32 %v496, %v554
  %v568 = vmul.f32 %v497, %v554
  %v569 = vmul.f32 %v498, %v554
  %v570 = vmul.f32 %v499, %v554
  %v571 = vmul.f32 %v500, %v554
  %v572 = vmul.f32 %v501, %v554
  %v573 = vmul.f32 %v502, %v554
  %v574 = vmul.f32 %v503, %v554
  %v575 = vmul.f32 %v504, %v554
  %v576 = vmul.f32 %v505, %v554
  %v577 = vmul.f32 %v506, %v554
  %v578 = vmul.f32 %v507, %v554
  %v579 = vmul.f32 %v508, %v554
  %v580 = vmul.f32 %v509, %v554
  %v581 = vmul.f32 %v510, %v554
  %v582 = vmul.f32 %v511, %v554
  %v583 = vmul.f32 %v512, %v554
  %v584 = vmul.f32 %v513, %v554
  %v585 = vmul.f32 %v514, %v554
  %v586 = vmul.f32 %v515, %v554
  %v587 = vmul.f32 %v516, %v554
  %v588 = vmul.f32 %v517, %v554
  %v589 = vmul.f32 %v518, %v554
  %v590 = vmul.f32 %v519, %v554
  %v591 = vmul.f32 %v520, %v554
  %v592 = vmul.f32 %v521, %v554
  %v593 = vmul.f32 %v522, %v554
  %v594 = vmul.f32 %v523, %v554
  %v595 = vmul.f32 %v524, %v554
  %v596 = vmul.f32 %v525, %v554
  %v597 = vmul.f32 %v526, %v554
  %v598 = vmul.f32 %v527, %v554
  %v599 = vmul.f32 %v528, %v554
  %v600 = vmul.f32 %v529, %v554
  %v601 = vmul.f32 %v530, %v554
  %v602 = vmul.f32 %v531, %v554
  %v603 = vmul.f32 %v532, %v554
  %v604 = vmul.f32 %v533, %v554
  %v605 = vmul.f32 %v534, %v554
  %v606 = vmul.f32 %v535, %v554
  %v607 = vmul.f32 %v536, %v554
  %v608 = vmul.f32 %v537, %v554
  %v609 = vmul.f32 %v538, %v554
  %v610 = vmul.f32 %v539, %v554
  %v611 = vmul.f32 %v540, %v554
  %v612 = vmul.f32 %v541, %v554
  %v613 = vmul.f32 %v542, %v554
  %v614 = vmul.f32 %v543, %v554
  %v615 = vmul.f32 %v544, %v554
  %v616 = vmul.f32 %v545, %v554
  %v617 = vmul.f32 %v546, %v554
  %v618 = vmul.f32 %v547, %v554
  %v619 = vmul.f32 %v548, %v554
  %v620 = vld [vmem:[%s2] sm:$0x1]
  %v622 = vlaneseq
  %v623 = vshrl.u32 %v622, 7
  %v624 = vsub.s32 0, %v623
  %v625 = vrot.slane %v620, %v624
  %v627 = vadd.f32 %v556, %v625
  %v628 = vadd.f32 %v557, %v625
  %v629 = vadd.f32 %v558, %v625
  %v630 = vadd.f32 %v559, %v625
  %v631 = vadd.f32 %v560, %v625
  %v632 = vadd.f32 %v561, %v625
  %v633 = vadd.f32 %v562, %v625
  %v634 = vadd.f32 %v563, %v625
  %v635 = vadd.f32 %v564, %v625
  %v636 = vadd.f32 %v565, %v625
  %v637 = vadd.f32 %v566, %v625
  %v638 = vadd.f32 %v567, %v625
  %v639 = vadd.f32 %v568, %v625
  %v640 = vadd.f32 %v569, %v625
  %v641 = vadd.f32 %v570, %v625
  %v642 = vadd.f32 %v571, %v625
  %v643 = vadd.f32 %v572, %v625
  %v644 = vadd.f32 %v573, %v625
  %v645 = vadd.f32 %v574, %v625
  %v646 = vadd.f32 %v575, %v625
  %v647 = vadd.f32 %v576, %v625
  %v648 = vadd.f32 %v577, %v625
  %v649 = vadd.f32 %v578, %v625
  %v650 = vadd.f32 %v579, %v625
  %v651 = vadd.f32 %v580, %v625
  %v652 = vadd.f32 %v581, %v625
  %v653 = vadd.f32 %v582, %v625
  %v654 = vadd.f32 %v583, %v625
  %v655 = vadd.f32 %v584, %v625
  %v656 = vadd.f32 %v585, %v625
  %v657 = vadd.f32 %v586, %v625
  %v658 = vadd.f32 %v587, %v625
  %v659 = vadd.f32 %v588, %v625
  %v660 = vadd.f32 %v589, %v625
  %v661 = vadd.f32 %v590, %v625
  %v662 = vadd.f32 %v591, %v625
  %v663 = vadd.f32 %v592, %v625
  %v664 = vadd.f32 %v593, %v625
  %v665 = vadd.f32 %v594, %v625
  %v666 = vadd.f32 %v595, %v625
  %v667 = vadd.f32 %v596, %v625
  %v668 = vadd.f32 %v597, %v625
  %v669 = vadd.f32 %v598, %v625
  %v670 = vadd.f32 %v599, %v625
  %v671 = vadd.f32 %v600, %v625
  %v672 = vadd.f32 %v601, %v625
  %v673 = vadd.f32 %v602, %v625
  %v674 = vadd.f32 %v603, %v625
  %v675 = vadd.f32 %v604, %v625
  %v676 = vadd.f32 %v605, %v625
  %v677 = vadd.f32 %v606, %v625
  %v678 = vadd.f32 %v607, %v625
  %v679 = vadd.f32 %v608, %v625
  %v680 = vadd.f32 %v609, %v625
  %v681 = vadd.f32 %v610, %v625
  %v682 = vadd.f32 %v611, %v625
  %v683 = vadd.f32 %v612, %v625
  %v684 = vadd.f32 %v613, %v625
  %v685 = vadd.f32 %v614, %v625
  %v686 = vadd.f32 %v615, %v625
  %v687 = vadd.f32 %v616, %v625
  %v688 = vadd.f32 %v617, %v625
  %v689 = vadd.f32 %v618, %v625
  %v690 = vadd.f32 %v619, %v625
  %v691 = vadd.f32 %v627, %v167
  %v692 = vadd.f32 %v628, %v172
  %v693 = vadd.f32 %v629, %v177
  %v694 = vadd.f32 %v630, %v182
  %v695 = vadd.f32 %v631, %v187
  %v696 = vadd.f32 %v632, %v192
  %v697 = vadd.f32 %v633, %v197
  %v698 = vadd.f32 %v634, %v202
  %v699 = vadd.f32 %v635, %v207
  %v700 = vadd.f32 %v636, %v212
  %v701 = vadd.f32 %v637, %v217
  %v702 = vadd.f32 %v638, %v222
  %v703 = vadd.f32 %v639, %v227
  %v704 = vadd.f32 %v640, %v232
  %v705 = vadd.f32 %v641, %v237
  %v706 = vadd.f32 %v642, %v242
  %v707 = vadd.f32 %v643, %v247
  %v708 = vadd.f32 %v644, %v252
  %v709 = vadd.f32 %v645, %v257
  %v710 = vadd.f32 %v646, %v262
  %v711 = vadd.f32 %v647, %v267
  %v712 = vadd.f32 %v648, %v272
  %v713 = vadd.f32 %v649, %v277
  %v714 = vadd.f32 %v650, %v282
  %v715 = vadd.f32 %v651, %v287
  %v716 = vadd.f32 %v652, %v292
  %v717 = vadd.f32 %v653, %v297
  %v718 = vadd.f32 %v654, %v302
  %v719 = vadd.f32 %v655, %v307
  %v720 = vadd.f32 %v656, %v312
  %v721 = vadd.f32 %v657, %v317
  %v722 = vadd.f32 %v658, %v322
  %v723 = vadd.f32 %v659, %v327
  %v724 = vadd.f32 %v660, %v332
  %v725 = vadd.f32 %v661, %v337
  %v726 = vadd.f32 %v662, %v342
  %v727 = vadd.f32 %v663, %v347
  %v728 = vadd.f32 %v664, %v352
  %v729 = vadd.f32 %v665, %v357
  %v730 = vadd.f32 %v666, %v362
  %v731 = vadd.f32 %v667, %v367
  %v732 = vadd.f32 %v668, %v372
  %v733 = vadd.f32 %v669, %v377
  %v734 = vadd.f32 %v670, %v382
  %v735 = vadd.f32 %v671, %v387
  %v736 = vadd.f32 %v672, %v392
  %v737 = vadd.f32 %v673, %v397
  %v738 = vadd.f32 %v674, %v402
  %v739 = vadd.f32 %v675, %v407
  %v740 = vadd.f32 %v676, %v412
  %v741 = vadd.f32 %v677, %v417
  %v742 = vadd.f32 %v678, %v422
  %v743 = vadd.f32 %v679, %v427
  %v744 = vadd.f32 %v680, %v432
  %v745 = vadd.f32 %v681, %v437
  %v746 = vadd.f32 %v682, %v442
  %v747 = vadd.f32 %v683, %v447
  %v748 = vadd.f32 %v684, %v452
  %v749 = vadd.f32 %v685, %v457
  %v750 = vadd.f32 %v686, %v462
  %v751 = vadd.f32 %v687, %v467
  %v752 = vadd.f32 %v688, %v472
  %v753 = vadd.f32 %v689, %v477
  %v754 = vadd.f32 %v690, %v482
  %v755 = vmax.f32 %v691, 0.0
  %v756 = vmax.f32 %v692, 0.0
  %v757 = vmax.f32 %v693, 0.0
  %v758 = vmax.f32 %v694, 0.0
  %v759 = vmax.f32 %v695, 0.0
  %v760 = vmax.f32 %v696, 0.0
  %v761 = vmax.f32 %v697, 0.0
  %v762 = vmax.f32 %v698, 0.0
  %v763 = vmax.f32 %v699, 0.0
  %v764 = vmax.f32 %v700, 0.0
  %v765 = vmax.f32 %v701, 0.0
  %v766 = vmax.f32 %v702, 0.0
  %v767 = vmax.f32 %v703, 0.0
  %v768 = vmax.f32 %v704, 0.0
  %v769 = vmax.f32 %v705, 0.0
  %v770 = vmax.f32 %v706, 0.0
  %v771 = vmax.f32 %v707, 0.0
  %v772 = vmax.f32 %v708, 0.0
  %v773 = vmax.f32 %v709, 0.0
  %v774 = vmax.f32 %v710, 0.0
  %v775 = vmax.f32 %v711, 0.0
  %v776 = vmax.f32 %v712, 0.0
  %v777 = vmax.f32 %v713, 0.0
  %v778 = vmax.f32 %v714, 0.0
  %v779 = vmax.f32 %v715, 0.0
  %v780 = vmax.f32 %v716, 0.0
  %v781 = vmax.f32 %v717, 0.0
  %v782 = vmax.f32 %v718, 0.0
  %v783 = vmax.f32 %v719, 0.0
  %v784 = vmax.f32 %v720, 0.0
  %v785 = vmax.f32 %v721, 0.0
  %v786 = vmax.f32 %v722, 0.0
  %v787 = vmax.f32 %v723, 0.0
  %v788 = vmax.f32 %v724, 0.0
  %v789 = vmax.f32 %v725, 0.0
  %v790 = vmax.f32 %v726, 0.0
  %v791 = vmax.f32 %v727, 0.0
  %v792 = vmax.f32 %v728, 0.0
  %v793 = vmax.f32 %v729, 0.0
  %v794 = vmax.f32 %v730, 0.0
  %v795 = vmax.f32 %v731, 0.0
  %v796 = vmax.f32 %v732, 0.0
  %v797 = vmax.f32 %v733, 0.0
  %v798 = vmax.f32 %v734, 0.0
  %v799 = vmax.f32 %v735, 0.0
  %v800 = vmax.f32 %v736, 0.0
  %v801 = vmax.f32 %v737, 0.0
  %v802 = vmax.f32 %v738, 0.0
  %v803 = vmax.f32 %v739, 0.0
  %v804 = vmax.f32 %v740, 0.0
  %v805 = vmax.f32 %v741, 0.0
  %v806 = vmax.f32 %v742, 0.0
  %v807 = vmax.f32 %v743, 0.0
  %v808 = vmax.f32 %v744, 0.0
  %v809 = vmax.f32 %v745, 0.0
  %v810 = vmax.f32 %v746, 0.0
  %v811 = vmax.f32 %v747, 0.0
  %v812 = vmax.f32 %v748, 0.0
  %v813 = vmax.f32 %v749, 0.0
  %v814 = vmax.f32 %v750, 0.0
  %v815 = vmax.f32 %v751, 0.0
  %v816 = vmax.f32 %v752, 0.0
  %v817 = vmax.f32 %v753, 0.0
  %v818 = vmax.f32 %v754, 0.0
  %819 = vst [vmem:[%s5] sm:$0xff] %v755
  %820 = vst [vmem:[%s5 + $0x8] sm:$0xff] %v756
  %821 = vst [vmem:[%s5 + $0x10] sm:$0xff] %v757
  %822 = vst [vmem:[%s5 + $0x18] sm:$0xff] %v758
  %823 = vst [vmem:[%s5 + $0x20] sm:$0xff] %v759
  %824 = vst [vmem:[%s5 + $0x28] sm:$0xff] %v760
  %825 = vst [vmem:[%s5 + $0x30] sm:$0xff] %v761
  %826 = vst [vmem:[%s5 + $0x38] sm:$0xff] %v762
  %827 = vst [vmem:[%s5 + $0x40] sm:$0xff] %v763
  %828 = vst [vmem:[%s5 + $0x48] sm:$0xff] %v764
  %829 = vst [vmem:[%s5 + $0x50] sm:$0xff] %v765
  %830 = vst [vmem:[%s5 + $0x58] sm:$0xff] %v766
  %831 = vst [vmem:[%s5 + $0x60] sm:$0xff] %v767
  %832 = vst [vmem:[%s5 + $0x68] sm:$0xff] %v768
  %833 = vst [vmem:[%s5 + $0x70] sm:$0xff] %v769
  %834 = vst [vmem:[%s5 + $0x78] sm:$0xff] %v770
  %835 = vst [vmem:[%s5 + $0x80] sm:$0xff] %v771
  %836 = vst [vmem:[%s5 + $0x88] sm:$0xff] %v772
  %837 = vst [vmem:[%s5 + $0x90] sm:$0xff] %v773
  %838 = vst [vmem:[%s5 + $0x98] sm:$0xff] %v774
  %839 = vst [vmem:[%s5 + $0xa0] sm:$0xff] %v775
  %840 = vst [vmem:[%s5 + $0xa8] sm:$0xff] %v776
  %841 = vst [vmem:[%s5 + $0xb0] sm:$0xff] %v777
  %842 = vst [vmem:[%s5 + $0xb8] sm:$0xff] %v778
  %843 = vst [vmem:[%s5 + $0xc0] sm:$0xff] %v779
  %844 = vst [vmem:[%s5 + $0xc8] sm:$0xff] %v780
  %845 = vst [vmem:[%s5 + $0xd0] sm:$0xff] %v781
  %846 = vst [vmem:[%s5 + $0xd8] sm:$0xff] %v782
  %847 = vst [vmem:[%s5 + $0xe0] sm:$0xff] %v783
  %848 = vst [vmem:[%s5 + $0xe8] sm:$0xff] %v784
  %849 = vst [vmem:[%s5 + $0xf0] sm:$0xff] %v785
  %850 = vst [vmem:[%s5 + $0xf8] sm:$0xff] %v786
  %851 = vst [vmem:[%s5 + $0x100] sm:$0xff] %v787
  %852 = vst [vmem:[%s5 + $0x108] sm:$0xff] %v788
  %853 = vst [vmem:[%s5 + $0x110] sm:$0xff] %v789
  %854 = vst [vmem:[%s5 + $0x118] sm:$0xff] %v790
  %855 = vst [vmem:[%s5 + $0x120] sm:$0xff] %v791
  %856 = vst [vmem:[%s5 + $0x128] sm:$0xff] %v792
  %857 = vst [vmem:[%s5 + $0x130] sm:$0xff] %v793
  %858 = vst [vmem:[%s5 + $0x138] sm:$0xff] %v794
  %859 = vst [vmem:[%s5 + $0x140] sm:$0xff] %v795
  %860 = vst [vmem:[%s5 + $0x148] sm:$0xff] %v796
  %861 = vst [vmem:[%s5 + $0x150] sm:$0xff] %v797
  %862 = vst [vmem:[%s5 + $0x158] sm:$0xff] %v798
  %863 = vst [vmem:[%s5 + $0x160] sm:$0xff] %v799
  %864 = vst [vmem:[%s5 + $0x168] sm:$0xff] %v800
  %865 = vst [vmem:[%s5 + $0x170] sm:$0xff] %v801
  %866 = vst [vmem:[%s5 + $0x178] sm:$0xff] %v802
  %867 = vst [vmem:[%s5 + $0x180] sm:$0xff] %v803
  %868 = vst [vmem:[%s5 + $0x188] sm:$0xff] %v804
  %869 = vst [vmem:[%s5 + $0x190] sm:$0xff] %v805
  %870 = vst [vmem:[%s5 + $0x198] sm:$0xff] %v806
  %871 = vst [vmem:[%s5 + $0x1a0] sm:$0xff] %v807
  %872 = vst [vmem:[%s5 + $0x1a8] sm:$0xff] %v808
  %873 = vst [vmem:[%s5 + $0x1b0] sm:$0xff] %v809
  %874 = vst [vmem:[%s5 + $0x1b8] sm:$0xff] %v810
  %875 = vst [vmem:[%s5 + $0x1c0] sm:$0xff] %v811
  %876 = vst [vmem:[%s5 + $0x1c8] sm:$0xff] %v812
  %877 = vst [vmem:[%s5 + $0x1d0] sm:$0xff] %v813
  %878 = vst [vmem:[%s5 + $0x1d8] sm:$0xff] %v814
  %879 = vst [vmem:[%s5 + $0x1e0] sm:$0xff] %v815
  %880 = vst [vmem:[%s5 + $0x1e8] sm:$0xff] %v816
  %881 = vst [vmem:[%s5 + $0x1f0] sm:$0xff] %v817
  %882 = vst [vmem:[%s5 + $0x1f8] sm:$0xff] %v818
  // Predicated region
  $region22: #{bottleneck_forward.7} parent=0 // pred_check
    _
  $region23: #{bottleneck_forward.7} parent=0 // pred_check_branch
    %884 = sbr.rel (0) target = $region25
  $region24: #{bottleneck_forward.7} parent=0 // pred_region
    _
  $region25: #{bottleneck_forward.7} parent=0 // pred_fallthru
    _
  // Predicated region
  $region26: #{bottleneck_forward.7} parent=0 // pred_check
    _
  $region27: #{bottleneck_forward.7} parent=0 // pred_check_branch
    %886 = sbr.rel (0) target = $region29
  $region28: #{bottleneck_forward.7} parent=0 // pred_region
    _
  $region29: #{bottleneck_forward.7} parent=0 // pred_fallthru
    _

// kernel: bottleneck_forward.5
$region0: #{bottleneck_forward.5}
  #allocation0 [shape = 'u32[]', space=smem, size = 0x4, offset = 0x4, fixed_abs, tag = 'smem constant byte address 0x4 - core index']
  #allocation1 [shape = 'u32[144,128]{1,0:T(1,128)}', space=vmem, size = 0x12000, scoped, tag = 'internal scratch']
  #allocation2 [shape = 'f32[18,18,128]{2,1,0:T(8,128)}', space=vmem, size = 0x36000, scoped, tag = 'scratch operand']
  %s0 = inlined_call_operand.vmem [shape: f32[2,16,16,128], index: 0, kind: input, shape index: {}]
  %s1 = inlined_call_operand.vmem [shape: f32[1,128], index: 1, kind: input, shape index: {}]
  %s2 = inlined_call_operand.vmem [shape: f32[1,128], index: 2, kind: input, shape index: {}]
  %s3 = inlined_call_operand.vmem [shape: f32[1152,128], index: 3, kind: input, shape index: {}]
  %s4 = inlined_call_operand.vmem [shape: f32[2,16,16,128], index: 4, kind: output, shape index: {0}]
  %s5 = inlined_call_operand.vmem [shape: f32[2,2,128], index: 5, kind: output, shape index: {1}]
  %6 = xla_tuple %s4, %s5
  %s7 = sld [smem:[#allocation0]]
  $region57: #{bottleneck_forward.5} parent=0
    _
  %s9 = ssub.s32 1, %s7
  %s10 = scalar_select 0, %s9, %s7
  loop: start=0, step=1, limit=4
  $region2: #{bottleneck_forward.5} parent=0 // loop_pre_header
    _
  $region3: #{bottleneck_forward.5} parent=0 // loop_header
    %s12 = sphi 0, %s16
    %p13 = scmp.ge.s32.totalorder %s12, 4
    %s22 = sphi 0, %s24
    %s25 = sphi 0, %s22
    %s26 = sphi 0, %s25
    %s42 = sphi 0, %s26
    %s46 = sphi 0, %s46
    %s48 = sphi 0, %s46
    %s49 = sphi 0, %s48
    %s63 = sphi 0, %s49
    %s67 = sphi 0, %s67
    %s69 = sphi 0, %s67
    %s70 = sphi 0, %s69
    %s84 = sphi 0, %s70
    %s88 = sphi 0, %s88
    %s90 = sphi 0, %s88
    %s91 = sphi 0, %s90
    %s105 = sphi 0, %s91
    %s111 = sphi 0, %s113
    %s114 = sphi 0, %s111
    %s115 = sphi 0, %s114
    %s131 = sphi 0, %s115
    %s137 = sphi 0, %s139
    %s140 = sphi 0, %s137
    %s141 = sphi 0, %s140
    %s157 = sphi 0, %s141
  $region4: #{bottleneck_forward.5} parent=0 // loop_header_branch
    %15 = sbr.rel (%p13) target = $region8
  $region5: #{bottleneck_forward.5} parent=0 // loop_body
    %s17 = ssub.s32 %s12, 1
    %s18 = ssub.s32 %s12, 2
    %s19 = sadd.s32 %s12, 1
    %s20 = ssub.s32 %s12, %s19
    %p21 = scmp.eq.s32.totalorder %s20, 0
    %s23 = sadd.s32 %s22, 1
    %s24 = scalar_select %p21, %s22, %s23
    %p27 = pneg %p21
    %p28 = scmp.eq.s32.totalorder %s12, 1
    %p29 = por %p27, %p28
    %p30 = scmp.ne.s32.totalorder %s22, %s25
    %p31 = scmp.eq.s32.totalorder %s12, 0
    %p32 = por %p30, %p31
    %p33 = scmp.ne.s32.totalorder %s22, %s25
    %p34 = scmp.eq.s32.totalorder %s17, 1
    %p35 = por %p33, %p34
    %p36 = scmp.ne.s32.totalorder %s25, %s26
    %p37 = scmp.eq.s32.totalorder %s17, 0
    %p38 = por %p36, %p37
    %p39 = scmp.ne.s32.totalorder %s25, %s26
    %p40 = scmp.eq.s32.totalorder %s18, 1
    %p41 = por %p39, %p40
    %p43 = scmp.ne.s32.totalorder %s26, %s42
    %p44 = scmp.eq.s32.totalorder %s18, 0
    %p45 = por %p43, %p44
    %s47 = sadd.s32 %s46, 1
    %p50 = scmp.eq.s32.totalorder %s12, 1
    %p51 = scmp.ne.s32.totalorder %s46, %s48
    %p52 = scmp.eq.s32.totalorder %s12, 0
    %p53 = por %p51, %p52
    %p54 = scmp.ne.s32.totalorder %s46, %s48
    %p55 = scmp.eq.s32.totalorder %s17, 1
    %p56 = por %p54, %p55
    %p57 = scmp.ne.s32.totalorder %s48, %s49
    %p58 = scmp.eq.s32.totalorder %s17, 0
    %p59 = por %p57, %p58
    %p60 = scmp.ne.s32.totalorder %s48, %s49
    %p61 = scmp.eq.s32.totalorder %s18, 1
    %p62 = por %p60, %p61
    %p64 = scmp.ne.s32.totalorder %s49, %s63
    %p65 = scmp.eq.s32.totalorder %s18, 0
    %p66 = por %p64, %p65
    %s68 = sadd.s32 %s67, 1
    %p71 = scmp.eq.s32.totalorder %s12, 1
    %p72 = scmp.ne.s32.totalorder %s67, %s69
    %p73 = scmp.eq.s32.totalorder %s12, 0
    %p74 = por %p72, %p73
    %p75 = scmp.ne.s32.totalorder %s67, %s69
    %p76 = scmp.eq.s32.totalorder %s17, 1
    %p77 = por %p75, %p76
    %p78 = scmp.ne.s32.totalorder %s69, %s70
    %p79 = scmp.eq.s32.totalorder %s17, 0
    %p80 = por %p78, %p79
    %p81 = scmp.ne.s32.totalorder %s69, %s70
    %p82 = scmp.eq.s32.totalorder %s18, 1
    %p83 = por %p81, %p82
    %p85 = scmp.ne.s32.totalorder %s70, %s84
    %p86 = scmp.eq.s32.totalorder %s18, 0
    %p87 = por %p85, %p86
    %s89 = sadd.s32 %s88, 1
    %p92 = scmp.eq.s32.totalorder %s12, 1
    %p93 = scmp.ne.s32.totalorder %s88, %s90
    %p94 = scmp.eq.s32.totalorder %s12, 0
    %p95 = por %p93, %p94
    %p96 = scmp.ne.s32.totalorder %s88, %s90
    %p97 = scmp.eq.s32.totalorder %s17, 1
    %p98 = por %p96, %p97
    %p99 = scmp.ne.s32.totalorder %s90, %s91
    %p100 = scmp.eq.s32.totalorder %s17, 0
    %p101 = por %p99, %p100
    %p102 = scmp.ne.s32.totalorder %s90, %s91
    %p103 = scmp.eq.s32.totalorder %s18, 1
    %p104 = por %p102, %p103
    %p106 = scmp.ne.s32.totalorder %s91, %s105
    %p107 = scmp.eq.s32.totalorder %s18, 0
    %p108 = por %p106, %p107
    %s109 = ssub.s32 %s12, %s19
    %p110 = scmp.eq.s32.totalorder %s109, 0
    %s112 = sadd.s32 %s111, 1
    %s113 = scalar_select %p110, %s111, %s112
    %p116 = pneg %p110
    %p117 = scmp.eq.s32.totalorder %s12, 1
    %p118 = por %p116, %p117
    %p119 = scmp.ne.s32.totalorder %s111, %s114
    %p120 = scmp.eq.s32.totalorder %s12, 0
    %p121 = por %p119, %p120
    %p122 = scmp.ne.s32.totalorder %s111, %s114
    %p123 = scmp.eq.s32.totalorder %s17, 1
    %p124 = por %p122, %p123
    %p125 = scmp.ne.s32.totalorder %s114, %s115
    %p126 = scmp.eq.s32.totalorder %s17, 0
    %p127 = por %p125, %p126
    %p128 = scmp.ne.s32.totalorder %s114, %s115
    %p129 = scmp.eq.s32.totalorder %s18, 1
    %p130 = por %p128, %p129
    %p132 = scmp.ne.s32.totalorder %s115, %s131
    %p133 = scmp.eq.s32.totalorder %s18, 0
    %p134 = por %p132, %p133
    %s135 = ssub.s32 %s12, %s19
    %p136 = scmp.eq.s32.totalorder %s135, 0
    %s138 = sadd.s32 %s137, 1
    %s139 = scalar_select %p136, %s137, %s138
    %p142 = pneg %p136
    %p143 = scmp.eq.s32.totalorder %s12, 1
    %p144 = por %p142, %p143
    %p145 = scmp.ne.s32.totalorder %s137, %s140
    %p146 = scmp.eq.s32.totalorder %s12, 0
    %p147 = por %p145, %p146
    %p148 = scmp.ne.s32.totalorder %s137, %s140
    %p149 = scmp.eq.s32.totalorder %s17, 1
    %p150 = por %p148, %p149
    %p151 = scmp.ne.s32.totalorder %s140, %s141
    %p152 = scmp.eq.s32.totalorder %s17, 0
    %p153 = por %p151, %p152
    %p154 = scmp.ne.s32.totalorder %s140, %s141
    %p155 = scmp.eq.s32.totalorder %s18, 1
    %p156 = por %p154, %p155
    %p158 = scmp.ne.s32.totalorder %s141, %s157
    %p159 = scmp.eq.s32.totalorder %s18, 0
    %p160 = por %p158, %p159
    %p161 = scmp.le.s32.totalorder 1, %s12
    %p162 = scmp.lt.s32.totalorder %s12, 3
    %p163 = pnand %p161, %p162
    %p164 = pneg %p163
    // Predicated region
    $region9: #{bottleneck_forward.5} parent=5 // pred_check
      _
    $region10: #{bottleneck_forward.5} parent=5 // pred_check_branch
      %166 = sbr.rel (%p163) target = $region12
    $region11: #{bottleneck_forward.5} parent=5 // pred_region
      %s167 = ssub.s32 %s12, 1
      // Predicated region
      $region13: #{bottleneck_forward.5} parent=11 // pred_check
        %p168 = pneg %p59
      $region14: #{bottleneck_forward.5} parent=11 // pred_check_branch
        %170 = sbr.rel (%p168) target = $region16
      $region15: #{bottleneck_forward.5} parent=11 // pred_region
        _
      $region16: #{bottleneck_forward.5} parent=11 // pred_fallthru
        _
      // Predicated region
      $region17: #{bottleneck_forward.5} parent=11 // pred_check
        %p171 = pneg %p80
      $region18: #{bottleneck_forward.5} parent=11 // pred_check_branch
        %173 = sbr.rel (%p171) target = $region20
      $region19: #{bottleneck_forward.5} parent=11 // pred_region
        _
      $region20: #{bottleneck_forward.5} parent=11 // pred_fallthru
        _
      // Predicated region
      $region21: #{bottleneck_forward.5} parent=11 // pred_check
        %p174 = pneg %p101
      $region22: #{bottleneck_forward.5} parent=11 // pred_check_branch
        %176 = sbr.rel (%p174) target = $region24
      $region23: #{bottleneck_forward.5} parent=11 // pred_region
        _
      $region24: #{bottleneck_forward.5} parent=11 // pred_fallthru
        _
    $region12: #{bottleneck_forward.5} parent=5 // pred_fallthru
      _
    %p177 = scmp.lt.s32.totalorder %s12, 2
    // Predicated region
    $region25: #{bottleneck_forward.5} parent=5 // pred_check
      %p178 = pneg %p177
    $region26: #{bottleneck_forward.5} parent=5 // pred_check_branch
      %180 = sbr.rel (%p178) target = $region28
    $region27: #{bottleneck_forward.5} parent=5 // pred_region
      // Predicated region
      $region29: #{bottleneck_forward.5} parent=27 // pred_check
        %p181 = pneg %p32
      $region30: #{bottleneck_forward.5} parent=27 // pred_check_branch
        %183 = sbr.rel (%p181) target = $region32
      $region31: #{bottleneck_forward.5} parent=27 // pred_region
        %p184 = scmp.lt.s32.totalorder %s12, 1
        %s185 = scalar_select %p184, %s12, 1
        %s186 = smul.addr %s185, 32
        %s187 = smul.addr %s186, 8
        %s188 = scalar_lea.vmem %s0, %s187
      $region32: #{bottleneck_forward.5} parent=27 // pred_fallthru
        _
    $region28: #{bottleneck_forward.5} parent=5 // pred_fallthru
      _
    %p189 = scmp.le.s32.totalorder 1, %s12
    %p190 = scmp.lt.s32.totalorder %s12, 3
    %p191 = pnand %p189, %p190
    %p192 = pneg %p191
    // Predicated region
    $region33: #{bottleneck_forward.5} parent=5 // pred_check
      _
    $region34: #{bottleneck_forward.5} parent=5 // pred_check_branch
      %194 = sbr.rel (%p191) target = $region36
    $region35: #{bottleneck_forward.5} parent=5 // pred_region
      %s195 = ssub.s32 %s12, 1
      %p196 = scmp.lt.s32.totalorder %s17, 1
      %s197 = scalar_select %p196, %s17, 1
      %s198 = smul.addr %s197, 32
      %s199 = smul.addr %s198, 8
      %s200 = scalar_lea.vmem %s0, %s199
      %p201 = pneg %p38
      %p202 = pneg %p35
      %p203 = pneg %p59
      %p204 = pneg %p56
      %p205 = pneg %p80
      %p206 = pneg %p77
      %p207 = pneg %p101
      %p208 = pneg %p98
      %p209 = pneg %p127
      %p210 = pneg %p124
      %p211 = scmp.lt.s32.totalorder %s17, 1
      %s212 = scalar_select %p211, %s17, 1
      %s213 = smul.addr %s212, 32
      %s214 = smul.addr %s213, 8
      %s215 = scalar_lea.vmem %s4, %s214
      %p216 = pneg %p153
      %p217 = pneg %p150
      %p218 = scmp.lt.s32.totalorder %s17, 1
      %s219 = scalar_select %p218, %s17, 1
      %s220 = smul.addr %s219, 2
      %s221 = scalar_lea.vmem %s5, %s220
      %p222 = scmp.lt.s32.totalorder %s17, 1
      %s223 = scalar_select %p222, %s17, 1
      %s224 = smul.addr %s223, 32
      %s225 = smul.addr %s224, 8
      %s226 = scalar_lea.vmem %s0, %s225
      %p227 = scmp.lt.s32.totalorder %s17, 1
      %s228 = scalar_select %p227, %s17, 1
      %s229 = smul.addr %s228, 32
      %s230 = smul.addr %s229, 8
      %s231 = scalar_lea.vmem %s4, %s230
      %p232 = scmp.lt.s32.totalorder %s17, 1
      %s233 = scalar_select %p232, %s17, 1
      %s234 = smul.addr %s233, 2
      %s235 = scalar_lea.vmem %s5, %s234
      %v236 = vld [vmem:[%s226] sm:$0xff]
      %v237 = vld [vmem:[%s226 + $0x8] sm:$0xff]
      %v238 = vld [vmem:[%s226 + $0x10] sm:$0xff]
      %v239 = vld [vmem:[%s226 + $0x18] sm:$0xff]
      %v240 = vld [vmem:[%s226 + $0x20] sm:$0xff]
      %v241 = vld [vmem:[%s226 + $0x28] sm:$0xff]
      %v242 = vld [vmem:[%s226 + $0x30] sm:$0xff]
      %v243 = vld [vmem:[%s226 + $0x38] sm:$0xff]
      %v244 = vld [vmem:[%s226 + $0x40] sm:$0xff]
      %v245 = vld [vmem:[%s226 + $0x48] sm:$0xff]
      %v246 = vld [vmem:[%s226 + $0x50] sm:$0xff]
      %v247 = vld [vmem:[%s226 + $0x58] sm:$0xff]
      %v248 = vld [vmem:[%s226 + $0x60] sm:$0xff]
      %v249 = vld [vmem:[%s226 + $0x68] sm:$0xff]
      %v250 = vld [vmem:[%s226 + $0x70] sm:$0xff]
      %v251 = vld [vmem:[%s226 + $0x78] sm:$0xff]
      %v252 = vld [vmem:[%s226 + $0x80] sm:$0xff]
      %v253 = vld [vmem:[%s226 + $0x88] sm:$0xff]
      %v254 = vld [vmem:[%s226 + $0x90] sm:$0xff]
      %v255 = vld [vmem:[%s226 + $0x98] sm:$0xff]
      %v256 = vld [vmem:[%s226 + $0xa0] sm:$0xff]
      %v257 = vld [vmem:[%s226 + $0xa8] sm:$0xff]
      %v258 = vld [vmem:[%s226 + $0xb0] sm:$0xff]
      %v259 = vld [vmem:[%s226 + $0xb8] sm:$0xff]
      %v260 = vld [vmem:[%s226 + $0xc0] sm:$0xff]
      %v261 = vld [vmem:[%s226 + $0xc8] sm:$0xff]
      %v262 = vld [vmem:[%s226 + $0xd0] sm:$0xff]
      %v263 = vld [vmem:[%s226 + $0xd8] sm:$0xff]
      %v264 = vld [vmem:[%s226 + $0xe0] sm:$0xff]
      %v265 = vld [vmem:[%s226 + $0xe8] sm:$0xff]
      %v266 = vld [vmem:[%s226 + $0xf0] sm:$0xff]
      %v267 = vld [vmem:[%s226 + $0xf8] sm:$0xff]
      %v268 = vld [vmem:[%s1] sm:$0x1]
      %v270 = vlaneseq
      %v271 = vshrl.u32 %v270, 7
      %v272 = vsub.s32 0, %v271
      %v273 = vrot.slane %v268, %v272
      %v275 = vmul.f32 %v236, %v273
      %v276 = vmul.f32 %v237, %v273
      %v277 = vmul.f32 %v238, %v273
      %v278 = vmul.f32 %v239, %v273
      %v279 = vmul.f32 %v240, %v273
      %v280 = vmul.f32 %v241, %v273
      %v281 = vmul.f32 %v242, %v273
      %v282 = vmul.f32 %v243, %v273
      %v283 = vmul.f32 %v244, %v273
      %v284 = vmul.f32 %v245, %v273
      %v285 = vmul.f32 %v246, %v273
      %v286 = vmul.f32 %v247, %v273
      %v287 = vmul.f32 %v248, %v273
      %v288 = vmul.f32 %v249, %v273
      %v289 = vmul.f32 %v250, %v273
      %v290 = vmul.f32 %v251, %v273
      %v291 = vmul.f32 %v252, %v273
      %v292 = vmul.f32 %v253, %v273
      %v293 = vmul.f32 %v254, %v273
      %v294 = vmul.f32 %v255, %v273
      %v295 = vmul.f32 %v256, %v273
      %v296 = vmul.f32 %v257, %v273
      %v297 = vmul.f32 %v258, %v273
      %v298 = vmul.f32 %v259, %v273
      %v299 = vmul.f32 %v260, %v273
      %v300 = vmul.f32 %v261, %v273
      %v301 = vmul.f32 %v262, %v273
      %v302 = vmul.f32 %v263, %v273
      %v303 = vmul.f32 %v264, %v273
      %v304 = vmul.f32 %v265, %v273
      %v305 = vmul.f32 %v266, %v273
      %v306 = vmul.f32 %v267, %v273
      %v307 = vld [vmem:[%s2] sm:$0x1]
      %v309 = vlaneseq
      %v310 = vshrl.u32 %v309, 7
      %v311 = vsub.s32 0, %v310
      %v312 = vrot.slane %v307, %v311
      %v314 = vadd.f32 %v275, %v312
      %v315 = vadd.f32 %v276, %v312
      %v316 = vadd.f32 %v277, %v312
      %v317 = vadd.f32 %v278, %v312
      %v318 = vadd.f32 %v279, %v312
      %v319 = vadd.f32 %v280, %v312
      %v320 = vadd.f32 %v281, %v312
      %v321 = vadd.f32 %v282, %v312
      %v322 = vadd.f32 %v283, %v312
      %v323 = vadd.f32 %v284, %v312
      %v324 = vadd.f32 %v285, %v312
      %v325 = vadd.f32 %v286, %v312
      %v326 = vadd.f32 %v287, %v312
      %v327 = vadd.f32 %v288, %v312
      %v328 = vadd.f32 %v289, %v312
      %v329 = vadd.f32 %v290, %v312
      %v330 = vadd.f32 %v291, %v312
      %v331 = vadd.f32 %v292, %v312
      %v332 = vadd.f32 %v293, %v312
      %v333 = vadd.f32 %v294, %v312
      %v334 = vadd.f32 %v295, %v312
      %v335 = vadd.f32 %v296, %v312
      %v336 = vadd.f32 %v297, %v312
      %v337 = vadd.f32 %v298, %v312
      %v338 = vadd.f32 %v299, %v312
      %v339 = vadd.f32 %v300, %v312
      %v340 = vadd.f32 %v301, %v312
      %v341 = vadd.f32 %v302, %v312
      %v342 = vadd.f32 %v303, %v312
      %v343 = vadd.f32 %v304, %v312
      %v344 = vadd.f32 %v305, %v312
      %v345 = vadd.f32 %v306, %v312
      %v346 = vmax.f32 %v314, 0.0
      %v347 = vmax.f32 %v315, 0.0
      %v348 = vmax.f32 %v316, 0.0
      %v349 = vmax.f32 %v317, 0.0
      %v350 = vmax.f32 %v318, 0.0
      %v351 = vmax.f32 %v319, 0.0
      %v352 = vmax.f32 %v320, 0.0
      %v353 = vmax.f32 %v321, 0.0
      %v354 = vmax.f32 %v322, 0.0
      %v355 = vmax.f32 %v323, 0.0
      %v356 = vmax.f32 %v324, 0.0
      %v357 = vmax.f32 %v325, 0.0
      %v358 = vmax.f32 %v326, 0.0
      %v359 = vmax.f32 %v327, 0.0
      %v360 = vmax.f32 %v328, 0.0
      %v361 = vmax.f32 %v329, 0.0
      %v362 = vmax.f32 %v330, 0.0
      %v363 = vmax.f32 %v331, 0.0
      %v364 = vmax.f32 %v332, 0.0
      %v365 = vmax.f32 %v333, 0.0
      %v366 = vmax.f32 %v334, 0.0
      %v367 = vmax.f32 %v335, 0.0
      %v368 = vmax.f32 %v336, 0.0
      %v369 = vmax.f32 %v337, 0.0
      %v370 = vmax.f32 %v338, 0.0
      %v371 = vmax.f32 %v339, 0.0
      %v372 = vmax.f32 %v340, 0.0
      %v373 = vmax.f32 %v341, 0.0
      %v374 = vmax.f32 %v342, 0.0
      %v375 = vmax.f32 %v343, 0.0
      %v376 = vmax.f32 %v344, 0.0
      %v377 = vmax.f32 %v345, 0.0
      %378 = vst [vmem:[#allocation2] sm:$0xff] 0.0
      %379 = vst [vmem:[#allocation2 + $0x8] sm:$0xff] 0.0
      %380 = vst [vmem:[#allocation2 + $0x10] sm:$0x3] 0.0
      %s381 = scalar_lea.vmem [#allocation2], 408
      %382 = vst [vmem:[%s381] sm:$0xff] 0.0
      %383 = vst [vmem:[%s381 + $0x8] sm:$0xff] 0.0
      %384 = vst [vmem:[%s381 + $0x10] sm:$0x3] 0.0
      %s385 = scalar_lea.vmem [#allocation2], 24
      %386 = vst [vmem:[%s385] sm:$0x1] 0.0
      %387 = vst [vmem:[%s385 + $0x18] sm:$0x1] 0.0
      %388 = vst [vmem:[%s385 + $0x30] sm:$0x1] 0.0
      %389 = vst [vmem:[%s385 + $0x48] sm:$0x1] 0.0
      %390 = vst [vmem:[%s385 + $0x60] sm:$0x1] 0.0
      %391 = vst [vmem:[%s385 + $0x78] sm:$0x1] 0.0
      %392 = vst [vmem:[%s385 + $0x90] sm:$0x1] 0.0
      %393 = vst [vmem:[%s385 + $0xa8] sm:$0x1] 0.0
      %394 = vst [vmem:[%s385 + $0xc0] sm:$0x1] 0.0
      %395 = vst [vmem:[%s385 + $0xd8] sm:$0x1] 0.0
      %396 = vst [vmem:[%s385 + $0xf0] sm:$0x1] 0.0
      %397 = vst [vmem:[%s385 + $0x108] sm:$0x1] 0.0
      %398 = vst [vmem:[%s385 + $0x120] sm:$0x1] 0.0
      %399 = vst [vmem:[%s385 + $0x138] sm:$0x1] 0.0
      %400 = vst [vmem:[%s385 + $0x150] sm:$0x1] 0.0
      %401 = vst [vmem:[%s385 + $0x168] sm:$0x1] 0.0
      %402 = vst [vmem:[%s385 + $0x11] sm:$0x1] 0.0
      %403 = vst [vmem:[%s385 + $0x29] sm:$0x1] 0.0
      %404 = vst [vmem:[%s385 + $0x41] sm:$0x1] 0.0
      %405 = vst [vmem:[%s385 + $0x59] sm:$0x1] 0.0
      %406 = vst [vmem:[%s385 + $0x71] sm:$0x1] 0.0
      %407 = vst [vmem:[%s385 + $0x89] sm:$0x1] 0.0
      %408 = vst [vmem:[%s385 + $0xa1] sm:$0x1] 0.0
      %409 = vst [vmem:[%s385 + $0xb9] sm:$0x1] 0.0
      %410 = vst [vmem:[%s385 + $0xd1] sm:$0x1] 0.0
      %411 = vst [vmem:[%s385 + $0xe9] sm:$0x1] 0.0
      %412 = vst [vmem:[%s385 + $0x101] sm:$0x1] 0.0
      %413 = vst [vmem:[%s385 + $0x119] sm:$0x1] 0.0
      %414 = vst [vmem:[%s385 + $0x131] sm:$0x1] 0.0
      %415 = vst [vmem:[%s385 + $0x149] sm:$0x1] 0.0
      %416 = vst [vmem:[%s385 + $0x161] sm:$0x1] 0.0
      %417 = vst [vmem:[%s385 + $0x179] sm:$0x1] 0.0
      %418 = vst [vmem:[%s385 + $0x1] sm:$0xff] %v346
      %419 = vst [vmem:[%s385 + $0x9] sm:$0xff] %v347
      %420 = vst [vmem:[%s385 + $0x19] sm:$0xff] %v348
      %421 = vst [vmem:[%s385 + $0x21] sm:$0xff] %v349
      %422 = vst [vmem:[%s385 + $0x31] sm:$0xff] %v350
      %423 = vst [vmem:[%s385 + $0x39] sm:$0xff] %v351
      %424 = vst [vmem:[%s385 + $0x49] sm:$0xff] %v352
      %425 = vst [vmem:[%s385 + $0x51] sm:$0xff] %v353
      %426 = vst [vmem:[%s385 + $0x61] sm:$0xff] %v354
      %427 = vst [vmem:[%s385 + $0x69] sm:$0xff] %v355
      %428 = vst [vmem:[%s385 + $0x79] sm:$0xff] %v356
      %429 = vst [vmem:[%s385 + $0x81] sm:$0xff] %v357
      %430 = vst [vmem:[%s385 + $0x91] sm:$0xff] %v358
      %431 = vst [vmem:[%s385 + $0x99] sm:$0xff] %v359
      %432 = vst [vmem:[%s385 + $0xa9] sm:$0xff] %v360
      %433 = vst [vmem:[%s385 + $0xb1] sm:$0xff] %v361
      %434 = vst [vmem:[%s385 + $0xc1] sm:$0xff] %v362
      %435 = vst [vmem:[%s385 + $0xc9] sm:$0xff] %v363
      %436 = vst [vmem:[%s385 + $0xd9] sm:$0xff] %v364
      %437 = vst [vmem:[%s385 + $0xe1] sm:$0xff] %v365
      %438 = vst [vmem:[%s385 + $0xf1] sm:$0xff] %v366
      %439 = vst [vmem:[%s385 + $0xf9] sm:$0xff] %v367
      %440 = vst [vmem:[%s385 + $0x109] sm:$0xff] %v368
      %441 = vst [vmem:[%s385 + $0x111] sm:$0xff] %v369
      %442 = vst [vmem:[%s385 + $0x121] sm:$0xff] %v370
      %443 = vst [vmem:[%s385 + $0x129] sm:$0xff] %v371
      %444 = vst [vmem:[%s385 + $0x139] sm:$0xff] %v372
      %445 = vst [vmem:[%s385 + $0x141] sm:$0xff] %v373
      %446 = vst [vmem:[%s385 + $0x151] sm:$0xff] %v374
      %447 = vst [vmem:[%s385 + $0x159] sm:$0xff] %v375
      %448 = vst [vmem:[%s385 + $0x169] sm:$0xff] %v376
      %449 = vst [vmem:[%s385 + $0x171] sm:$0xff] %v377
      %v450 = vld [vmem:[#allocation2] sm:$0xff]
      %v451 = vld [vmem:[#allocation2 + $0x8] sm:$0xff]
      %v452 = vld [vmem:[#allocation2 + $0x18] sm:$0xff]
      %v453 = vld [vmem:[#allocation2 + $0x20] sm:$0xff]
      %v454 = vld [vmem:[#allocation2 + $0x30] sm:$0xff]
      %v455 = vld [vmem:[#allocation2 + $0x38] sm:$0xff]
      %v456 = vld [vmem:[#allocation2 + $0x48] sm:$0xff]
      %v457 = vld [vmem:[#allocation2 + $0x50] sm:$0xff]
      %v458 = vld [vmem:[#allocation2 + $0x60] sm:$0xff]
      %v459 = vld [vmem:[#allocation2 + $0x68] sm:$0xff]
      %v460 = vld [vmem:[#allocation2 + $0x78] sm:$0xff]
      %v461 = vld [vmem:[#allocation2 + $0x80] sm:$0xff]
      %v462 = vld [vmem:[#allocation2 + $0x90] sm:$0xff]
      %v463 = vld [vmem:[#allocation2 + $0x98] sm:$0xff]
      %v464 = vld [vmem:[#allocation2 + $0xa8] sm:$0xff]
      %v465 = vld [vmem:[#allocation2 + $0xb0] sm:$0xff]
      %v466 = vld [vmem:[#allocation2 + $0xc0] sm:$0xff]
      %v467 = vld [vmem:[#allocation2 + $0xc8] sm:$0xff]
      %v468 = vld [vmem:[#allocation2 + $0xd8] sm:$0xff]
      %v469 = vld [vmem:[#allocation2 + $0xe0] sm:$0xff]
      %v470 = vld [vmem:[#allocation2 + $0xf0] sm:$0xff]
      %v471 = vld [vmem:[#allocation2 + $0xf8] sm:$0xff]
      %v472 = vld [vmem:[#allocation2 + $0x108] sm:$0xff]
      %v473 = vld [vmem:[#allocation2 + $0x110] sm:$0xff]
      %v474 = vld [vmem:[#allocation2 + $0x120] sm:$0xff]
      %v475 = vld [vmem:[#allocation2 + $0x128] sm:$0xff]
      %v476 = vld [vmem:[#allocation2 + $0x138] sm:$0xff]
      %v477 = vld [vmem:[#allocation2 + $0x140] sm:$0xff]
      %v478 = vld [vmem:[#allocation2 + $0x150] sm:$0xff]
      %v479 = vld [vmem:[#allocation2 + $0x158] sm:$0xff]
      %v480 = vld [vmem:[#allocation2 + $0x168] sm:$0xff]
      %v481 = vld [vmem:[#allocation2 + $0x170] sm:$0xff]
      %v482 = vld [vmem:[#allocation2 + $0x1] sm:$0xff]
      %v483 = vld [vmem:[#allocation2 + $0x9] sm:$0xff]
      %v484 = vld [vmem:[#allocation2 + $0x19] sm:$0xff]
      %v485 = vld [vmem:[#allocation2 + $0x21] sm:$0xff]
      %v486 = vld [vmem:[#allocation2 + $0x31] sm:$0xff]
      %v487 = vld [vmem:[#allocation2 + $0x39] sm:$0xff]
      %v488 = vld [vmem:[#allocation2 + $0x49] sm:$0xff]
      %v489 = vld [vmem:[#allocation2 + $0x51] sm:$0xff]
      %v490 = vld [vmem:[#allocation2 + $0x61] sm:$0xff]
      %v491 = vld [vmem:[#allocation2 + $0x69] sm:$0xff]
      %v492 = vld [vmem:[#allocation2 + $0x79] sm:$0xff]
      %v493 = vld [vmem:[#allocation2 + $0x81] sm:$0xff]
      %v494 = vld [vmem:[#allocation2 + $0x91] sm:$0xff]
      %v495 = vld [vmem:[#allocation2 + $0x99] sm:$0xff]
      %v496 = vld [vmem:[#allocation2 + $0xa9] sm:$0xff]
      %v497 = vld [vmem:[#allocation2 + $0xb1] sm:$0xff]
      %v498 = vld [vmem:[#allocation2 + $0xc1] sm:$0xff]
      %v499 = vld [vmem:[#allocation2 + $0xc9] sm:$0xff]
      %v500 = vld [vmem:[#allocation2 + $0xd9] sm:$0xff]
      %v501 = vld [vmem:[#allocation2 + $0xe1] sm:$0xff]
      %v502 = vld [vmem:[#allocation2 + $0xf1] sm:$0xff]
      %v503 = vld [vmem:[#allocation2 + $0xf9] sm:$0xff]
      %v504 = vld [vmem:[#allocation2 + $0x109] sm:$0xff]
      %v505 = vld [vmem:[#allocation2 + $0x111] sm:$0xff]
      %v506 = vld [vmem:[#allocation2 + $0x121] sm:$0xff]
      %v507 = vld [vmem:[#allocation2 + $0x129] sm:$0xff]
      %v508 = vld [vmem:[#allocation2 + $0x139] sm:$0xff]
      %v509 = vld [vmem:[#allocation2 + $0x141] sm:$0xff]
      %v510 = vld [vmem:[#allocation2 + $0x151] sm:$0xff]
      %v511 = vld [vmem:[#allocation2 + $0x159] sm:$0xff]
      %v512 = vld [vmem:[#allocation2 + $0x169] sm:$0xff]
      %v513 = vld [vmem:[#allocation2 + $0x171] sm:$0xff]
      %v514 = vld [vmem:[#allocation2 + $0x2] sm:$0xff]
      %v515 = vld [vmem:[#allocation2 + $0xa] sm:$0xff]
      %v516 = vld [vmem:[#allocation2 + $0x1a] sm:$0xff]
      %v517 = vld [vmem:[#allocation2 + $0x22] sm:$0xff]
      %v518 = vld [vmem:[#allocation2 + $0x32] sm:$0xff]
      %v519 = vld [vmem:[#allocation2 + $0x3a] sm:$0xff]
      %v520 = vld [vmem:[#allocation2 + $0x4a] sm:$0xff]
      %v521 = vld [vmem:[#allocation2 + $0x52] sm:$0xff]
      %v522 = vld [vmem:[#allocation2 + $0x62] sm:$0xff]
      %v523 = vld [vmem:[#allocation2 + $0x6a] sm:$0xff]
      %v524 = vld [vmem:[#allocation2 + $0x7a] sm:$0xff]
      %v525 = vld [vmem:[#allocation2 + $0x82] sm:$0xff]
      %v526 = vld [vmem:[#allocation2 + $0x92] sm:$0xff]
      %v527 = vld [vmem:[#allocation2 + $0x9a] sm:$0xff]
      %v528 = vld [vmem:[#allocation2 + $0xaa] sm:$0xff]
      %v529 = vld [vmem:[#allocation2 + $0xb2] sm:$0xff]
      %v530 = vld [vmem:[#allocation2 + $0xc2] sm:$0xff]
      %v531 = vld [vmem:[#allocation2 + $0xca] sm:$0xff]
      %v532 = vld [vmem:[#allocation2 + $0xda] sm:$0xff]
      %v533 = vld [vmem:[#allocation2 + $0xe2] sm:$0xff]
      %v534 = vld [vmem:[#allocation2 + $0xf2] sm:$0xff]
      %v535 = vld [vmem:[#allocation2 + $0xfa] sm:$0xff]
      %v536 = vld [vmem:[#allocation2 + $0x10a] sm:$0xff]
      %v537 = vld [vmem:[#allocation2 + $0x112] sm:$0xff]
      %v538 = vld [vmem:[#allocation2 + $0x122] sm:$0xff]
      %v539 = vld [vmem:[#allocation2 + $0x12a] sm:$0xff]
      %v540 = vld [vmem:[#allocation2 + $0x13a] sm:$0xff]
      %v541 = vld [vmem:[#allocation2 + $0x142] sm:$0xff]
      %v542 = vld [vmem:[#allocation2 + $0x152] sm:$0xff]
      %v543 = vld [vmem:[#allocation2 + $0x15a] sm:$0xff]
      %v544 = vld [vmem:[#allocation2 + $0x16a] sm:$0xff]
      %v545 = vld [vmem:[#allocation2 + $0x172] sm:$0xff]
      %v546 = vld [vmem:[%s385] sm:$0xff]
      %v547 = vld [vmem:[%s385 + $0x8] sm:$0xff]
      %v548 = vld [vmem:[%s385 + $0x18] sm:$0xff]
      %v549 = vld [vmem:[%s385 + $0x20] sm:$0xff]
      %v550 = vld [vmem:[%s385 + $0x30] sm:$0xff]
      %v551 = vld [vmem:[%s385 + $0x38] sm:$0xff]
      %v552 = vld [vmem:[%s385 + $0x48] sm:$0xff]
      %v553 = vld [vmem:[%s385 + $0x50] sm:$0xff]
      %v554 = vld [vmem:[%s385 + $0x60] sm:$0xff]
      %v555 = vld [vmem:[%s385 + $0x68] sm:$0xff]
      %v556 = vld [vmem:[%s385 + $0x78] sm:$0xff]
      %v557 = vld [vmem:[%s385 + $0x80] sm:$0xff]
      %v558 = vld [vmem:[%s385 + $0x90] sm:$0xff]
      %v559 = vld [vmem:[%s385 + $0x98] sm:$0xff]
      %v560 = vld [vmem:[%s385 + $0xa8] sm:$0xff]
      %v561 = vld [vmem:[%s385 + $0xb0] sm:$0xff]
      %v562 = vld [vmem:[%s385 + $0xc0] sm:$0xff]
      %v563 = vld [vmem:[%s385 + $0xc8] sm:$0xff]
      %v564 = vld [vmem:[%s385 + $0xd8] sm:$0xff]
      %v565 = vld [vmem:[%s385 + $0xe0] sm:$0xff]
      %v566 = vld [vmem:[%s385 + $0xf0] sm:$0xff]
      %v567 = vld [vmem:[%s385 + $0xf8] sm:$0xff]
      %v568 = vld [vmem:[%s385 + $0x108] sm:$0xff]
      %v569 = vld [vmem:[%s385 + $0x110] sm:$0xff]
      %v570 = vld [vmem:[%s385 + $0x120] sm:$0xff]
      %v571 = vld [vmem:[%s385 + $0x128] sm:$0xff]
      %v572 = vld [vmem:[%s385 + $0x138] sm:$0xff]
      %v573 = vld [vmem:[%s385 + $0x140] sm:$0xff]
      %v574 = vld [vmem:[%s385 + $0x150] sm:$0xff]
      %v575 = vld [vmem:[%s385 + $0x158] sm:$0xff]
      %v576 = vld [vmem:[%s385 + $0x168] sm:$0xff]
      %v577 = vld [vmem:[%s385 + $0x170] sm:$0xff]
      %v578 = vld [vmem:[%s385 + $0x1] sm:$0xff]
      %v579 = vld [vmem:[%s385 + $0x9] sm:$0xff]
      %v580 = vld [vmem:[%s385 + $0x19] sm:$0xff]
      %v581 = vld [vmem:[%s385 + $0x21] sm:$0xff]
      %v582 = vld [vmem:[%s385 + $0x31] sm:$0xff]
      %v583 = vld [vmem:[%s385 + $0x39] sm:$0xff]
      %v584 = vld [vmem:[%s385 + $0x49] sm:$0xff]
      %v585 = vld [vmem:[%s385 + $0x51] sm:$0xff]
      %v586 = vld [vmem:[%s385 + $0x61] sm:$0xff]
      %v587 = vld [vmem:[%s385 + $0x69] sm:$0xff]
      %v588 = vld [vmem:[%s385 + $0x79] sm:$0xff]
      %v589 = vld [vmem:[%s385 + $0x81] sm:$0xff]
      %v590 = vld [vmem:[%s385 + $0x91] sm:$0xff]
      %v591 = vld [vmem:[%s385 + $0x99] sm:$0xff]
      %v592 = vld [vmem:[%s385 + $0xa9] sm:$0xff]
      %v593 = vld [vmem:[%s385 + $0xb1] sm:$0xff]
      %v594 = vld [vmem:[%s385 + $0xc1] sm:$0xff]
      %v595 = vld [vmem:[%s385 + $0xc9] sm:$0xff]
      %v596 = vld [vmem:[%s385 + $0xd9] sm:$0xff]
      %v597 = vld [vmem:[%s385 + $0xe1] sm:$0xff]
      %v598 = vld [vmem:[%s385 + $0xf1] sm:$0xff]
      %v599 = vld [vmem:[%s385 + $0xf9] sm:$0xff]
      %v600 = vld [vmem:[%s385 + $0x109] sm:$0xff]
      %v601 = vld [vmem:[%s385 + $0x111] sm:$0xff]
      %v602 = vld [vmem:[%s385 + $0x121] sm:$0xff]
      %v603 = vld [vmem:[%s385 + $0x129] sm:$0xff]
      %v604 = vld [vmem:[%s385 + $0x139] sm:$0xff]
      %v605 = vld [vmem:[%s385 + $0x141] sm:$0xff]
      %v606 = vld [vmem:[%s385 + $0x151] sm:$0xff]
      %v607 = vld [vmem:[%s385 + $0x159] sm:$0xff]
      %v608 = vld [vmem:[%s385 + $0x169] sm:$0xff]
      %v609 = vld [vmem:[%s385 + $0x171] sm:$0xff]
      %v610 = vld [vmem:[%s385 + $0x2] sm:$0xff]
      %v611 = vld [vmem:[%s385 + $0xa] sm:$0xff]
      %v612 = vld [vmem:[%s385 + $0x1a] sm:$0xff]
      %v613 = vld [vmem:[%s385 + $0x22] sm:$0xff]
      %v614 = vld [vmem:[%s385 + $0x32] sm:$0xff]
      %v615 = vld [vmem:[%s385 + $0x3a] sm:$0xff]
      %v616 = vld [vmem:[%s385 + $0x4a] sm:$0xff]
      %v617 = vld [vmem:[%s385 + $0x52] sm:$0xff]
      %v618 = vld [vmem:[%s385 + $0x62] sm:$0xff]
      %v619 = vld [vmem:[%s385 + $0x6a] sm:$0xff]
      %v620 = vld [vmem:[%s385 + $0x7a] sm:$0xff]
      %v621 = vld [vmem:[%s385 + $0x82] sm:$0xff]
      %v622 = vld [vmem:[%s385 + $0x92] sm:$0xff]
      %v623 = vld [vmem:[%s385 + $0x9a] sm:$0xff]
      %v624 = vld [vmem:[%s385 + $0xaa] sm:$0xff]
      %v625 = vld [vmem:[%s385 + $0xb2] sm:$0xff]
      %v626 = vld [vmem:[%s385 + $0xc2] sm:$0xff]
      %v627 = vld [vmem:[%s385 + $0xca] sm:$0xff]
      %v628 = vld [vmem:[%s385 + $0xda] sm:$0xff]
      %v629 = vld [vmem:[%s385 + $0xe2] sm:$0xff]
      %v630 = vld [vmem:[%s385 + $0xf2] sm:$0xff]
      %v631 = vld [vmem:[%s385 + $0xfa] sm:$0xff]
      %v632 = vld [vmem:[%s385 + $0x10a] sm:$0xff]
      %v633 = vld [vmem:[%s385 + $0x112] sm:$0xff]
      %v634 = vld [vmem:[%s385 + $0x122] sm:$0xff]
      %v635 = vld [vmem:[%s385 + $0x12a] sm:$0xff]
      %v636 = vld [vmem:[%s385 + $0x13a] sm:$0xff]
      %v637 = vld [vmem:[%s385 + $0x142] sm:$0xff]
      %v638 = vld [vmem:[%s385 + $0x152] sm:$0xff]
      %v639 = vld [vmem:[%s385 + $0x15a] sm:$0xff]
      %v640 = vld [vmem:[%s385 + $0x16a] sm:$0xff]
      %v641 = vld [vmem:[%s385 + $0x172] sm:$0xff]
      %s642 = scalar_lea.vmem [#allocation2], 48
      %v643 = vld [vmem:[%s642] sm:$0xff]
      %v644 = vld [vmem:[%s642 + $0x8] sm:$0xff]
      %v645 = vld [vmem:[%s642 + $0x18] sm:$0xff]
      %v646 = vld [vmem:[%s642 + $0x20] sm:$0xff]
      %v647 = vld [vmem:[%s642 + $0x30] sm:$0xff]
      %v648 = vld [vmem:[%s642 + $0x38] sm:$0xff]
      %v649 = vld [vmem:[%s642 + $0x48] sm:$0xff]
      %v650 = vld [vmem:[%s642 + $0x50] sm:$0xff]
      %v651 = vld [vmem:[%s642 + $0x60] sm:$0xff]
      %v652 = vld [vmem:[%s642 + $0x68] sm:$0xff]
      %v653 = vld [vmem:[%s642 + $0x78] sm:$0xff]
      %v654 = vld [vmem:[%s642 + $0x80] sm:$0xff]
      %v655 = vld [vmem:[%s642 + $0x90] sm:$0xff]
      %v656 = vld [vmem:[%s642 + $0x98] sm:$0xff]
      %v657 = vld [vmem:[%s642 + $0xa8] sm:$0xff]
      %v658 = vld [vmem:[%s642 + $0xb0] sm:$0xff]
      %v659 = vld [vmem:[%s642 + $0xc0] sm:$0xff]
      %v660 = vld [vmem:[%s642 + $0xc8] sm:$0xff]
      %v661 = vld [vmem:[%s642 + $0xd8] sm:$0xff]
      %v662 = vld [vmem:[%s642 + $0xe0] sm:$0xff]
      %v663 = vld [vmem:[%s642 + $0xf0] sm:$0xff]
      %v664 = vld [vmem:[%s642 + $0xf8] sm:$0xff]
      %v665 = vld [vmem:[%s642 + $0x108] sm:$0xff]
      %v666 = vld [vmem:[%s642 + $0x110] sm:$0xff]
      %v667 = vld [vmem:[%s642 + $0x120] sm:$0xff]
      %v668 = vld [vmem:[%s642 + $0x128] sm:$0xff]
      %v669 = vld [vmem:[%s642 + $0x138] sm:$0xff]
      %v670 = vld [vmem:[%s642 + $0x140] sm:$0xff]
      %v671 = vld [vmem:[%s642 + $0x150] sm:$0xff]
      %v672 = vld [vmem:[%s642 + $0x158] sm:$0xff]
      %v673 = vld [vmem:[%s642 + $0x168] sm:$0xff]
      %v674 = vld [vmem:[%s642 + $0x170] sm:$0xff]
      %v675 = vld [vmem:[%s642 + $0x1] sm:$0xff]
      %v676 = vld [vmem:[%s642 + $0x9] sm:$0xff]
      %v677 = vld [vmem:[%s642 + $0x19] sm:$0xff]
      %v678 = vld [vmem:[%s642 + $0x21] sm:$0xff]
      %v679 = vld [vmem:[%s642 + $0x31] sm:$0xff]
      %v680 = vld [vmem:[%s642 + $0x39] sm:$0xff]
      %v681 = vld [vmem:[%s642 + $0x49] sm:$0xff]
      %v682 = vld [vmem:[%s642 + $0x51] sm:$0xff]
      %v683 = vld [vmem:[%s642 + $0x61] sm:$0xff]
      %v684 = vld [vmem:[%s642 + $0x69] sm:$0xff]
      %v685 = vld [vmem:[%s642 + $0x79] sm:$0xff]
      %v686 = vld [vmem:[%s642 + $0x81] sm:$0xff]
      %v687 = vld [vmem:[%s642 + $0x91] sm:$0xff]
      %v688 = vld [vmem:[%s642 + $0x99] sm:$0xff]
      %v689 = vld [vmem:[%s642 + $0xa9] sm:$0xff]
      %v690 = vld [vmem:[%s642 + $0xb1] sm:$0xff]
      %v691 = vld [vmem:[%s642 + $0xc1] sm:$0xff]
      %v692 = vld [vmem:[%s642 + $0xc9] sm:$0xff]
      %v693 = vld [vmem:[%s642 + $0xd9] sm:$0xff]
      %v694 = vld [vmem:[%s642 + $0xe1] sm:$0xff]
      %v695 = vld [vmem:[%s642 + $0xf1] sm:$0xff]
      %v696 = vld [vmem:[%s642 + $0xf9] sm:$0xff]
      %v697 = vld [vmem:[%s642 + $0x109] sm:$0xff]
      %v698 = vld [vmem:[%s642 + $0x111] sm:$0xff]
      %v699 = vld [vmem:[%s642 + $0x121] sm:$0xff]
      %v700 = vld [vmem:[%s642 + $0x129] sm:$0xff]
      %v701 = vld [vmem:[%s642 + $0x139] sm:$0xff]
      %v702 = vld [vmem:[%s642 + $0x141] sm:$0xff]
      %v703 = vld [vmem:[%s642 + $0x151] sm:$0xff]
      %v704 = vld [vmem:[%s642 + $0x159] sm:$0xff]
      %v705 = vld [vmem:[%s642 + $0x169] sm:$0xff]
      %v706 = vld [vmem:[%s642 + $0x171] sm:$0xff]
      %v707 = vld [vmem:[%s642 + $0x2] sm:$0xff]
      %v708 = vld [vmem:[%s642 + $0xa] sm:$0xff]
      %v709 = vld [vmem:[%s642 + $0x1a] sm:$0xff]
      %v710 = vld [vmem:[%s642 + $0x22] sm:$0xff]
      %v711 = vld [vmem:[%s642 + $0x32] sm:$0xff]
      %v712 = vld [vmem:[%s642 + $0x3a] sm:$0xff]
      %v713 = vld [vmem:[%s642 + $0x4a] sm:$0xff]
      %v714 = vld [vmem:[%s642 + $0x52] sm:$0xff]
      %v715 = vld [vmem:[%s642 + $0x62] sm:$0xff]
      %v716 = vld [vmem:[%s642 + $0x6a] sm:$0xff]
      %v717 = vld [vmem:[%s642 + $0x7a] sm:$0xff]
      %v718 = vld [vmem:[%s642 + $0x82] sm:$0xff]
      %v719 = vld [vmem:[%s642 + $0x92] sm:$0xff]
      %v720 = vld [vmem:[%s642 + $0x9a] sm:$0xff]
      %v721 = vld [vmem:[%s642 + $0xaa] sm:$0xff]
      %v722 = vld [vmem:[%s642 + $0xb2] sm:$0xff]
      %v723 = vld [vmem:[%s642 + $0xc2] sm:$0xff]
      %v724 = vld [vmem:[%s642 + $0xca] sm:$0xff]
      %v725 = vld [vmem:[%s642 + $0xda] sm:$0xff]
      %v726 = vld [vmem:[%s642 + $0xe2] sm:$0xff]
      %v727 = vld [vmem:[%s642 + $0xf2] sm:$0xff]
      %v728 = vld [vmem:[%s642 + $0xfa] sm:$0xff]
      %v729 = vld [vmem:[%s642 + $0x10a] sm:$0xff]
      %v730 = vld [vmem:[%s642 + $0x112] sm:$0xff]
      %v731 = vld [vmem:[%s642 + $0x122] sm:$0xff]
      %v732 = vld [vmem:[%s642 + $0x12a] sm:$0xff]
      %v733 = vld [vmem:[%s642 + $0x13a] sm:$0xff]
      %v734 = vld [vmem:[%s642 + $0x142] sm:$0xff]
      %v735 = vld [vmem:[%s642 + $0x152] sm:$0xff]
      %v736 = vld [vmem:[%s642 + $0x15a] sm:$0xff]
      %v737 = vld [vmem:[%s642 + $0x16a] sm:$0xff]
      %v738 = vld [vmem:[%s642 + $0x172] sm:$0xff]
      %v739 = vld [vmem:[%s3] sm:$0xff]
      %v740 = vld [vmem:[%s3 + $0x8] sm:$0xff]
      %v741 = vld [vmem:[%s3 + $0x10] sm:$0xff]
      %v742 = vld [vmem:[%s3 + $0x18] sm:$0xff]
      %v743 = vld [vmem:[%s3 + $0x20] sm:$0xff]
      %v744 = vld [vmem:[%s3 + $0x28] sm:$0xff]
      %v745 = vld [vmem:[%s3 + $0x30] sm:$0xff]
      %v746 = vld [vmem:[%s3 + $0x38] sm:$0xff]
      %v747 = vld [vmem:[%s3 + $0x40] sm:$0xff]
      %v748 = vld [vmem:[%s3 + $0x48] sm:$0xff]
      %v749 = vld [vmem:[%s3 + $0x50] sm:$0xff]
      %v750 = vld [vmem:[%s3 + $0x58] sm:$0xff]
      %v751 = vld [vmem:[%s3 + $0x60] sm:$0xff]
      %v752 = vld [vmem:[%s3 + $0x68] sm:$0xff]
      %v753 = vld [vmem:[%s3 + $0x70] sm:$0xff]
      %v754 = vld [vmem:[%s3 + $0x78] sm:$0xff]
      %v755 = vld [vmem:[%s3 + $0x80] sm:$0xff]
      %v756 = vld [vmem:[%s3 + $0x88] sm:$0xff]
      %v757 = vld [vmem:[%s3 + $0x90] sm:$0xff]
      %v758 = vld [vmem:[%s3 + $0x98] sm:$0xff]
      %v759 = vld [vmem:[%s3 + $0xa0] sm:$0xff]
      %v760 = vld [vmem:[%s3 + $0xa8] sm:$0xff]
      %v761 = vld [vmem:[%s3 + $0xb0] sm:$0xff]
      %v762 = vld [vmem:[%s3 + $0xb8] sm:$0xff]
      %v763 = vld [vmem:[%s3 + $0xc0] sm:$0xff]
      %v764 = vld [vmem:[%s3 + $0xc8] sm:$0xff]
      %v765 = vld [vmem:[%s3 + $0xd0] sm:$0xff]
      %v766 = vld [vmem:[%s3 + $0xd8] sm:$0xff]
      %v767 = vld [vmem:[%s3 + $0xe0] sm:$0xff]
      %v768 = vld [vmem:[%s3 + $0xe8] sm:$0xff]
      %v769 = vld [vmem:[%s3 + $0xf0] sm:$0xff]
      %v770 = vld [vmem:[%s3 + $0xf8] sm:$0xff]
      %v771 = vld [vmem:[%s3 + $0x100] sm:$0xff]
      %v772 = vld [vmem:[%s3 + $0x108] sm:$0xff]
      %v773 = vld [vmem:[%s3 + $0x110] sm:$0xff]
      %v774 = vld [vmem:[%s3 + $0x118] sm:$0xff]
      %v775 = vld [vmem:[%s3 + $0x120] sm:$0xff]
      %v776 = vld [vmem:[%s3 + $0x128] sm:$0xff]
      %v777 = vld [vmem:[%s3 + $0x130] sm:$0xff]
      %v778 = vld [vmem:[%s3 + $0x138] sm:$0xff]
      %v779 = vld [vmem:[%s3 + $0x140] sm:$0xff]
      %v780 = vld [vmem:[%s3 + $0x148] sm:$0xff]
      %v781 = vld [vmem:[%s3 + $0x150] sm:$0xff]
      %v782 = vld [vmem:[%s3 + $0x158] sm:$0xff]
      %v783 = vld [vmem:[%s3 + $0x160] sm:$0xff]
      %v784 = vld [vmem:[%s3 + $0x168] sm:$0xff]
      %v785 = vld [vmem:[%s3 + $0x170] sm:$0xff]
      %v786 = vld [vmem:[%s3 + $0x178] sm:$0xff]
      %v787 = vld [vmem:[%s3 + $0x180] sm:$0xff]
      %v788 = vld [vmem:[%s3 + $0x188] sm:$0xff]
      %v789 = vld [vmem:[%s3 + $0x190] sm:$0xff]
      %v790 = vld [vmem:[%s3 + $0x198] sm:$0xff]
      %v791 = vld [vmem:[%s3 + $0x1a0] sm:$0xff]
      %v792 = vld [vmem:[%s3 + $0x1a8] sm:$0xff]
      %v793 = vld [vmem:[%s3 + $0x1b0] sm:$0xff]
      %v794 = vld [vmem:[%s3 + $0x1b8] sm:$0xff]
      %v795 = vld [vmem:[%s3 + $0x1c0] sm:$0xff]
      %v796 = vld [vmem:[%s3 + $0x1c8] sm:$0xff]
      %v797 = vld [vmem:[%s3 + $0x1d0] sm:$0xff]
      %v798 = vld [vmem:[%s3 + $0x1d8] sm:$0xff]
      %v799 = vld [vmem:[%s3 + $0x1e0] sm:$0xff]
      %v800 = vld [vmem:[%s3 + $0x1e8] sm:$0xff]
      %v801 = vld [vmem:[%s3 + $0x1f0] sm:$0xff]
      %v802 = vld [vmem:[%s3 + $0x1f8] sm:$0xff]
      %v803 = vld [vmem:[%s3 + $0x200] sm:$0xff]
      %v804 = vld [vmem:[%s3 + $0x208] sm:$0xff]
      %v805 = vld [vmem:[%s3 + $0x210] sm:$0xff]
      %v806 = vld [vmem:[%s3 + $0x218] sm:$0xff]
      %v807 = vld [vmem:[%s3 + $0x220] sm:$0xff]
      %v808 = vld [vmem:[%s3 + $0x228] sm:$0xff]
      %v809 = vld [vmem:[%s3 + $0x230] sm:$0xff]
      %v810 = vld [vmem:[%s3 + $0x238] sm:$0xff]
      %v811 = vld [vmem:[%s3 + $0x240] sm:$0xff]
      %v812 = vld [vmem:[%s3 + $0x248] sm:$0xff]
      %v813 = vld [vmem:[%s3 + $0x250] sm:$0xff]
      %v814 = vld [vmem:[%s3 + $0x258] sm:$0xff]
      %v815 = vld [vmem:[%s3 + $0x260] sm:$0xff]
      %v816 = vld [vmem:[%s3 + $0x268] sm:$0xff]
      %v817 = vld [vmem:[%s3 + $0x270] sm:$0xff]
      %v818 = vld [vmem:[%s3 + $0x278] sm:$0xff]
      %v819 = vld [vmem:[%s3 + $0x280] sm:$0xff]
      %v820 = vld [vmem:[%s3 + $0x288] sm:$0xff]
      %v821 = vld [vmem:[%s3 + $0x290] sm:$0xff]
      %v822 = vld [vmem:[%s3 + $0x298] sm:$0xff]
      %v823 = vld [vmem:[%s3 + $0x2a0] sm:$0xff]
      %v824 = vld [vmem:[%s3 + $0x2a8] sm:$0xff]
      %v825 = vld [vmem:[%s3 + $0x2b0] sm:$0xff]
      %v826 = vld [vmem:[%s3 + $0x2b8] sm:$0xff]
      %v827 = vld [vmem:[%s3 + $0x2c0] sm:$0xff]
      %v828 = vld [vmem:[%s3 + $0x2c8] sm:$0xff]
      %v829 = vld [vmem:[%s3 + $0x2d0] sm:$0xff]
      %v830 = vld [vmem:[%s3 + $0x2d8] sm:$0xff]
      %v831 = vld [vmem:[%s3 + $0x2e0] sm:$0xff]
      %v832 = vld [vmem:[%s3 + $0x2e8] sm:$0xff]
      %v833 = vld [vmem:[%s3 + $0x2f0] sm:$0xff]
      %v834 = vld [vmem:[%s3 + $0x2f8] sm:$0xff]
      %v835 = vld [vmem:[%s3 + $0x300] sm:$0xff]
      %v836 = vld [vmem:[%s3 + $0x308] sm:$0xff]
      %v837 = vld [vmem:[%s3 + $0x310] sm:$0xff]
      %v838 = vld [vmem:[%s3 + $0x318] sm:$0xff]
      %v839 = vld [vmem:[%s3 + $0x320] sm:$0xff]
      %v840 = vld [vmem:[%s3 + $0x328] sm:$0xff]
      %v841 = vld [vmem:[%s3 + $0x330] sm:$0xff]
      %v842 = vld [vmem:[%s3 + $0x338] sm:$0xff]
      %v843 = vld [vmem:[%s3 + $0x340] sm:$0xff]
      %v844 = vld [vmem:[%s3 + $0x348] sm:$0xff]
      %v845 = vld [vmem:[%s3 + $0x350] sm:$0xff]
      %v846 = vld [vmem:[%s3 + $0x358] sm:$0xff]
      %v847 = vld [vmem:[%s3 + $0x360] sm:$0xff]
      %v848 = vld [vmem:[%s3 + $0x368] sm:$0xff]
      %v849 = vld [vmem:[%s3 + $0x370] sm:$0xff]
      %v850 = vld [vmem:[%s3 + $0x378] sm:$0xff]
      %v851 = vld [vmem:[%s3 + $0x380] sm:$0xff]
      %v852 = vld [vmem:[%s3 + $0x388] sm:$0xff]
      %v853 = vld [vmem:[%s3 + $0x390] sm:$0xff]
      %v854 = vld [vmem:[%s3 + $0x398] sm:$0xff]
      %v855 = vld [vmem:[%s3 + $0x3a0] sm:$0xff]
      %v856 = vld [vmem:[%s3 + $0x3a8] sm:$0xff]
      %v857 = vld [vmem:[%s3 + $0x3b0] sm:$0xff]
      %v858 = vld [vmem:[%s3 + $0x3b8] sm:$0xff]
      %v859 = vld [vmem:[%s3 + $0x3c0] sm:$0xff]
      %v860 = vld [vmem:[%s3 + $0x3c8] sm:$0xff]
      %v861 = vld [vmem:[%s3 + $0x3d0] sm:$0xff]
      %v862 = vld [vmem:[%s3 + $0x3d8] sm:$0xff]
      %v863 = vld [vmem:[%s3 + $0x3e0] sm:$0xff]
      %v864 = vld [vmem:[%s3 + $0x3e8] sm:$0xff]
      %v865 = vld [vmem:[%s3 + $0x3f0] sm:$0xff]
      %v866 = vld [vmem:[%s3 + $0x3f8] sm:$0xff]
      %v867 = vld [vmem:[%s3 + $0x400] sm:$0xff]
      %v868 = vld [vmem:[%s3 + $0x408] sm:$0xff]
      %v869 = vld [vmem:[%s3 + $0x410] sm:$0xff]
      %v870 = vld [vmem:[%s3 + $0x418] sm:$0xff]
      %v871 = vld [vmem:[%s3 + $0x420] sm:$0xff]
      %v872 = vld [vmem:[%s3 + $0x428] sm:$0xff]
      %v873 = vld [vmem:[%s3 + $0x430] sm:$0xff]
      %v874 = vld [vmem:[%s3 + $0x438] sm:$0xff]
      %v875 = vld [vmem:[%s3 + $0x440] sm:$0xff]
      %v876 = vld [vmem:[%s3 + $0x448] sm:$0xff]
      %v877 = vld [vmem:[%s3 + $0x450] sm:$0xff]
      %v878 = vld [vmem:[%s3 + $0x458] sm:$0xff]
      %v879 = vld [vmem:[%s3 + $0x460] sm:$0xff]
      %v880 = vld [vmem:[%s3 + $0x468] sm:$0xff]
      %v881 = vld [vmem:[%s3 + $0x470] sm:$0xff]
      %v882 = vld [vmem:[%s3 + $0x478] sm:$0xff]
      %883 = vmatprep.subr.mxu0 0.0
      %884 = vmatpush1.msra.mxu0 %v754
      %885 = vmatprep.subr.mxu0 0.0
      %886 = vmatpush1.msra.mxu0 %v753
      %887 = vmatprep.subr.mxu0 0.0
      %888 = vmatpush1.msra.mxu0 %v752
      %889 = vmatprep.subr.mxu0 0.0
      %890 = vmatpush1.msra.mxu0 %v751
      %891 = vmatprep.subr.mxu0 0.0
      %892 = vmatpush1.msra.mxu0 %v750
      %893 = vmatprep.subr.mxu0 0.0
      %894 = vmatpush1.msra.mxu0 %v749
      %895 = vmatprep.subr.mxu0 0.0
      %896 = vmatpush1.msra.mxu0 %v748
      %897 = vmatprep.subr.mxu0 0.0
      %898 = vmatpush1.msra.mxu0 %v747
      %899 = vmatprep.subr.mxu0 0.0
      %900 = vmatpush1.msra.mxu0 %v746
      %901 = vmatprep.subr.mxu0 0.0
      %902 = vmatpush1.msra.mxu0 %v745
      %903 = vmatprep.subr.mxu0 0.0
      %904 = vmatpush1.msra.mxu0 %v744
      %905 = vmatprep.subr.mxu0 0.0
      %906 = vmatpush1.msra.mxu0 %v743
      %907 = vmatprep.subr.mxu0 0.0
      %908 = vmatpush1.msra.mxu0 %v742
      %909 = vmatprep.subr.mxu0 0.0
      %910 = vmatpush1.msra.mxu0 %v741
      %911 = vmatprep.subr.mxu0 0.0
      %912 = vmatpush1.msra.mxu0 %v740
      %913 = vmatprep.subr.mxu0 0.0
      %914 = vmatpush1.msra.mxu0 %v739
      %915 = vmatprep.subr.mxu0 0.0
      %916 = vmatpush2.msra.mxu0 %v770
      %917 = vmatprep.subr.mxu0 0.0
      %918 = vmatpush2.msra.mxu0 %v769
      %919 = vmatprep.subr.mxu0 0.0
      %920 = vmatpush2.msra.mxu0 %v768
      %921 = vmatprep.subr.mxu0 0.0
      %922 = vmatpush2.msra.mxu0 %v767
      %923 = vmatprep.subr.mxu0 0.0
      %924 = vmatpush2.msra.mxu0 %v766
      %925 = vmatprep.subr.mxu0 0.0
      %926 = vmatpush2.msra.mxu0 %v765
      %927 = vmatprep.subr.mxu0 0.0
      %928 = vmatpush2.msra.mxu0 %v764
      %929 = vmatprep.subr.mxu0 0.0
      %930 = vmatpush2.msra.mxu0 %v763
      %931 = vmatprep.subr.mxu0 0.0
      %932 = vmatpush2.msra.mxu0 %v762
      %933 = vmatprep.subr.mxu0 0.0
      %934 = vmatpush2.msra.mxu0 %v761
      %935 = vmatprep.subr.mxu0 0.0
      %936 = vmatpush2.msra.mxu0 %v760
      %937 = vmatprep.subr.mxu0 0.0
      %938 = vmatpush2.msra.mxu0 %v759
      %939 = vmatprep.subr.mxu0 0.0
      %940 = vmatpush2.msra.mxu0 %v758
      %941 = vmatprep.subr.mxu0 0.0
      %942 = vmatpush2.msra.mxu0 %v757
      %943 = vmatprep.subr.mxu0 0.0
      %944 = vmatpush2.msra.mxu0 %v756
      %945 = vmatprep.subr.mxu0 0.0
      %946 = vmatpush2.msra.mxu0 %v755
      %947 = vmatprep.mubr.f32.mxu0 %v482
      %948 = vmatmul.mubr.f32.gmra.mxu0 %v450
      %v949 = vpop.f32.mrf.mxu0
      %v950 = vadd.f32 0.0, %v949
      %v951 = vpop.f32.mrf.mxu0
      %952 = vmatprep.mubr.f32.mxu0 %v483
      %953 = vmatmul.mubr.f32.gmra.mxu0 %v451
      %v954 = vpop.f32.mrf.mxu0
      %v955 = vadd.f32 0.0, %v954
      %v956 = vpop.f32.mrf.mxu0
      %957 = vmatprep.mubr.f32.mxu0 %v484
      %958 = vmatmul.mubr.f32.gmra.mxu0 %v452
      %v959 = vpop.f32.mrf.mxu0
      %v960 = vadd.f32 0.0, %v959
      %v961 = vpop.f32.mrf.mxu0
      %962 = vmatprep.mubr.f32.mxu0 %v485
      %963 = vmatmul.mubr.f32.gmra.mxu0 %v453
      %v964 = vpop.f32.mrf.mxu0
      %v965 = vadd.f32 0.0, %v964
      %v966 = vpop.f32.mrf.mxu0
      %967 = vmatprep.mubr.f32.mxu0 %v486
      %968 = vmatmul.mubr.f32.gmra.mxu0 %v454
      %v969 = vpop.f32.mrf.mxu0
      %v970 = vadd.f32 0.0, %v969
      %v971 = vpop.f32.mrf.mxu0
      %972 = vmatprep.mubr.f32.mxu0 %v487
      %973 = vmatmul.mubr.f32.gmra.mxu0 %v455
      %v974 = vpop.f32.mrf.mxu0
      %v975 = vadd.f32 0.0, %v974
      %v976 = vpop.f32.mrf.mxu0
      %977 = vmatprep.mubr.f32.mxu0 %v488
      %978 = vmatmul.mubr.f32.gmra.mxu0 %v456
      %v979 = vpop.f32.mrf.mxu0
      %v980 = vadd.f32 0.0, %v979
      %v981 = vpop.f32.mrf.mxu0
      %982 = vmatprep.mubr.f32.mxu0 %v489
      %983 = vmatmul.mubr.f32.gmra.mxu0 %v457
      %v984 = vpop.f32.mrf.mxu0
      %v985 = vadd.f32 0.0, %v984
      %v986 = vpop.f32.mrf.mxu0
      %987 = vmatprep.mubr.f32.mxu0 %v490
      %988 = vmatmul.mubr.f32.gmra.mxu0 %v458
      %v989 = vpop.f32.mrf.mxu0
      %v990 = vadd.f32 0.0, %v989
      %v991 = vpop.f32.mrf.mxu0
      %992 = vmatprep.mubr.f32.mxu0 %v491
      %993 = vmatmul.mubr.f32.gmra.mxu0 %v459
      %v994 = vpop.f32.mrf.mxu0
      %v995 = vadd.f32 0.0, %v994
      %v996 = vpop.f32.mrf.mxu0
      %997 = vmatprep.mubr.f32.mxu0 %v492
      %998 = vmatmul.mubr.f32.gmra.mxu0 %v460
      %v999 = vpop.f32.mrf.mxu0
      %v1000 = vadd.f32 0.0, %v999
      %v1001 = vpop.f32.mrf.mxu0
      %1002 = vmatprep.mubr.f32.mxu0 %v493
      %1003 = vmatmul.mubr.f32.gmra.mxu0 %v461
      %v1004 = vpop.f32.mrf.mxu0
      %v1005 = vadd.f32 0.0, %v1004
      %v1006 = vpop.f32.mrf.mxu0
      %1007 = vmatprep.mubr.f32.mxu0 %v494
      %1008 = vmatmul.mubr.f32.gmra.mxu0 %v462
      %v1009 = vpop.f32.mrf.mxu0
      %v1010 = vadd.f32 0.0, %v1009
      %v1011 = vpop.f32.mrf.mxu0
      %1012 = vmatprep.mubr.f32.mxu0 %v495
      %1013 = vmatmul.mubr.f32.gmra.mxu0 %v463
      %v1014 = vpop.f32.mrf.mxu0
      %v1015 = vadd.f32 0.0, %v1014
      %v1016 = vpop.f32.mrf.mxu0
      %1017 = vmatprep.mubr.f32.mxu0 %v496
      %1018 = vmatmul.mubr.f32.gmra.mxu0 %v464
      %v1019 = vpop.f32.mrf.mxu0
      %v1020 = vadd.f32 0.0, %v1019
      %v1021 = vpop.f32.mrf.mxu0
      %1022 = vmatprep.mubr.f32.mxu0 %v497
      %1023 = vmatmul.mubr.f32.gmra.mxu0 %v465
      %v1024 = vpop.f32.mrf.mxu0
      %v1025 = vadd.f32 0.0, %v1024
      %v1026 = vpop.f32.mrf.mxu0
      %1027 = vmatprep.mubr.f32.mxu0 %v498
      %1028 = vmatmul.mubr.f32.gmra.mxu0 %v466
      %v1029 = vpop.f32.mrf.mxu0
      %v1030 = vadd.f32 0.0, %v1029
      %v1031 = vpop.f32.mrf.mxu0
      %1032 = vmatprep.mubr.f32.mxu0 %v499
      %1033 = vmatmul.mubr.f32.gmra.mxu0 %v467
      %v1034 = vpop.f32.mrf.mxu0
      %v1035 = vadd.f32 0.0, %v1034
      %v1036 = vpop.f32.mrf.mxu0
      %1037 = vmatprep.mubr.f32.mxu0 %v500
      %1038 = vmatmul.mubr.f32.gmra.mxu0 %v468
      %v1039 = vpop.f32.mrf.mxu0
      %v1040 = vadd.f32 0.0, %v1039
      %v1041 = vpop.f32.mrf.mxu0
      %1042 = vmatprep.mubr.f32.mxu0 %v501
      %1043 = vmatmul.mubr.f32.gmra.mxu0 %v469
      %v1044 = vpop.f32.mrf.mxu0
      %v1045 = vadd.f32 0.0, %v1044
      %v1046 = vpop.f32.mrf.mxu0
      %1047 = vmatprep.mubr.f32.mxu0 %v502
      %1048 = vmatmul.mubr.f32.gmra.mxu0 %v470
      %v1049 = vpop.f32.mrf.mxu0
      %v1050 = vadd.f32 0.0, %v1049
      %v1051 = vpop.f32.mrf.mxu0
      %1052 = vmatprep.mubr.f32.mxu0 %v503
      %1053 = vmatmul.mubr.f32.gmra.mxu0 %v471
      %v1054 = vpop.f32.mrf.mxu0
      %v1055 = vadd.f32 0.0, %v1054
      %v1056 = vpop.f32.mrf.mxu0
      %1057 = vmatprep.mubr.f32.mxu0 %v504
      %1058 = vmatmul.mubr.f32.gmra.mxu0 %v472
      %v1059 = vpop.f32.mrf.mxu0
      %v1060 = vadd.f32 0.0, %v1059
      %v1061 = vpop.f32.mrf.mxu0
      %1062 = vmatprep.mubr.f32.mxu0 %v505
      %1063 = vmatmul.mubr.f32.gmra.mxu0 %v473
      %v1064 = vpop.f32.mrf.mxu0
      %v1065 = vadd.f32 0.0, %v1064
      %v1066 = vpop.f32.mrf.mxu0
      %1067 = vmatprep.mubr.f32.mxu0 %v506
      %1068 = vmatmul.mubr.f32.gmra.mxu0 %v474
      %v1069 = vpop.f32.mrf.mxu0
      %v1070 = vadd.f32 0.0, %v1069
      %v1071 = vpop.f32.mrf.mxu0
      %1072 = vmatprep.mubr.f32.mxu0 %v507
      %1073 = vmatmul.mubr.f32.gmra.mxu0 %v475
      %v1074 = vpop.f32.mrf.mxu0
      %v1075 = vadd.f32 0.0, %v1074
      %v1076 = vpop.f32.mrf.mxu0
      %1077 = vmatprep.mubr.f32.mxu0 %v508
      %1078 = vmatmul.mubr.f32.gmra.mxu0 %v476
      %v1079 = vpop.f32.mrf.mxu0
      %v1080 = vadd.f32 0.0, %v1079
      %v1081 = vpop.f32.mrf.mxu0
      %1082 = vmatprep.mubr.f32.mxu0 %v509
      %1083 = vmatmul.mubr.f32.gmra.mxu0 %v477
      %v1084 = vpop.f32.mrf.mxu0
      %v1085 = vadd.f32 0.0, %v1084
      %v1086 = vpop.f32.mrf.mxu0
      %1087 = vmatprep.mubr.f32.mxu0 %v510
      %1088 = vmatmul.mubr.f32.gmra.mxu0 %v478
      %v1089 = vpop.f32.mrf.mxu0
      %v1090 = vadd.f32 0.0, %v1089
      %v1091 = vpop.f32.mrf.mxu0
      %1092 = vmatprep.mubr.f32.mxu0 %v511
      %1093 = vmatmul.mubr.f32.gmra.mxu0 %v479
      %v1094 = vpop.f32.mrf.mxu0
      %v1095 = vadd.f32 0.0, %v1094
      %v1096 = vpop.f32.mrf.mxu0
      %1097 = vmatprep.mubr.f32.mxu0 %v512
      %1098 = vmatmul.mubr.f32.gmra.mxu0 %v480
      %v1099 = vpop.f32.mrf.mxu0
      %v1100 = vadd.f32 0.0, %v1099
      %v1101 = vpop.f32.mrf.mxu0
      %1102 = vmatprep.mubr.f32.mxu0 %v513
      %1103 = vmatmul.mubr.f32.gmra.mxu0 %v481
      %v1104 = vpop.f32.mrf.mxu0
      %v1105 = vadd.f32 0.0, %v1104
      %v1106 = vpop.f32.mrf.mxu0
      %1107 = vdwg.mxu0
      %1108 = vmatprep.subr.mxu0 0.0
      %1109 = vmatpush1.msra.mxu0 %v786
      %1110 = vmatprep.subr.mxu0 0.0
      %1111 = vmatpush1.msra.mxu0 %v785
      %1112 = vmatprep.subr.mxu0 0.0
      %1113 = vmatpush1.msra.mxu0 %v784
      %1114 = vmatprep.subr.mxu0 0.0
      %1115 = vmatpush1.msra.mxu0 %v783
      %1116 = vmatprep.subr.mxu0 0.0
      %1117 = vmatpush1.msra.mxu0 %v782
      %1118 = vmatprep.subr.mxu0 0.0
      %1119 = vmatpush1.msra.mxu0 %v781
      %1120 = vmatprep.subr.mxu0 0.0
      %1121 = vmatpush1.msra.mxu0 %v780
      %1122 = vmatprep.subr.mxu0 0.0
      %1123 = vmatpush1.msra.mxu0 %v779
      %1124 = vmatprep.subr.mxu0 0.0
      %1125 = vmatpush1.msra.mxu0 %v778
      %1126 = vmatprep.subr.mxu0 0.0
      %1127 = vmatpush1.msra.mxu0 %v777
      %1128 = vmatprep.subr.mxu0 0.0
      %1129 = vmatpush1.msra.mxu0 %v776
      %1130 = vmatprep.subr.mxu0 0.0
      %1131 = vmatpush1.msra.mxu0 %v775
      %1132 = vmatprep.subr.mxu0 0.0
      %1133 = vmatpush1.msra.mxu0 %v774
      %1134 = vmatprep.subr.mxu0 0.0
      %1135 = vmatpush1.msra.mxu0 %v773
      %1136 = vmatprep.subr.mxu0 0.0
      %1137 = vmatpush1.msra.mxu0 %v772
      %1138 = vmatprep.subr.mxu0 0.0
      %1139 = vmatpush1.msra.mxu0 %v771
      %1140 = vmatprep.subr.mxu0 0.0
      %1141 = vmatpush2.msra.mxu0 %v802
      %1142 = vmatprep.subr.mxu0 0.0
      %1143 = vmatpush2.msra.mxu0 %v801
      %1144 = vmatprep.subr.mxu0 0.0
      %1145 = vmatpush2.msra.mxu0 %v800
      %1146 = vmatprep.subr.mxu0 0.0
      %1147 = vmatpush2.msra.mxu0 %v799
      %1148 = vmatprep.subr.mxu0 0.0
      %1149 = vmatpush2.msra.mxu0 %v798
      %1150 = vmatprep.subr.mxu0 0.0
      %1151 = vmatpush2.msra.mxu0 %v797
      %1152 = vmatprep.subr.mxu0 0.0
      %1153 = vmatpush2.msra.mxu0 %v796
      %1154 = vmatprep.subr.mxu0 0.0
      %1155 = vmatpush2.msra.mxu0 %v795
      %1156 = vmatprep.subr.mxu0 0.0
      %1157 = vmatpush2.msra.mxu0 %v794
      %1158 = vmatprep.subr.mxu0 0.0
      %1159 = vmatpush2.msra.mxu0 %v793
      %1160 = vmatprep.subr.mxu0 0.0
      %1161 = vmatpush2.msra.mxu0 %v792
      %1162 = vmatprep.subr.mxu0 0.0
      %1163 = vmatpush2.msra.mxu0 %v791
      %1164 = vmatprep.subr.mxu0 0.0
      %1165 = vmatpush2.msra.mxu0 %v790
      %1166 = vmatprep.subr.mxu0 0.0
      %1167 = vmatpush2.msra.mxu0 %v789
      %1168 = vmatprep.subr.mxu0 0.0
      %1169 = vmatpush2.msra.mxu0 %v788
      %1170 = vmatprep.subr.mxu0 0.0
      %1171 = vmatpush2.msra.mxu0 %v787
      %1172 = vmatprep.mubr.f32.mxu0 %v546
      %1173 = vmatmul.mubr.f32.gmra.mxu0 %v514
      %v1174 = vpop.f32.mrf.mxu0
      %v1175 = vadd.f32 %v950, %v1174
      %v1176 = vpop.f32.mrf.mxu0
      %1177 = vmatprep.mubr.f32.mxu0 %v547
      %1178 = vmatmul.mubr.f32.gmra.mxu0 %v515
      %v1179 = vpop.f32.mrf.mxu0
      %v1180 = vadd.f32 %v955, %v1179
      %v1181 = vpop.f32.mrf.mxu0
      %1182 = vmatprep.mubr.f32.mxu0 %v548
      %1183 = vmatmul.mubr.f32.gmra.mxu0 %v516
      %v1184 = vpop.f32.mrf.mxu0
      %v1185 = vadd.f32 %v960, %v1184
      %v1186 = vpop.f32.mrf.mxu0
      %1187 = vmatprep.mubr.f32.mxu0 %v549
      %1188 = vmatmul.mubr.f32.gmra.mxu0 %v517
      %v1189 = vpop.f32.mrf.mxu0
      %v1190 = vadd.f32 %v965, %v1189
      %v1191 = vpop.f32.mrf.mxu0
      %1192 = vmatprep.mubr.f32.mxu0 %v550
      %1193 = vmatmul.mubr.f32.gmra.mxu0 %v518
      %v1194 = vpop.f32.mrf.mxu0
      %v1195 = vadd.f32 %v970, %v1194
      %v1196 = vpop.f32.mrf.mxu0
      %1197 = vmatprep.mubr.f32.mxu0 %v551
      %1198 = vmatmul.mubr.f32.gmra.mxu0 %v519
      %v1199 = vpop.f32.mrf.mxu0
      %v1200 = vadd.f32 %v975, %v1199
      %v1201 = vpop.f32.mrf.mxu0
      %1202 = vmatprep.mubr.f32.mxu0 %v552
      %1203 = vmatmul.mubr.f32.gmra.mxu0 %v520
      %v1204 = vpop.f32.mrf.mxu0
      %v1205 = vadd.f32 %v980, %v1204
      %v1206 = vpop.f32.mrf.mxu0
      %1207 = vmatprep.mubr.f32.mxu0 %v553
      %1208 = vmatmul.mubr.f32.gmra.mxu0 %v521
      %v1209 = vpop.f32.mrf.mxu0
      %v1210 = vadd.f32 %v985, %v1209
      %v1211 = vpop.f32.mrf.mxu0
      %1212 = vmatprep.mubr.f32.mxu0 %v554
      %1213 = vmatmul.mubr.f32.gmra.mxu0 %v522
      %v1214 = vpop.f32.mrf.mxu0
      %v1215 = vadd.f32 %v990, %v1214
      %v1216 = vpop.f32.mrf.mxu0
      %1217 = vmatprep.mubr.f32.mxu0 %v555
      %1218 = vmatmul.mubr.f32.gmra.mxu0 %v523
      %v1219 = vpop.f32.mrf.mxu0
      %v1220 = vadd.f32 %v995, %v1219
      %v1221 = vpop.f32.mrf.mxu0
      %1222 = vmatprep.mubr.f32.mxu0 %v556
      %1223 = vmatmul.mubr.f32.gmra.mxu0 %v524
      %v1224 = vpop.f32.mrf.mxu0
      %v1225 = vadd.f32 %v1000, %v1224
      %v1226 = vpop.f32.mrf.mxu0
      %1227 = vmatprep.mubr.f32.mxu0 %v557
      %1228 = vmatmul.mubr.f32.gmra.mxu0 %v525
      %v1229 = vpop.f32.mrf.mxu0
      %v1230 = vadd.f32 %v1005, %v1229
      %v1231 = vpop.f32.mrf.mxu0
      %1232 = vmatprep.mubr.f32.mxu0 %v558
      %1233 = vmatmul.mubr.f32.gmra.mxu0 %v526
      %v1234 = vpop.f32.mrf.mxu0
      %v1235 = vadd.f32 %v1010, %v1234
      %v1236 = vpop.f32.mrf.mxu0
      %1237 = vmatprep.mubr.f32.mxu0 %v559
      %1238 = vmatmul.mubr.f32.gmra.mxu0 %v527
      %v1239 = vpop.f32.mrf.mxu0
      %v1240 = vadd.f32 %v1015, %v1239
      %v1241 = vpop.f32.mrf.mxu0
      %1242 = vmatprep.mubr.f32.mxu0 %v560
      %1243 = vmatmul.mubr.f32.gmra.mxu0 %v528
      %v1244 = vpop.f32.mrf.mxu0
      %v1245 = vadd.f32 %v1020, %v1244
      %v1246 = vpop.f32.mrf.mxu0
      %1247 = vmatprep.mubr.f32.mxu0 %v561
      %1248 = vmatmul.mubr.f32.gmra.mxu0 %v529
      %v1249 = vpop.f32.mrf.mxu0
      %v1250 = vadd.f32 %v1025, %v1249
      %v1251 = vpop.f32.mrf.mxu0
      %1252 = vmatprep.mubr.f32.mxu0 %v562
      %1253 = vmatmul.mubr.f32.gmra.mxu0 %v530
      %v1254 = vpop.f32.mrf.mxu0
      %v1255 = vadd.f32 %v1030, %v1254
      %v1256 = vpop.f32.mrf.mxu0
      %1257 = vmatprep.mubr.f32.mxu0 %v563
      %1258 = vmatmul.mubr.f32.gmra.mxu0 %v531
      %v1259 = vpop.f32.mrf.mxu0
      %v1260 = vadd.f32 %v1035, %v1259
      %v1261 = vpop.f32.mrf.mxu0
      %1262 = vmatprep.mubr.f32.mxu0 %v564
      %1263 = vmatmul.mubr.f32.gmra.mxu0 %v532
      %v1264 = vpop.f32.mrf.mxu0
      %v1265 = vadd.f32 %v1040, %v1264
      %v1266 = vpop.f32.mrf.mxu0
      %1267 = vmatprep.mubr.f32.mxu0 %v565
      %1268 = vmatmul.mubr.f32.gmra.mxu0 %v533
      %v1269 = vpop.f32.mrf.mxu0
      %v1270 = vadd.f32 %v1045, %v1269
      %v1271 = vpop.f32.mrf.mxu0
      %1272 = vmatprep.mubr.f32.mxu0 %v566
      %1273 = vmatmul.mubr.f32.gmra.mxu0 %v534
      %v1274 = vpop.f32.mrf.mxu0
      %v1275 = vadd.f32 %v1050, %v1274
      %v1276 = vpop.f32.mrf.mxu0
      %1277 = vmatprep.mubr.f32.mxu0 %v567
      %1278 = vmatmul.mubr.f32.gmra.mxu0 %v535
      %v1279 = vpop.f32.mrf.mxu0
      %v1280 = vadd.f32 %v1055, %v1279
      %v1281 = vpop.f32.mrf.mxu0
      %1282 = vmatprep.mubr.f32.mxu0 %v568
      %1283 = vmatmul.mubr.f32.gmra.mxu0 %v536
      %v1284 = vpop.f32.mrf.mxu0
      %v1285 = vadd.f32 %v1060, %v1284
      %v1286 = vpop.f32.mrf.mxu0
      %1287 = vmatprep.mubr.f32.mxu0 %v569
      %1288 = vmatmul.mubr.f32.gmra.mxu0 %v537
      %v1289 = vpop.f32.mrf.mxu0
      %v1290 = vadd.f32 %v1065, %v1289
      %v1291 = vpop.f32.mrf.mxu0
      %1292 = vmatprep.mubr.f32.mxu0 %v570
      %1293 = vmatmul.mubr.f32.gmra.mxu0 %v538
      %v1294 = vpop.f32.mrf.mxu0
      %v1295 = vadd.f32 %v1070, %v1294
      %v1296 = vpop.f32.mrf.mxu0
      %1297 = vmatprep.mubr.f32.mxu0 %v571
      %1298 = vmatmul.mubr.f32.gmra.mxu0 %v539
      %v1299 = vpop.f32.mrf.mxu0
      %v1300 = vadd.f32 %v1075, %v1299
      %v1301 = vpop.f32.mrf.mxu0
      %1302 = vmatprep.mubr.f32.mxu0 %v572
      %1303 = vmatmul.mubr.f32.gmra.mxu0 %v540
      %v1304 = vpop.f32.mrf.mxu0
      %v1305 = vadd.f32 %v1080, %v1304
      %v1306 = vpop.f32.mrf.mxu0
      %1307 = vmatprep.mubr.f32.mxu0 %v573
      %1308 = vmatmul.mubr.f32.gmra.mxu0 %v541
      %v1309 = vpop.f32.mrf.mxu0
      %v1310 = vadd.f32 %v1085, %v1309
      %v1311 = vpop.f32.mrf.mxu0
      %1312 = vmatprep.mubr.f32.mxu0 %v574
      %1313 = vmatmul.mubr.f32.gmra.mxu0 %v542
      %v1314 = vpop.f32.mrf.mxu0
      %v1315 = vadd.f32 %v1090, %v1314
      %v1316 = vpop.f32.mrf.mxu0
      %1317 = vmatprep.mubr.f32.mxu0 %v575
      %1318 = vmatmul.mubr.f32.gmra.mxu0 %v543
      %v1319 = vpop.f32.mrf.mxu0
      %v1320 = vadd.f32 %v1095, %v1319
      %v1321 = vpop.f32.mrf.mxu0
      %1322 = vmatprep.mubr.f32.mxu0 %v576
      %1323 = vmatmul.mubr.f32.gmra.mxu0 %v544
      %v1324 = vpop.f32.mrf.mxu0
      %v1325 = vadd.f32 %v1100, %v1324
      %v1326 = vpop.f32.mrf.mxu0
      %1327 = vmatprep.mubr.f32.mxu0 %v577
      %1328 = vmatmul.mubr.f32.gmra.mxu0 %v545
      %v1329 = vpop.f32.mrf.mxu0
      %v1330 = vadd.f32 %v1105, %v1329
      %v1331 = vpop.f32.mrf.mxu0
      %1332 = vdwg.mxu0
      %1333 = vmatprep.subr.mxu0 0.0
      %1334 = vmatpush1.msra.mxu0 %v818
      %1335 = vmatprep.subr.mxu0 0.0
      %1336 = vmatpush1.msra.mxu0 %v817
      %1337 = vmatprep.subr.mxu0 0.0
      %1338 = vmatpush1.msra.mxu0 %v816
      %1339 = vmatprep.subr.mxu0 0.0
      %1340 = vmatpush1.msra.mxu0 %v815
      %1341 = vmatprep.subr.mxu0 0.0
      %1342 = vmatpush1.msra.mxu0 %v814
      %1343 = vmatprep.subr.mxu0 0.0
      %1344 = vmatpush1.msra.mxu0 %v813
      %1345 = vmatprep.subr.mxu0 0.0
      %1346 = vmatpush1.msra.mxu0 %v812
      %1347 = vmatprep.subr.mxu0 0.0
      %1348 = vmatpush1.msra.mxu0 %v811
      %1349 = vmatprep.subr.mxu0 0.0
      %1350 = vmatpush1.msra.mxu0 %v810
      %1351 = vmatprep.subr.mxu0 0.0
      %1352 = vmatpush1.msra.mxu0 %v809
      %1353 = vmatprep.subr.mxu0 0.0
      %1354 = vmatpush1.msra.mxu0 %v808
      %1355 = vmatprep.subr.mxu0 0.0
      %1356 = vmatpush1.msra.mxu0 %v807
      %1357 = vmatprep.subr.mxu0 0.0
      %1358 = vmatpush1.msra.mxu0 %v806
      %1359 = vmatprep.subr.mxu0 0.0
      %1360 = vmatpush1.msra.mxu0 %v805
      %1361 = vmatprep.subr.mxu0 0.0
      %1362 = vmatpush1.msra.mxu0 %v804
      %1363 = vmatprep.subr.mxu0 0.0
      %1364 = vmatpush1.msra.mxu0 %v803
      %1365 = vmatprep.subr.mxu0 0.0
      %1366 = vmatpush2.msra.mxu0 %v834
      %1367 = vmatprep.subr.mxu0 0.0
      %1368 = vmatpush2.msra.mxu0 %v833
      %1369 = vmatprep.subr.mxu0 0.0
      %1370 = vmatpush2.msra.mxu0 %v832
      %1371 = vmatprep.subr.mxu0 0.0
      %1372 = vmatpush2.msra.mxu0 %v831
      %1373 = vmatprep.subr.mxu0 0.0
      %1374 = vmatpush2.msra.mxu0 %v830
      %1375 = vmatprep.subr.mxu0 0.0
      %1376 = vmatpush2.msra.mxu0 %v829
      %1377 = vmatprep.subr.mxu0 0.0
      %1378 = vmatpush2.msra.mxu0 %v828
      %1379 = vmatprep.subr.mxu0 0.0
      %1380 = vmatpush2.msra.mxu0 %v827
      %1381 = vmatprep.subr.mxu0 0.0
      %1382 = vmatpush2.msra.mxu0 %v826
      %1383 = vmatprep.subr.mxu0 0.0
      %1384 = vmatpush2.msra.mxu0 %v825
      %1385 = vmatprep.subr.mxu0 0.0
      %1386 = vmatpush2.msra.mxu0 %v824
      %1387 = vmatprep.subr.mxu0 0.0
      %1388 = vmatpush2.msra.mxu0 %v823
      %1389 = vmatprep.subr.mxu0 0.0
      %1390 = vmatpush2.msra.mxu0 %v822
      %1391 = vmatprep.subr.mxu0 0.0
      %1392 = vmatpush2.msra.mxu0 %v821
      %1393 = vmatprep.subr.mxu0 0.0
      %1394 = vmatpush2.msra.mxu0 %v820
      %1395 = vmatprep.subr.mxu0 0.0
      %1396 = vmatpush2.msra.mxu0 %v819
      %1397 = vmatprep.mubr.f32.mxu0 %v610
      %1398 = vmatmul.mubr.f32.gmra.mxu0 %v578
      %v1399 = vpop.f32.mrf.mxu0
      %v1400 = vadd.f32 %v1175, %v1399
      %v1401 = vpop.f32.mrf.mxu0
      %1402 = vmatprep.mubr.f32.mxu0 %v611
      %1403 = vmatmul.mubr.f32.gmra.mxu0 %v579
      %v1404 = vpop.f32.mrf.mxu0
      %v1405 = vadd.f32 %v1180, %v1404
      %v1406 = vpop.f32.mrf.mxu0
      %1407 = vmatprep.mubr.f32.mxu0 %v612
      %1408 = vmatmul.mubr.f32.gmra.mxu0 %v580
      %v1409 = vpop.f32.mrf.mxu0
      %v1410 = vadd.f32 %v1185, %v1409
      %v1411 = vpop.f32.mrf.mxu0
      %1412 = vmatprep.mubr.f32.mxu0 %v613
      %1413 = vmatmul.mubr.f32.gmra.mxu0 %v581
      %v1414 = vpop.f32.mrf.mxu0
      %v1415 = vadd.f32 %v1190, %v1414
      %v1416 = vpop.f32.mrf.mxu0
      %1417 = vmatprep.mubr.f32.mxu0 %v614
      %1418 = vmatmul.mubr.f32.gmra.mxu0 %v582
      %v1419 = vpop.f32.mrf.mxu0
      %v1420 = vadd.f32 %v1195, %v1419
      %v1421 = vpop.f32.mrf.mxu0
      %1422 = vmatprep.mubr.f32.mxu0 %v615
      %1423 = vmatmul.mubr.f32.gmra.mxu0 %v583
      %v1424 = vpop.f32.mrf.mxu0
      %v1425 = vadd.f32 %v1200, %v1424
      %v1426 = vpop.f32.mrf.mxu0
      %1427 = vmatprep.mubr.f32.mxu0 %v616
      %1428 = vmatmul.mubr.f32.gmra.mxu0 %v584
      %v1429 = vpop.f32.mrf.mxu0
      %v1430 = vadd.f32 %v1205, %v1429
      %v1431 = vpop.f32.mrf.mxu0
      %1432 = vmatprep.mubr.f32.mxu0 %v617
      %1433 = vmatmul.mubr.f32.gmra.mxu0 %v585
      %v1434 = vpop.f32.mrf.mxu0
      %v1435 = vadd.f32 %v1210, %v1434
      %v1436 = vpop.f32.mrf.mxu0
      %1437 = vmatprep.mubr.f32.mxu0 %v618
      %1438 = vmatmul.mubr.f32.gmra.mxu0 %v586
      %v1439 = vpop.f32.mrf.mxu0
      %v1440 = vadd.f32 %v1215, %v1439
      %v1441 = vpop.f32.mrf.mxu0
      %1442 = vmatprep.mubr.f32.mxu0 %v619
      %1443 = vmatmul.mubr.f32.gmra.mxu0 %v587
      %v1444 = vpop.f32.mrf.mxu0
      %v1445 = vadd.f32 %v1220, %v1444
      %v1446 = vpop.f32.mrf.mxu0
      %1447 = vmatprep.mubr.f32.mxu0 %v620
      %1448 = vmatmul.mubr.f32.gmra.mxu0 %v588
      %v1449 = vpop.f32.mrf.mxu0
      %v1450 = vadd.f32 %v1225, %v1449
      %v1451 = vpop.f32.mrf.mxu0
      %1452 = vmatprep.mubr.f32.mxu0 %v621
      %1453 = vmatmul.mubr.f32.gmra.mxu0 %v589
      %v1454 = vpop.f32.mrf.mxu0
      %v1455 = vadd.f32 %v1230, %v1454
      %v1456 = vpop.f32.mrf.mxu0
      %1457 = vmatprep.mubr.f32.mxu0 %v622
      %1458 = vmatmul.mubr.f32.gmra.mxu0 %v590
      %v1459 = vpop.f32.mrf.mxu0
      %v1460 = vadd.f32 %v1235, %v1459
      %v1461 = vpop.f32.mrf.mxu0
      %1462 = vmatprep.mubr.f32.mxu0 %v623
      %1463 = vmatmul.mubr.f32.gmra.mxu0 %v591
      %v1464 = vpop.f32.mrf.mxu0
      %v1465 = vadd.f32 %v1240, %v1464
      %v1466 = vpop.f32.mrf.mxu0
      %1467 = vmatprep.mubr.f32.mxu0 %v624
      %1468 = vmatmul.mubr.f32.gmra.mxu0 %v592
      %v1469 = vpop.f32.mrf.mxu0
      %v1470 = vadd.f32 %v1245, %v1469
      %v1471 = vpop.f32.mrf.mxu0
      %1472 = vmatprep.mubr.f32.mxu0 %v625
      %1473 = vmatmul.mubr.f32.gmra.mxu0 %v593
      %v1474 = vpop.f32.mrf.mxu0
      %v1475 = vadd.f32 %v1250, %v1474
      %v1476 = vpop.f32.mrf.mxu0
      %1477 = vmatprep.mubr.f32.mxu0 %v626
      %1478 = vmatmul.mubr.f32.gmra.mxu0 %v594
      %v1479 = vpop.f32.mrf.mxu0
      %v1480 = vadd.f32 %v1255, %v1479
      %v1481 = vpop.f32.mrf.mxu0
      %1482 = vmatprep.mubr.f32.mxu0 %v627
      %1483 = vmatmul.mubr.f32.gmra.mxu0 %v595
      %v1484 = vpop.f32.mrf.mxu0
      %v1485 = vadd.f32 %v1260, %v1484
      %v1486 = vpop.f32.mrf.mxu0
      %1487 = vmatprep.mubr.f32.mxu0 %v628
      %1488 = vmatmul.mubr.f32.gmra.mxu0 %v596
      %v1489 = vpop.f32.mrf.mxu0
      %v1490 = vadd.f32 %v1265, %v1489
      %v1491 = vpop.f32.mrf.mxu0
      %1492 = vmatprep.mubr.f32.mxu0 %v629
      %1493 = vmatmul.mubr.f32.gmra.mxu0 %v597
      %v1494 = vpop.f32.mrf.mxu0
      %v1495 = vadd.f32 %v1270, %v1494
      %v1496 = vpop.f32.mrf.mxu0
      %1497 = vmatprep.mubr.f32.mxu0 %v630
      %1498 = vmatmul.mubr.f32.gmra.mxu0 %v598
      %v1499 = vpop.f32.mrf.mxu0
      %v1500 = vadd.f32 %v1275, %v1499
      %v1501 = vpop.f32.mrf.mxu0
      %1502 = vmatprep.mubr.f32.mxu0 %v631
      %1503 = vmatmul.mubr.f32.gmra.mxu0 %v599
      %v1504 = vpop.f32.mrf.mxu0
      %v1505 = vadd.f32 %v1280, %v1504
      %v1506 = vpop.f32.mrf.mxu0
      %1507 = vmatprep.mubr.f32.mxu0 %v632
      %1508 = vmatmul.mubr.f32.gmra.mxu0 %v600
      %v1509 = vpop.f32.mrf.mxu0
      %v1510 = vadd.f32 %v1285, %v1509
      %v1511 = vpop.f32.mrf.mxu0
      %1512 = vmatprep.mubr.f32.mxu0 %v633
      %1513 = vmatmul.mubr.f32.gmra.mxu0 %v601
      %v1514 = vpop.f32.mrf.mxu0
      %v1515 = vadd.f32 %v1290, %v1514
      %v1516 = vpop.f32.mrf.mxu0
      %1517 = vmatprep.mubr.f32.mxu0 %v634
      %1518 = vmatmul.mubr.f32.gmra.mxu0 %v602
      %v1519 = vpop.f32.mrf.mxu0
      %v1520 = vadd.f32 %v1295, %v1519
      %v1521 = vpop.f32.mrf.mxu0
      %1522 = vmatprep.mubr.f32.mxu0 %v635
      %1523 = vmatmul.mubr.f32.gmra.mxu0 %v603
      %v1524 = vpop.f32.mrf.mxu0
      %v1525 = vadd.f32 %v1300, %v1524
      %v1526 = vpop.f32.mrf.mxu0
      %1527 = vmatprep.mubr.f32.mxu0 %v636
      %1528 = vmatmul.mubr.f32.gmra.mxu0 %v604
      %v1529 = vpop.f32.mrf.mxu0
      %v1530 = vadd.f32 %v1305, %v1529
      %v1531 = vpop.f32.mrf.mxu0
      %1532 = vmatprep.mubr.f32.mxu0 %v637
      %1533 = vmatmul.mubr.f32.gmra.mxu0 %v605
      %v1534 = vpop.f32.mrf.mxu0
      %v1535 = vadd.f32 %v1310, %v1534
      %v1536 = vpop.f32.mrf.mxu0
      %1537 = vmatprep.mubr.f32.mxu0 %v638
      %1538 = vmatmul.mubr.f32.gmra.mxu0 %v606
      %v1539 = vpop.f32.mrf.mxu0
      %v1540 = vadd.f32 %v1315, %v1539
      %v1541 = vpop.f32.mrf.mxu0
      %1542 = vmatprep.mubr.f32.mxu0 %v639
      %1543 = vmatmul.mubr.f32.gmra.mxu0 %v607
      %v1544 = vpop.f32.mrf.mxu0
      %v1545 = vadd.f32 %v1320, %v1544
      %v1546 = vpop.f32.mrf.mxu0
      %1547 = vmatprep.mubr.f32.mxu0 %v640
      %1548 = vmatmul.mubr.f32.gmra.mxu0 %v608
      %v1549 = vpop.f32.mrf.mxu0
      %v1550 = vadd.f32 %v1325, %v1549
      %v1551 = vpop.f32.mrf.mxu0
      %1552 = vmatprep.mubr.f32.mxu0 %v641
      %1553 = vmatmul.mubr.f32.gmra.mxu0 %v609
      %v1554 = vpop.f32.mrf.mxu0
      %v1555 = vadd.f32 %v1330, %v1554
      %v1556 = vpop.f32.mrf.mxu0
      %1557 = vdwg.mxu0
      %1558 = vmatprep.subr.mxu0 0.0
      %1559 = vmatpush1.msra.mxu0 %v850
      %1560 = vmatprep.subr.mxu0 0.0
      %1561 = vmatpush1.msra.mxu0 %v849
      %1562 = vmatprep.subr.mxu0 0.0
      %1563 = vmatpush1.msra.mxu0 %v848
      %1564 = vmatprep.subr.mxu0 0.0
      %1565 = vmatpush1.msra.mxu0 %v847
      %1566 = vmatprep.subr.mxu0 0.0
      %1567 = vmatpush1.msra.mxu0 %v846
      %1568 = vmatprep.subr.mxu0 0.0
      %1569 = vmatpush1.msra.mxu0 %v845
      %1570 = vmatprep.subr.mxu0 0.0
      %1571 = vmatpush1.msra.mxu0 %v844
      %1572 = vmatprep.subr.mxu0 0.0
      %1573 = vmatpush1.msra.mxu0 %v843
      %1574 = vmatprep.subr.mxu0 0.0
      %1575 = vmatpush1.msra.mxu0 %v842
      %1576 = vmatprep.subr.mxu0 0.0
      %1577 = vmatpush1.msra.mxu0 %v841
      %1578 = vmatprep.subr.mxu0 0.0
      %1579 = vmatpush1.msra.mxu0 %v840
      %1580 = vmatprep.subr.mxu0 0.0
      %1581 = vmatpush1.msra.mxu0 %v839
      %1582 = vmatprep.subr.mxu0 0.0
      %1583 = vmatpush1.msra.mxu0 %v838
      %1584 = vmatprep.subr.mxu0 0.0
      %1585 = vmatpush1.msra.mxu0 %v837
      %1586 = vmatprep.subr.mxu0 0.0
      %1587 = vmatpush1.msra.mxu0 %v836
      %1588 = vmatprep.subr.mxu0 0.0
      %1589 = vmatpush1.msra.mxu0 %v835
      %1590 = vmatprep.subr.mxu0 0.0
      %1591 = vmatpush2.msra.mxu0 %v866
      %1592 = vmatprep.subr.mxu0 0.0
      %1593 = vmatpush2.msra.mxu0 %v865
      %1594 = vmatprep.subr.mxu0 0.0
      %1595 = vmatpush2.msra.mxu0 %v864
      %1596 = vmatprep.subr.mxu0 0.0
      %1597 = vmatpush2.msra.mxu0 %v863
      %1598 = vmatprep.subr.mxu0 0.0
      %1599 = vmatpush2.msra.mxu0 %v862
      %1600 = vmatprep.subr.mxu0 0.0
      %1601 = vmatpush2.msra.mxu0 %v861
      %1602 = vmatprep.subr.mxu0 0.0
      %1603 = vmatpush2.msra.mxu0 %v860
      %1604 = vmatprep.subr.mxu0 0.0
      %1605 = vmatpush2.msra.mxu0 %v859
      %1606 = vmatprep.subr.mxu0 0.0
      %1607 = vmatpush2.msra.mxu0 %v858
      %1608 = vmatprep.subr.mxu0 0.0
      %1609 = vmatpush2.msra.mxu0 %v857
      %1610 = vmatprep.subr.mxu0 0.0
      %1611 = vmatpush2.msra.mxu0 %v856
      %1612 = vmatprep.subr.mxu0 0.0
      %1613 = vmatpush2.msra.mxu0 %v855
      %1614 = vmatprep.subr.mxu0 0.0
      %1615 = vmatpush2.msra.mxu0 %v854
      %1616 = vmatprep.subr.mxu0 0.0
      %1617 = vmatpush2.msra.mxu0 %v853
      %1618 = vmatprep.subr.mxu0 0.0
      %1619 = vmatpush2.msra.mxu0 %v852
      %1620 = vmatprep.subr.mxu0 0.0
      %1621 = vmatpush2.msra.mxu0 %v851
      %1622 = vmatprep.mubr.f32.mxu0 %v675
      %1623 = vmatmul.mubr.f32.gmra.mxu0 %v643
      %v1624 = vpop.f32.mrf.mxu0
      %v1625 = vadd.f32 %v1400, %v1624
      %v1626 = vpop.f32.mrf.mxu0
      %1627 = vmatprep.mubr.f32.mxu0 %v676
      %1628 = vmatmul.mubr.f32.gmra.mxu0 %v644
      %v1629 = vpop.f32.mrf.mxu0
      %v1630 = vadd.f32 %v1405, %v1629
      %v1631 = vpop.f32.mrf.mxu0
      %1632 = vmatprep.mubr.f32.mxu0 %v677
      %1633 = vmatmul.mubr.f32.gmra.mxu0 %v645
      %v1634 = vpop.f32.mrf.mxu0
      %v1635 = vadd.f32 %v1410, %v1634
      %v1636 = vpop.f32.mrf.mxu0
      %1637 = vmatprep.mubr.f32.mxu0 %v678
      %1638 = vmatmul.mubr.f32.gmra.mxu0 %v646
      %v1639 = vpop.f32.mrf.mxu0
      %v1640 = vadd.f32 %v1415, %v1639
      %v1641 = vpop.f32.mrf.mxu0
      %1642 = vmatprep.mubr.f32.mxu0 %v679
      %1643 = vmatmul.mubr.f32.gmra.mxu0 %v647
      %v1644 = vpop.f32.mrf.mxu0
      %v1645 = vadd.f32 %v1420, %v1644
      %v1646 = vpop.f32.mrf.mxu0
      %1647 = vmatprep.mubr.f32.mxu0 %v680
      %1648 = vmatmul.mubr.f32.gmra.mxu0 %v648
      %v1649 = vpop.f32.mrf.mxu0
      %v1650 = vadd.f32 %v1425, %v1649
      %v1651 = vpop.f32.mrf.mxu0
      %1652 = vmatprep.mubr.f32.mxu0 %v681
      %1653 = vmatmul.mubr.f32.gmra.mxu0 %v649
      %v1654 = vpop.f32.mrf.mxu0
      %v1655 = vadd.f32 %v1430, %v1654
      %v1656 = vpop.f32.mrf.mxu0
      %1657 = vmatprep.mubr.f32.mxu0 %v682
      %1658 = vmatmul.mubr.f32.gmra.mxu0 %v650
      %v1659 = vpop.f32.mrf.mxu0
      %v1660 = vadd.f32 %v1435, %v1659
      %v1661 = vpop.f32.mrf.mxu0
      %1662 = vmatprep.mubr.f32.mxu0 %v683
      %1663 = vmatmul.mubr.f32.gmra.mxu0 %v651
      %v1664 = vpop.f32.mrf.mxu0
      %v1665 = vadd.f32 %v1440, %v1664
      %v1666 = vpop.f32.mrf.mxu0
      %1667 = vmatprep.mubr.f32.mxu0 %v684
      %1668 = vmatmul.mubr.f32.gmra.mxu0 %v652
      %v1669 = vpop.f32.mrf.mxu0
      %v1670 = vadd.f32 %v1445, %v1669
      %v1671 = vpop.f32.mrf.mxu0
      %1672 = vmatprep.mubr.f32.mxu0 %v685
      %1673 = vmatmul.mubr.f32.gmra.mxu0 %v653
      %v1674 = vpop.f32.mrf.mxu0
      %v1675 = vadd.f32 %v1450, %v1674
      %v1676 = vpop.f32.mrf.mxu0
      %1677 = vmatprep.mubr.f32.mxu0 %v686
      %1678 = vmatmul.mubr.f32.gmra.mxu0 %v654
      %v1679 = vpop.f32.mrf.mxu0
      %v1680 = vadd.f32 %v1455, %v1679
      %v1681 = vpop.f32.mrf.mxu0
      %1682 = vmatprep.mubr.f32.mxu0 %v687
      %1683 = vmatmul.mubr.f32.gmra.mxu0 %v655
      %v1684 = vpop.f32.mrf.mxu0
      %v1685 = vadd.f32 %v1460, %v1684
      %v1686 = vpop.f32.mrf.mxu0
      %1687 = vmatprep.mubr.f32.mxu0 %v688
      %1688 = vmatmul.mubr.f32.gmra.mxu0 %v656
      %v1689 = vpop.f32.mrf.mxu0
      %v1690 = vadd.f32 %v1465, %v1689
      %v1691 = vpop.f32.mrf.mxu0
      %1692 = vmatprep.mubr.f32.mxu0 %v689
      %1693 = vmatmul.mubr.f32.gmra.mxu0 %v657
      %v1694 = vpop.f32.mrf.mxu0
      %v1695 = vadd.f32 %v1470, %v1694
      %v1696 = vpop.f32.mrf.mxu0
      %1697 = vmatprep.mubr.f32.mxu0 %v690
      %1698 = vmatmul.mubr.f32.gmra.mxu0 %v658
      %v1699 = vpop.f32.mrf.mxu0
      %v1700 = vadd.f32 %v1475, %v1699
      %v1701 = vpop.f32.mrf.mxu0
      %1702 = vmatprep.mubr.f32.mxu0 %v691
      %1703 = vmatmul.mubr.f32.gmra.mxu0 %v659
      %v1704 = vpop.f32.mrf.mxu0
      %v1705 = vadd.f32 %v1480, %v1704
      %v1706 = vpop.f32.mrf.mxu0
      %1707 = vmatprep.mubr.f32.mxu0 %v692
      %1708 = vmatmul.mubr.f32.gmra.mxu0 %v660
      %v1709 = vpop.f32.mrf.mxu0
      %v1710 = vadd.f32 %v1485, %v1709
      %v1711 = vpop.f32.mrf.mxu0
      %1712 = vmatprep.mubr.f32.mxu0 %v693
      %1713 = vmatmul.mubr.f32.gmra.mxu0 %v661
      %v1714 = vpop.f32.mrf.mxu0
      %v1715 = vadd.f32 %v1490, %v1714
      %v1716 = vpop.f32.mrf.mxu0
      %1717 = vmatprep.mubr.f32.mxu0 %v694
      %1718 = vmatmul.mubr.f32.gmra.mxu0 %v662
      %v1719 = vpop.f32.mrf.mxu0
      %v1720 = vadd.f32 %v1495, %v1719
      %v1721 = vpop.f32.mrf.mxu0
      %1722 = vmatprep.mubr.f32.mxu0 %v695
      %1723 = vmatmul.mubr.f32.gmra.mxu0 %v663
      %v1724 = vpop.f32.mrf.mxu0
      %v1725 = vadd.f32 %v1500, %v1724
      %v1726 = vpop.f32.mrf.mxu0
      %1727 = vmatprep.mubr.f32.mxu0 %v696
      %1728 = vmatmul.mubr.f32.gmra.mxu0 %v664
      %v1729 = vpop.f32.mrf.mxu0
      %v1730 = vadd.f32 %v1505, %v1729
      %v1731 = vpop.f32.mrf.mxu0
      %1732 = vmatprep.mubr.f32.mxu0 %v697
      %1733 = vmatmul.mubr.f32.gmra.mxu0 %v665
      %v1734 = vpop.f32.mrf.mxu0
      %v1735 = vadd.f32 %v1510, %v1734
      %v1736 = vpop.f32.mrf.mxu0
      %1737 = vmatprep.mubr.f32.mxu0 %v698
      %1738 = vmatmul.mubr.f32.gmra.mxu0 %v666
      %v1739 = vpop.f32.mrf.mxu0
      %v1740 = vadd.f32 %v1515, %v1739
      %v1741 = vpop.f32.mrf.mxu0
      %1742 = vmatprep.mubr.f32.mxu0 %v699
      %1743 = vmatmul.mubr.f32.gmra.mxu0 %v667
      %v1744 = vpop.f32.mrf.mxu0
      %v1745 = vadd.f32 %v1520, %v1744
      %v1746 = vpop.f32.mrf.mxu0
      %1747 = vmatprep.mubr.f32.mxu0 %v700
      %1748 = vmatmul.mubr.f32.gmra.mxu0 %v668
      %v1749 = vpop.f32.mrf.mxu0
      %v1750 = vadd.f32 %v1525, %v1749
      %v1751 = vpop.f32.mrf.mxu0
      %1752 = vmatprep.mubr.f32.mxu0 %v701
      %1753 = vmatmul.mubr.f32.gmra.mxu0 %v669
      %v1754 = vpop.f32.mrf.mxu0
      %v1755 = vadd.f32 %v1530, %v1754
      %v1756 = vpop.f32.mrf.mxu0
      %1757 = vmatprep.mubr.f32.mxu0 %v702
      %1758 = vmatmul.mubr.f32.gmra.mxu0 %v670
      %v1759 = vpop.f32.mrf.mxu0
      %v1760 = vadd.f32 %v1535, %v1759
      %v1761 = vpop.f32.mrf.mxu0
      %1762 = vmatprep.mubr.f32.mxu0 %v703
      %1763 = vmatmul.mubr.f32.gmra.mxu0 %v671
      %v1764 = vpop.f32.mrf.mxu0
      %v1765 = vadd.f32 %v1540, %v1764
      %v1766 = vpop.f32.mrf.mxu0
      %1767 = vmatprep.mubr.f32.mxu0 %v704
      %1768 = vmatmul.mubr.f32.gmra.mxu0 %v672
      %v1769 = vpop.f32.mrf.mxu0
      %v1770 = vadd.f32 %v1545, %v1769
      %v1771 = vpop.f32.mrf.mxu0
      %1772 = vmatprep.mubr.f32.mxu0 %v705
      %1773 = vmatmul.mubr.f32.gmra.mxu0 %v673
      %v1774 = vpop.f32.mrf.mxu0
      %v1775 = vadd.f32 %v1550, %v1774
      %v1776 = vpop.f32.mrf.mxu0
      %1777 = vmatprep.mubr.f32.mxu0 %v706
      %1778 = vmatmul.mubr.f32.gmra.mxu0 %v674
      %v1779 = vpop.f32.mrf.mxu0
      %v1780 = vadd.f32 %v1555, %v1779
      %v1781 = vpop.f32.mrf.mxu0
      %1782 = vdwg.mxu0
      %1783 = vmatprep.subr.mxu0 0.0
      %1784 = vmatpush1.msra.mxu0 %v882
      %1785 = vmatprep.subr.mxu0 0.0
      %1786 = vmatpush1.msra.mxu0 %v881
      %1787 = vmatprep.subr.mxu0 0.0
      %1788 = vmatpush1.msra.mxu0 %v880
      %1789 = vmatprep.subr.mxu0 0.0
      %1790 = vmatpush1.msra.mxu0 %v879
      %1791 = vmatprep.subr.mxu0 0.0
      %1792 = vmatpush1.msra.mxu0 %v878
      %1793 = vmatprep.subr.mxu0 0.0
      %1794 = vmatpush1.msra.mxu0 %v877
      %1795 = vmatprep.subr.mxu0 0.0
      %1796 = vmatpush1.msra.mxu0 %v876
      %1797 = vmatprep.subr.mxu0 0.0
      %1798 = vmatpush1.msra.mxu0 %v875
      %1799 = vmatprep.subr.mxu0 0.0
      %1800 = vmatpush1.msra.mxu0 %v874
      %1801 = vmatprep.subr.mxu0 0.0
      %1802 = vmatpush1.msra.mxu0 %v873
      %1803 = vmatprep.subr.mxu0 0.0
      %1804 = vmatpush1.msra.mxu0 %v872
      %1805 = vmatprep.subr.mxu0 0.0
      %1806 = vmatpush1.msra.mxu0 %v871
      %1807 = vmatprep.subr.mxu0 0.0
      %1808 = vmatpush1.msra.mxu0 %v870
      %1809 = vmatprep.subr.mxu0 0.0
      %1810 = vmatpush1.msra.mxu0 %v869
      %1811 = vmatprep.subr.mxu0 0.0
      %1812 = vmatpush1.msra.mxu0 %v868
      %1813 = vmatprep.subr.mxu0 0.0
      %1814 = vmatpush1.msra.mxu0 %v867
      %1815 = vmatprep.subr.mxu0 0.0
      %1816 = vmatpush2.msra.mxu0 0.0
      %1817 = vmatprep.subr.mxu0 0.0
      %1818 = vmatpush2.msra.mxu0 0.0
      %1819 = vmatprep.subr.mxu0 0.0
      %1820 = vmatpush2.msra.mxu0 0.0
      %1821 = vmatprep.subr.mxu0 0.0
      %1822 = vmatpush2.msra.mxu0 0.0
      %1823 = vmatprep.subr.mxu0 0.0
      %1824 = vmatpush2.msra.mxu0 0.0
      %1825 = vmatprep.subr.mxu0 0.0
      %1826 = vmatpush2.msra.mxu0 0.0
      %1827 = vmatprep.subr.mxu0 0.0
      %1828 = vmatpush2.msra.mxu0 0.0
      %1829 = vmatprep.subr.mxu0 0.0
      %1830 = vmatpush2.msra.mxu0 0.0
      %1831 = vmatprep.subr.mxu0 0.0
      %1832 = vmatpush2.msra.mxu0 0.0
      %1833 = vmatprep.subr.mxu0 0.0
      %1834 = vmatpush2.msra.mxu0 0.0
      %1835 = vmatprep.subr.mxu0 0.0
      %1836 = vmatpush2.msra.mxu0 0.0
      %1837 = vmatprep.subr.mxu0 0.0
      %1838 = vmatpush2.msra.mxu0 0.0
      %1839 = vmatprep.subr.mxu0 0.0
      %1840 = vmatpush2.msra.mxu0 0.0
      %1841 = vmatprep.subr.mxu0 0.0
      %1842 = vmatpush2.msra.mxu0 0.0
      %1843 = vmatprep.subr.mxu0 0.0
      %1844 = vmatpush2.msra.mxu0 0.0
      %1845 = vmatprep.subr.mxu0 0.0
      %1846 = vmatpush2.msra.mxu0 0.0
      %1847 = vmatprep.mubr.f32.mxu0 0.0
      %1848 = vmatmul.mubr.f32.gmra.mxu0 %v707
      %v1849 = vpop.f32.mrf.mxu0
      %v1850 = vadd.f32 %v1625, %v1849
      %v1851 = vpop.f32.mrf.mxu0
      %1852 = vmatprep.mubr.f32.mxu0 0.0
      %1853 = vmatmul.mubr.f32.gmra.mxu0 %v708
      %v1854 = vpop.f32.mrf.mxu0
      %v1855 = vadd.f32 %v1630, %v1854
      %v1856 = vpop.f32.mrf.mxu0
      %1857 = vmatprep.mubr.f32.mxu0 0.0
      %1858 = vmatmul.mubr.f32.gmra.mxu0 %v709
      %v1859 = vpop.f32.mrf.mxu0
      %v1860 = vadd.f32 %v1635, %v1859
      %v1861 = vpop.f32.mrf.mxu0
      %1862 = vmatprep.mubr.f32.mxu0 0.0
      %1863 = vmatmul.mubr.f32.gmra.mxu0 %v710
      %v1864 = vpop.f32.mrf.mxu0
      %v1865 = vadd.f32 %v1640, %v1864
      %v1866 = vpop.f32.mrf.mxu0
      %1867 = vmatprep.mubr.f32.mxu0 0.0
      %1868 = vmatmul.mubr.f32.gmra.mxu0 %v711
      %v1869 = vpop.f32.mrf.mxu0
      %v1870 = vadd.f32 %v1645, %v1869
      %v1871 = vpop.f32.mrf.mxu0
      %1872 = vmatprep.mubr.f32.mxu0 0.0
      %1873 = vmatmul.mubr.f32.gmra.mxu0 %v712
      %v1874 = vpop.f32.mrf.mxu0
      %v1875 = vadd.f32 %v1650, %v1874
      %v1876 = vpop.f32.mrf.mxu0
      %1877 = vmatprep.mubr.f32.mxu0 0.0
      %1878 = vmatmul.mubr.f32.gmra.mxu0 %v713
      %v1879 = vpop.f32.mrf.mxu0
      %v1880 = vadd.f32 %v1655, %v1879
      %v1881 = vpop.f32.mrf.mxu0
      %1882 = vmatprep.mubr.f32.mxu0 0.0
      %1883 = vmatmul.mubr.f32.gmra.mxu0 %v714
      %v1884 = vpop.f32.mrf.mxu0
      %v1885 = vadd.f32 %v1660, %v1884
      %v1886 = vpop.f32.mrf.mxu0
      %1887 = vmatprep.mubr.f32.mxu0 0.0
      %1888 = vmatmul.mubr.f32.gmra.mxu0 %v715
      %v1889 = vpop.f32.mrf.mxu0
      %v1890 = vadd.f32 %v1665, %v1889
      %v1891 = vpop.f32.mrf.mxu0
      %1892 = vmatprep.mubr.f32.mxu0 0.0
      %1893 = vmatmul.mubr.f32.gmra.mxu0 %v716
      %v1894 = vpop.f32.mrf.mxu0
      %v1895 = vadd.f32 %v1670, %v1894
      %v1896 = vpop.f32.mrf.mxu0
      %1897 = vmatprep.mubr.f32.mxu0 0.0
      %1898 = vmatmul.mubr.f32.gmra.mxu0 %v717
      %v1899 = vpop.f32.mrf.mxu0
      %v1900 = vadd.f32 %v1675, %v1899
      %v1901 = vpop.f32.mrf.mxu0
      %1902 = vmatprep.mubr.f32.mxu0 0.0
      %1903 = vmatmul.mubr.f32.gmra.mxu0 %v718
      %v1904 = vpop.f32.mrf.mxu0
      %v1905 = vadd.f32 %v1680, %v1904
      %v1906 = vpop.f32.mrf.mxu0
      %1907 = vmatprep.mubr.f32.mxu0 0.0
      %1908 = vmatmul.mubr.f32.gmra.mxu0 %v719
      %v1909 = vpop.f32.mrf.mxu0
      %v1910 = vadd.f32 %v1685, %v1909
      %v1911 = vpop.f32.mrf.mxu0
      %1912 = vmatprep.mubr.f32.mxu0 0.0
      %1913 = vmatmul.mubr.f32.gmra.mxu0 %v720
      %v1914 = vpop.f32.mrf.mxu0
      %v1915 = vadd.f32 %v1690, %v1914
      %v1916 = vpop.f32.mrf.mxu0
      %1917 = vmatprep.mubr.f32.mxu0 0.0
      %1918 = vmatmul.mubr.f32.gmra.mxu0 %v721
      %v1919 = vpop.f32.mrf.mxu0
      %v1920 = vadd.f32 %v1695, %v1919
      %v1921 = vpop.f32.mrf.mxu0
      %1922 = vmatprep.mubr.f32.mxu0 0.0
      %1923 = vmatmul.mubr.f32.gmra.mxu0 %v722
      %v1924 = vpop.f32.mrf.mxu0
      %v1925 = vadd.f32 %v1700, %v1924
      %v1926 = vpop.f32.mrf.mxu0
      %1927 = vmatprep.mubr.f32.mxu0 0.0
      %1928 = vmatmul.mubr.f32.gmra.mxu0 %v723
      %v1929 = vpop.f32.mrf.mxu0
      %v1930 = vadd.f32 %v1705, %v1929
      %v1931 = vpop.f32.mrf.mxu0
      %1932 = vmatprep.mubr.f32.mxu0 0.0
      %1933 = vmatmul.mubr.f32.gmra.mxu0 %v724
      %v1934 = vpop.f32.mrf.mxu0
      %v1935 = vadd.f32 %v1710, %v1934
      %v1936 = vpop.f32.mrf.mxu0
      %1937 = vmatprep.mubr.f32.mxu0 0.0
      %1938 = vmatmul.mubr.f32.gmra.mxu0 %v725
      %v1939 = vpop.f32.mrf.mxu0
      %v1940 = vadd.f32 %v1715, %v1939
      %v1941 = vpop.f32.mrf.mxu0
      %1942 = vmatprep.mubr.f32.mxu0 0.0
      %1943 = vmatmul.mubr.f32.gmra.mxu0 %v726
      %v1944 = vpop.f32.mrf.mxu0
      %v1945 = vadd.f32 %v1720, %v1944
      %v1946 = vpop.f32.mrf.mxu0
      %1947 = vmatprep.mubr.f32.mxu0 0.0
      %1948 = vmatmul.mubr.f32.gmra.mxu0 %v727
      %v1949 = vpop.f32.mrf.mxu0
      %v1950 = vadd.f32 %v1725, %v1949
      %v1951 = vpop.f32.mrf.mxu0
      %1952 = vmatprep.mubr.f32.mxu0 0.0
      %1953 = vmatmul.mubr.f32.gmra.mxu0 %v728
      %v1954 = vpop.f32.mrf.mxu0
      %v1955 = vadd.f32 %v1730, %v1954
      %v1956 = vpop.f32.mrf.mxu0
      %1957 = vmatprep.mubr.f32.mxu0 0.0
      %1958 = vmatmul.mubr.f32.gmra.mxu0 %v729
      %v1959 = vpop.f32.mrf.mxu0
      %v1960 = vadd.f32 %v1735, %v1959
      %v1961 = vpop.f32.mrf.mxu0
      %1962 = vmatprep.mubr.f32.mxu0 0.0
      %1963 = vmatmul.mubr.f32.gmra.mxu0 %v730
      %v1964 = vpop.f32.mrf.mxu0
      %v1965 = vadd.f32 %v1740, %v1964
      %v1966 = vpop.f32.mrf.mxu0
      %1967 = vmatprep.mubr.f32.mxu0 0.0
      %1968 = vmatmul.mubr.f32.gmra.mxu0 %v731
      %v1969 = vpop.f32.mrf.mxu0
      %v1970 = vadd.f32 %v1745, %v1969
      %v1971 = vpop.f32.mrf.mxu0
      %1972 = vmatprep.mubr.f32.mxu0 0.0
      %1973 = vmatmul.mubr.f32.gmra.mxu0 %v732
      %v1974 = vpop.f32.mrf.mxu0
      %v1975 = vadd.f32 %v1750, %v1974
      %v1976 = vpop.f32.mrf.mxu0
      %1977 = vmatprep.mubr.f32.mxu0 0.0
      %1978 = vmatmul.mubr.f32.gmra.mxu0 %v733
      %v1979 = vpop.f32.mrf.mxu0
      %v1980 = vadd.f32 %v1755, %v1979
      %v1981 = vpop.f32.mrf.mxu0
      %1982 = vmatprep.mubr.f32.mxu0 0.0
      %1983 = vmatmul.mubr.f32.gmra.mxu0 %v734
      %v1984 = vpop.f32.mrf.mxu0
      %v1985 = vadd.f32 %v1760, %v1984
      %v1986 = vpop.f32.mrf.mxu0
      %1987 = vmatprep.mubr.f32.mxu0 0.0
      %1988 = vmatmul.mubr.f32.gmra.mxu0 %v735
      %v1989 = vpop.f32.mrf.mxu0
      %v1990 = vadd.f32 %v1765, %v1989
      %v1991 = vpop.f32.mrf.mxu0
      %1992 = vmatprep.mubr.f32.mxu0 0.0
      %1993 = vmatmul.mubr.f32.gmra.mxu0 %v736
      %v1994 = vpop.f32.mrf.mxu0
      %v1995 = vadd.f32 %v1770, %v1994
      %v1996 = vpop.f32.mrf.mxu0
      %1997 = vmatprep.mubr.f32.mxu0 0.0
      %1998 = vmatmul.mubr.f32.gmra.mxu0 %v737
      %v1999 = vpop.f32.mrf.mxu0
      %v2000 = vadd.f32 %v1775, %v1999
      %v2001 = vpop.f32.mrf.mxu0
      %2002 = vmatprep.mubr.f32.mxu0 0.0
      %2003 = vmatmul.mubr.f32.gmra.mxu0 %v738
      %v2004 = vpop.f32.mrf.mxu0
      %v2005 = vadd.f32 %v1780, %v2004
      %v2006 = vpop.f32.mrf.mxu0
      %2007 = vdwg.mxu0
      %2008 = vst [vmem:[%s231] sm:$0xff] %v1850
      %2009 = vst [vmem:[%s231 + $0x8] sm:$0xff] %v1855
      %2010 = vst [vmem:[%s231 + $0x10] sm:$0xff] %v1860
      %2011 = vst [vmem:[%s231 + $0x18] sm:$0xff] %v1865
      %2012 = vst [vmem:[%s231 + $0x20] sm:$0xff] %v1870
      %2013 = vst [vmem:[%s231 + $0x28] sm:$0xff] %v1875
      %2014 = vst [vmem:[%s231 + $0x30] sm:$0xff] %v1880
      %2015 = vst [vmem:[%s231 + $0x38] sm:$0xff] %v1885
      %2016 = vst [vmem:[%s231 + $0x40] sm:$0xff] %v1890
      %2017 = vst [vmem:[%s231 + $0x48] sm:$0xff] %v1895
      %2018 = vst [vmem:[%s231 + $0x50] sm:$0xff] %v1900
      %2019 = vst [vmem:[%s231 + $0x58] sm:$0xff] %v1905
      %2020 = vst [vmem:[%s231 + $0x60] sm:$0xff] %v1910
      %2021 = vst [vmem:[%s231 + $0x68] sm:$0xff] %v1915
      %2022 = vst [vmem:[%s231 + $0x70] sm:$0xff] %v1920
      %2023 = vst [vmem:[%s231 + $0x78] sm:$0xff] %v1925
      %2024 = vst [vmem:[%s231 + $0x80] sm:$0xff] %v1930
      %2025 = vst [vmem:[%s231 + $0x88] sm:$0xff] %v1935
      %2026 = vst [vmem:[%s231 + $0x90] sm:$0xff] %v1940
      %2027 = vst [vmem:[%s231 + $0x98] sm:$0xff] %v1945
      %2028 = vst [vmem:[%s231 + $0xa0] sm:$0xff] %v1950
      %2029 = vst [vmem:[%s231 + $0xa8] sm:$0xff] %v1955
      %2030 = vst [vmem:[%s231 + $0xb0] sm:$0xff] %v1960
      %2031 = vst [vmem:[%s231 + $0xb8] sm:$0xff] %v1965
      %2032 = vst [vmem:[%s231 + $0xc0] sm:$0xff] %v1970
      %2033 = vst [vmem:[%s231 + $0xc8] sm:$0xff] %v1975
      %2034 = vst [vmem:[%s231 + $0xd0] sm:$0xff] %v1980
      %2035 = vst [vmem:[%s231 + $0xd8] sm:$0xff] %v1985
      %2036 = vst [vmem:[%s231 + $0xe0] sm:$0xff] %v1990
      %2037 = vst [vmem:[%s231 + $0xe8] sm:$0xff] %v1995
      %2038 = vst [vmem:[%s231 + $0xf0] sm:$0xff] %v2000
      %2039 = vst [vmem:[%s231 + $0xf8] sm:$0xff] %v2005
      %v2040 = vadd.f32 %v1850, %v1855
      %v2041 = vadd.f32 %v2040, %v1860
      %v2042 = vadd.f32 %v2041, %v1865
      %v2043 = vadd.f32 %v2042, %v1870
      %v2044 = vadd.f32 %v2043, %v1875
      %v2045 = vadd.f32 %v2044, %v1880
      %v2046 = vadd.f32 %v2045, %v1885
      %v2047 = vadd.f32 %v2046, %v1890
      %v2048 = vadd.f32 %v2047, %v1895
      %v2049 = vadd.f32 %v2048, %v1900
      %v2050 = vadd.f32 %v2049, %v1905
      %v2051 = vadd.f32 %v2050, %v1910
      %v2052 = vadd.f32 %v2051, %v1915
      %v2053 = vadd.f32 %v2052, %v1920
      %v2054 = vadd.f32 %v2053, %v1925
      %v2055 = vadd.f32 %v2054, %v1930
      %v2056 = vadd.f32 %v2055, %v1935
      %v2057 = vadd.f32 %v2056, %v1940
      %v2058 = vadd.f32 %v2057, %v1945
      %v2059 = vadd.f32 %v2058, %v1950
      %v2060 = vadd.f32 %v2059, %v1955
      %v2061 = vadd.f32 %v2060, %v1960
      %v2062 = vadd.f32 %v2061, %v1965
      %v2063 = vadd.f32 %v2062, %v1970
      %v2064 = vadd.f32 %v2063, %v1975
      %v2065 = vadd.f32 %v2064, %v1980
      %v2066 = vadd.f32 %v2065, %v1985
      %v2067 = vadd.f32 %v2066, %v1990
      %v2068 = vadd.f32 %v2067, %v1995
      %v2069 = vadd.f32 %v2068, %v2000
      %v2070 = vadd.f32 %v2069, %v2005
      %v2071 = vrot.slane %v2070, 4
      %v2072 = vadd.f32 %v2070, %v2071
      %v2073 = vrot.slane %v2072, 2
      %v2074 = vadd.f32 %v2072, %v2073
      %v2075 = vrot.slane %v2074, 1
      %v2076 = vadd.f32 %v2074, %v2075
      %v2077 = vmul.f32 %v1850, %v1850
      %v2078 = vmul.f32 %v1855, %v1855
      %v2079 = vmul.f32 %v1860, %v1860
      %v2080 = vmul.f32 %v1865, %v1865
      %v2081 = vmul.f32 %v1870, %v1870
      %v2082 = vmul.f32 %v1875, %v1875
      %v2083 = vmul.f32 %v1880, %v1880
      %v2084 = vmul.f32 %v1885, %v1885
      %v2085 = vmul.f32 %v1890, %v1890
      %v2086 = vmul.f32 %v1895, %v1895
      %v2087 = vmul.f32 %v1900, %v1900
      %v2088 = vmul.f32 %v1905, %v1905
      %v2089 = vmul.f32 %v1910, %v1910
      %v2090 = vmul.f32 %v1915, %v1915
      %v2091 = vmul.f32 %v1920, %v1920
      %v2092 = vmul.f32 %v1925, %v1925
      %v2093 = vmul.f32 %v1930, %v1930
      %v2094 = vmul.f32 %v1935, %v1935
      %v2095 = vmul.f32 %v1940, %v1940
      %v2096 = vmul.f32 %v1945, %v1945
      %v2097 = vmul.f32 %v1950, %v1950
      %v2098 = vmul.f32 %v1955, %v1955
      %v2099 = vmul.f32 %v1960, %v1960
      %v2100 = vmul.f32 %v1965, %v1965
      %v2101 = vmul.f32 %v1970, %v1970
      %v2102 = vmul.f32 %v1975, %v1975
      %v2103 = vmul.f32 %v1980, %v1980
      %v2104 = vmul.f32 %v1985, %v1985
      %v2105 = vmul.f32 %v1990, %v1990
      %v2106 = vmul.f32 %v1995, %v1995
      %v2107 = vmul.f32 %v2000, %v2000
      %v2108 = vmul.f32 %v2005, %v2005
      %v2109 = vadd.f32 %v2077, %v2078
      %v2110 = vadd.f32 %v2109, %v2079
      %v2111 = vadd.f32 %v2110, %v2080
      %v2112 = vadd.f32 %v2111, %v2081
      %v2113 = vadd.f32 %v2112, %v2082
      %v2114 = vadd.f32 %v2113, %v2083
      %v2115 = vadd.f32 %v2114, %v2084
      %v2116 = vadd.f32 %v2115, %v2085
      %v2117 = vadd.f32 %v2116, %v2086
      %v2118 = vadd.f32 %v2117, %v2087
      %v2119 = vadd.f32 %v2118, %v2088
      %v2120 = vadd.f32 %v2119, %v2089
      %v2121 = vadd.f32 %v2120, %v2090
      %v2122 = vadd.f32 %v2121, %v2091
      %v2123 = vadd.f32 %v2122, %v2092
      %v2124 = vadd.f32 %v2123, %v2093
      %v2125 = vadd.f32 %v2124, %v2094
      %v2126 = vadd.f32 %v2125, %v2095
      %v2127 = vadd.f32 %v2126, %v2096
      %v2128 = vadd.f32 %v2127, %v2097
      %v2129 = vadd.f32 %v2128, %v2098
      %v2130 = vadd.f32 %v2129, %v2099
      %v2131 = vadd.f32 %v2130, %v2100
      %v2132 = vadd.f32 %v2131, %v2101
      %v2133 = vadd.f32 %v2132, %v2102
      %v2134 = vadd.f32 %v2133, %v2103
      %v2135 = vadd.f32 %v2134, %v2104
      %v2136 = vadd.f32 %v2135, %v2105
      %v2137 = vadd.f32 %v2136, %v2106
      %v2138 = vadd.f32 %v2137, %v2107
      %v2139 = vadd.f32 %v2138, %v2108
      %v2140 = vrot.slane %v2139, 4
      %v2141 = vadd.f32 %v2139, %v2140
      %v2142 = vrot.slane %v2141, 2
      %v2143 = vadd.f32 %v2141, %v2142
      %v2144 = vrot.slane %v2143, 1
      %v2145 = vadd.f32 %v2143, %v2144
      %vm2146 = vcmask 1040384
      %v2147 = vsel %vm2146, %v2076, %v2145
      %2148 = vst [vmem:[%s235] sm:$0x3] %v2147
      %p2149 = scmp.lt.s32.totalorder %s17, 1
      %s2150 = scalar_select %p2149, %s17, 1
      %s2151 = smul.addr %s2150, 32
      %s2152 = smul.addr %s2151, 8
      %s2153 = scalar_lea.vmem %s4, %s2152
      %p2154 = scmp.lt.s32.totalorder %s17, 1
      %s2155 = scalar_select %p2154, %s17, 1
      %s2156 = smul.addr %s2155, 2
      %s2157 = scalar_lea.vmem %s5, %s2156
      // Predicated region
      $region37: #{bottleneck_forward.5} parent=35 // pred_check
        %p2158 = pneg %p124
      $region38: #{bottleneck_forward.5} parent=35 // pred_check_branch
        %2160 = sbr.rel (%p2158) target = $region40
      $region39: #{bottleneck_forward.5} parent=35 // pred_region
        _
      $region40: #{bottleneck_forward.5} parent=35 // pred_fallthru
        _
      // Predicated region
      $region41: #{bottleneck_forward.5} parent=35 // pred_check
        %p2161 = pneg %p150
      $region42: #{bottleneck_forward.5} parent=35 // pred_check_branch
        %2163 = sbr.rel (%p2161) target = $region44
      $region43: #{bottleneck_forward.5} parent=35 // pred_region
        _
      $region44: #{bottleneck_forward.5} parent=35 // pred_fallthru
        _
    $region36: #{bottleneck_forward.5} parent=5 // pred_fallthru
      _
    %p2164 = scmp.le.s32.totalorder 2, %s12
    // Predicated region
    $region45: #{bottleneck_forward.5} parent=5 // pred_check
      %p2165 = pneg %p2164
    $region46: #{bottleneck_forward.5} parent=5 // pred_check_branch
      %2167 = sbr.rel (%p2165) target = $region48
    $region47: #{bottleneck_forward.5} parent=5 // pred_region
      %s2168 = ssub.s32 %s12, 2
      // Predicated region
      $region49: #{bottleneck_forward.5} parent=47 // pred_check
        %p2169 = pneg %p130
      $region50: #{bottleneck_forward.5} parent=47 // pred_check_branch
        %2171 = sbr.rel (%p2169) target = $region52
      $region51: #{bottleneck_forward.5} parent=47 // pred_region
        %p2172 = scmp.lt.s32.totalorder %s18, 1
        %s2173 = scalar_select %p2172, %s18, 1
        %s2174 = smul.addr %s2173, 32
        %s2175 = smul.addr %s2174, 8
        %s2176 = scalar_lea.vmem %s4, %s2175
      $region52: #{bottleneck_forward.5} parent=47 // pred_fallthru
        _
      // Predicated region
      $region53: #{bottleneck_forward.5} parent=47 // pred_check
        %p2177 = pneg %p156
      $region54: #{bottleneck_forward.5} parent=47 // pred_check_branch
        %2179 = sbr.rel (%p2177) target = $region56
      $region55: #{bottleneck_forward.5} parent=47 // pred_region
        %p2180 = scmp.lt.s32.totalorder %s18, 1
        %s2181 = scalar_select %p2180, %s18, 1
        %s2182 = smul.addr %s2181, 2
        %s2183 = scalar_lea.vmem %s5, %s2182
      $region56: #{bottleneck_forward.5} parent=47 // pred_fallthru
        _
    $region48: #{bottleneck_forward.5} parent=5 // pred_fallthru
      _
  $region6: #{bottleneck_forward.5} parent=0 // loop_footer
    %s16 = sadd.s32 1, %s12
  $region7: #{bottleneck_forward.5} parent=0 // loop_footer_branch
    %11 = sbr.rel target = $region3
  $region8: #{bottleneck_forward.5} parent=0 // loop_exit
    _

</llo_original>
